<compile_context>
chip_gen: v7x
topology: tpu7x:2x2x1
jax: 0.10.0
libtpu: 0.0.40
codegen_flags: <defaults>
</compile_context>

<pallas_src>
import functools

import numpy as np

import jax
import jax.numpy as jnp
from jax.experimental import pallas as pl
from jax.experimental.pallas import tpu as pltpu


# ----------------------------------------------------------------------------
# Fused kernel: conv1+BN1 -> conv2+BN2 -> conv3 -> fc, all in VMEM
# ----------------------------------------------------------------------------
def _cnn_fused_kernel(im1_ref, w1k_ref, w2k_ref, w3k_ref, wfck_ref,
                      pvec_ref, psum_ref,
                      out_ref,
                      h1s_ref, im2_ref, h2s_ref, im3_ref, h3s_ref, fcin_ref,
                      *, B, F, do_bn, eps):
    F4 = 4 * F            # conv1 phase-split lane width (=128 for F=32)
    O2 = 2 * F            # conv2/conv3 channel count
    ncp = out_ref.shape[1]
    mxu = im2_ref.dtype    # bf16 (or f32) MXU operand dtype

    # Packed 1-row parameters (single lane-dense tile).
    b1 = pvec_ref[0:1, 0:F4]
    g1 = pvec_ref[1:2, 0:F4]
    be1 = pvec_ref[2:3, 0:F4]
    b2 = pvec_ref[3:4, 0:O2]
    g2 = pvec_ref[4:5, 0:O2]
    be2 = pvec_ref[5:6, 0:O2]
    b3 = pvec_ref[6:7, 0:O2]
    bfc = pvec_ref[7:8, 0:ncp]

    # ---------------- conv1: one (B*64, 432) x (432, 4F) matmul -------------
    # Rows = (b, P, Q) coarse 8x8 grid; lanes = (ph, pw, o) phase-split h1.
    acc1 = jnp.dot(im1_ref[...], w1k_ref[...],
                   preferred_element_type=jnp.float32)            # (B*64, 4F)
    h1 = jnp.maximum(acc1 + b1, 0.0)

    if do_bn:
        # BatchNorm1 over B*16*16 samples/channel; lanes are (ph, pw, c), so
        # the 4 phase lane-groups are combined via the (4F,4F) phase-sum matmul.
        # One-pass stats: var = E[x^2] - mean^2 (less live state).
        n1 = float(B * 256)
        s1 = jnp.sum(h1, axis=0, keepdims=True)
        q1 = jnp.sum(h1 * h1, axis=0, keepdims=True)
        mean1 = jnp.dot(s1, psum_ref[...],
                        preferred_element_type=jnp.float32) / n1
        ex21 = jnp.dot(q1, psum_ref[...],
                       preferred_element_type=jnp.float32) / n1
        var1 = ex21 - mean1 * mean1
        h1 = (h1 - mean1) * jax.lax.rsqrt(var1 + eps) * g1 + be1

    # Park h1 in VMEM (rows = P*8+Q) + 8 zeroed slack rows: conv2's window
    # copies (offset up to 18, length 48) reach row 65 and must stay finite.
    h1s_ref[:, 0:64, :] = h1.reshape(B, 64, F4)
    h1s_ref[:, 64:72, :] = jnp.zeros((B, 8, F4), jnp.float32)

    # ---------------- conv2: im2col (B,48,9*4F) then one matmul -------------
    # Rows = (b, s2), s2 = oh2*8 + ow2; rows with ow2 in {6,7} are junk that
    # is masked in BN2 and provably never read by valid conv3 outputs.
    for t in range(9):
        i2, j2 = divmod(t, 3)
        off = i2 * 8 + j2
        im2_ref[:, :, t * F4:(t + 1) * F4] = (
            h1s_ref[:, off:off + 48, :].astype(mxu))
    acc2 = jnp.dot(im2_ref[...].reshape(B * 48, 9 * F4), w2k_ref[...],
                   preferred_element_type=jnp.float32)            # (B*48, O2)
    h2 = jnp.maximum(acc2 + b2, 0.0)

    if do_bn:
        # BatchNorm2: masked one-pass stats over the B*36 valid rows (ow2 < 6).
        rows = jax.lax.broadcasted_iota(jnp.int32, (B * 48, 1), 0)
        mask = (jnp.bitwise_and(rows, 7) < 6).astype(jnp.float32)
        n2 = float(B * 36)
        hm = h2 * mask
        mean2 = jnp.sum(hm, axis=0, keepdims=True) / n2
        ex22 = jnp.sum(hm * h2, axis=0, keepdims=True) / n2
        var2 = ex22 - mean2 * mean2
        h2 = (h2 - mean2) * jax.lax.rsqrt(var2 + eps) * g2 + be2

    # Park h2 + 8 zeroed slack rows (conv3's window copies reach row 51).
    h2s_ref[:, 0:48, :] = h2.reshape(B, 48, O2)
    h2s_ref[:, 48:56, :] = jnp.zeros((B, 8, O2), jnp.float32)

    # ---------------- conv3: im2col (B,16,25*O2) then one matmul ------------
    # Rows = (b, s3), s3 = oh3*8 + ow3; valid s3 in {0, 1, 8, 9}.
    for t in range(25):
        i3, j3 = divmod(t, 5)
        off = i3 * 8 + j3
        im3_ref[:, :, t * O2:(t + 1) * O2] = (
            h2s_ref[:, off:off + 16, :].astype(mxu))
    acc3 = jnp.dot(im3_ref[...].reshape(B * 16, 25 * O2), w3k_ref[...],
                   preferred_element_type=jnp.float32)            # (B*16, O2)
    h3 = jnp.maximum(acc3 + b3, 0.0)
    h3s_ref[...] = h3.reshape(B, 16, O2)

    # ---------------- fc: 4 static row copies + ONE (rows,256)x(256,ncp) ----
    # PyTorch NCHW flatten order (c*4 + oh3*2 + ow3) is baked into wfck's
    # K-concatenated blocks (pos = oh3*2 + ow3).
    fcin_ref[...] = jnp.zeros(fcin_ref.shape, fcin_ref.dtype)
    for pos, s3 in enumerate((0, 1, 8, 9)):
        fcin_ref[0:B, pos * O2:(pos + 1) * O2] = (
            h3s_ref[:, s3:s3 + 1, :].reshape(B, O2).astype(mxu))
    out_ref[...] = jnp.dot(fcin_ref[...], wfck_ref[...],
                           preferred_element_type=jnp.float32) + bfc


# ----------------------------------------------------------------------------
# Parameter init (matches the PyTorch module's parameter set)
# ----------------------------------------------------------------------------
def init_params(key, num_classes, num_filters, num_channels):
    ks = jax.random.split(key, 8)
    s = 0.05
    return {
        "w1": s * jax.random.normal(ks[0], (num_filters, num_channels, 8, 8), jnp.float32),
        "b1": s * jax.random.normal(ks[1], (num_filters,), jnp.float32),
        "w2": s * jax.random.normal(ks[2], (2 * num_filters, num_filters, 6, 6), jnp.float32),
        "b2": s * jax.random.normal(ks[3], (2 * num_filters,), jnp.float32),
        "w3": s * jax.random.normal(ks[4], (2 * num_filters, 2 * num_filters, 5, 5), jnp.float32),
        "b3": s * jax.random.normal(ks[5], (2 * num_filters,), jnp.float32),
        "wfc": s * jax.random.normal(ks[6], (num_classes, 256), jnp.float32),  # PyTorch (out,in)
        "bfc": s * jax.random.normal(ks[7], (num_classes,), jnp.float32),
        "gamma1": jnp.ones((num_filters,), jnp.float32),
        "beta1": jnp.zeros((num_filters,), jnp.float32),
        "gamma2": jnp.ones((2 * num_filters,), jnp.float32),
        "beta2": jnp.zeros((2 * num_filters,), jnp.float32),
    }


# ----------------------------------------------------------------------------
# One-time weight packing (hoisted out of the hot path; numpy, done once)
# ----------------------------------------------------------------------------
def prepare_params(params, num_classes, num_filters, num_channels,
                   mxu_dtype=jnp.bfloat16):
    F, C = num_filters, num_channels
    O2 = 2 * F
    w1 = np.asarray(params["w1"], np.float32)     # (F, C, 8, 8)
    w2 = np.asarray(params["w2"], np.float32)     # (2F, F, 6, 6)
    w3 = np.asarray(params["w3"], np.float32)     # (2F, 2F, 5, 5)
    wfc = np.asarray(params["wfc"], np.float32)   # (ncls, 256)

    # conv1: packed for the factor-4 space-to-depth input (lanes = rh, rw, c)
    # and the phase-split output (lanes = ph, pw, o); K-concatenated over the
    # 9 coarse taps (U, V).
    w1q = np.zeros((3, 3, 4, 4, C, 2, 2, F), np.float32)
    for ph in range(2):
        for pw in range(2):
            for i in range(8):
                for j in range(8):
                    U, rh = divmod(2 * ph + i, 4)
                    V, rw = divmod(2 * pw + j, 4)
                    w1q[U, V, rh, rw, :, ph, pw, :] = w1[:, :, i, j].T
    w1k = w1q.reshape(9 * 16 * C, 4 * F)

    # conv2: packed against the (ph, pw, c) phase-split h1 lanes,
    # K-concatenated over the (i2, j2) coarse taps.
    w2q = np.zeros((3, 3, 2, 2, F, O2), np.float32)
    for i2 in range(3):
        for j2 in range(3):
            for ph in range(2):
                for pw in range(2):
                    w2q[i2, j2, ph, pw] = w2[:, :, 2 * i2 + ph, 2 * j2 + pw].T
    w2k = w2q.reshape(9 * 4 * F, O2)

    # conv3: standard (kh, kw, cin, cout) taps, K-concatenated.
    w3k = w3.transpose(2, 3, 1, 0).reshape(25 * O2, O2)

    # fc: bake the PyTorch NCHW flatten order (c*4 + h*2 + w) into per-position
    # (2F, ncls) blocks, K-concatenated, padded lane-dense to a multiple of 128.
    ncp = ((num_classes + 127) // 128) * 128
    wfcq = wfc.reshape(num_classes, O2, 2, 2).transpose(2, 3, 1, 0)  # (h,w,c,k)
    wfck = wfcq.reshape(4 * O2, num_classes)
    wfck = np.pad(wfck, ((0, 0), (0, ncp - num_classes)))

    # All 1-row parameter vectors in one lane-dense tile.
    width = max(128, ncp, 4 * F)
    pvec = np.zeros((8, width), np.float32)
    pvec[0, :4 * F] = np.tile(np.asarray(params["b1"], np.float32), 4)
    pvec[1, :4 * F] = np.tile(np.asarray(params["gamma1"], np.float32), 4)
    pvec[2, :4 * F] = np.tile(np.asarray(params["beta1"], np.float32), 4)
    pvec[3, :O2] = np.asarray(params["b2"], np.float32)
    pvec[4, :O2] = np.asarray(params["gamma2"], np.float32)
    pvec[5, :O2] = np.asarray(params["beta2"], np.float32)
    pvec[6, :O2] = np.asarray(params["b3"], np.float32)
    pvec[7, :num_classes] = np.asarray(params["bfc"], np.float32)

    return {
        "w1k": jnp.asarray(w1k, mxu_dtype),
        "w2k": jnp.asarray(w2k, mxu_dtype),
        "w3k": jnp.asarray(w3k, mxu_dtype),
        "wfck": jnp.asarray(wfck, mxu_dtype),
        "pvec": jnp.asarray(pvec),
        # (4F,4F) matrix summing the 4 phase lane-groups of each channel.
        "phase_sum": jnp.asarray(np.tile(np.eye(F, dtype=np.float32), (4, 4))),
    }


# ----------------------------------------------------------------------------
# Forward pass: wrapper does only layout plumbing; one pallas_call does the math
# ----------------------------------------------------------------------------
def cnn_forward(prep, x_nchw, *, num_classes, num_filters, num_channels,
                do_bn=True):
    B, C, H, W = x_nchw.shape
    F = num_filters
    O2 = 2 * F
    assert (H, W, C) == (32, 32, num_channels)   # fc(256) fixes the geometry
    assert 8 * F == 256                          # flatten = 2F*2*2 = 256
    ncp = prep["wfck"].shape[1]
    mxu_dtype = prep["w1k"].dtype
    out_rows = max(8, ((B + 7) // 8) * 8)

    # NCHW -> NHWC, pad for conv1, factor-4 space-to-depth, wrapper-side
    # im2col over the 3x3 coarse taps (pure layout plumbing; (B*64, 432)).
    x = jnp.transpose(x_nchw, (0, 2, 3, 1)).astype(jnp.float32)
    xp = jnp.pad(x, ((0, 0), (3, 5), (3, 5), (0, 0)))                  # (B,40,40,C)
    xq = xp.reshape(B, 10, 4, 10, 4, C).transpose(0, 1, 3, 2, 4, 5)
    xq = xq.reshape(B, 10, 10, 16 * C)
    patches = [xq[:, U:U + 8, V:V + 8, :] for U in range(3) for V in range(3)]
    im1 = jnp.concatenate(patches, axis=-1).reshape(B * 64, 9 * 16 * C)
    im1 = im1.astype(mxu_dtype)

    kern = functools.partial(_cnn_fused_kernel, B=B, F=F, do_bn=do_bn, eps=1e-5)
    vmem = pl.BlockSpec(memory_space=pltpu.MemorySpace.VMEM)
    out = pl.pallas_call(
        kern,
        out_shape=jax.ShapeDtypeStruct((out_rows, ncp), jnp.float32),
        in_specs=[vmem] * 7,
        out_specs=vmem,
        scratch_shapes=[
            pltpu.VMEM((B, 72, 4 * F), jnp.float32),    # h1 (phase-split) + slack
            pltpu.VMEM((B, 48, 9 * 4 * F), mxu_dtype),  # conv2 im2col
            pltpu.VMEM((B, 56, O2), jnp.float32),       # h2 + slack
            pltpu.VMEM((B, 16, 25 * O2), mxu_dtype),    # conv3 im2col
            pltpu.VMEM((B, 16, O2), jnp.float32),       # h3
            pltpu.VMEM((out_rows, 4 * O2), mxu_dtype),  # fc staging tile
        ],
    )(im1, prep["w1k"], prep["w2k"], prep["w3k"], prep["wfck"],
      prep["pvec"], prep["phase_sum"])

    return out[:B, :num_classes]


# ----------------------------------------------------------------------------
# Pure-JAX reference (mirrors the PyTorch forward) for a sanity check
# ----------------------------------------------------------------------------
def cnn_reference(params, x, *, do_bn, eps=1e-5):
    hp = jax.lax.Precision.HIGHEST

    def conv(x, w, b, stride, pad):
        y = jax.lax.conv_general_dilated(
            x, w, window_strides=(stride, stride),
            padding=[(pad, pad), (pad, pad)],
            dimension_numbers=("NCHW", "OIHW", "NCHW"), precision=hp)
        return y + b.reshape(1, -1, 1, 1)

    def bn(x, gamma, beta):
        mean = x.mean(axis=(0, 2, 3), keepdims=True)
        var = ((x - mean) ** 2).mean(axis=(0, 2, 3), keepdims=True)
        xn = (x - mean) * jax.lax.rsqrt(var + eps)
        return xn * gamma.reshape(1, -1, 1, 1) + beta.reshape(1, -1, 1, 1)

    h = jax.nn.relu(conv(x, params["w1"], params["b1"], 2, 3))
    if do_bn:
        h = bn(h, params["gamma1"], params["beta1"])
    h = jax.nn.relu(conv(h, params["w2"], params["b2"], 2, 0))
    if do_bn:
        h = bn(h, params["gamma2"], params["beta2"])
    h = jax.nn.relu(conv(h, params["w3"], params["b3"], 1, 0))
    flat = h.reshape(h.shape[0], -1)
    return jnp.dot(flat, params["wfc"].T, precision=hp) + params["bfc"]


# ----------------------------------------------------------------------------
if __name__ == "__main__":
    # Shapes chosen so flatten == 256 (fc input): 32x32 input, num_filters=32
    #   conv1: 32 -> 16, conv2: 16 -> 6, conv3: 6 -> 2, 2*32*2*2 = 256
    num_classes, num_filters, num_channels, do_bn = 10, 32, 3, True
    B, H, W = 2, 32, 32

    key = jax.random.PRNGKey(0)
    k_param, k_x = jax.random.split(key)
    params = init_params(k_param, num_classes, num_filters, num_channels)
    prep = prepare_params(params, num_classes, num_filters, num_channels)
    x = jax.random.normal(k_x, (B, num_channels, H, W), jnp.float32)

    fwd = jax.jit(functools.partial(cnn_forward,
                                    num_classes=num_classes,
                                    num_filters=num_filters,
                                    num_channels=num_channels,
                                    do_bn=do_bn))
    out = fwd(prep, x)
    out = jax.block_until_ready(out)

    assert out.shape == (B, num_classes), out.shape
    assert jnp.isfinite(out).all()

    # Sanity check against the pure-JAX reference (loose tolerance covers the
    # bf16 MXU operands; structural bugs would show up as O(1) errors).
    ref = jax.block_until_ready(cnn_reference(params, x, do_bn=do_bn))
    np.testing.assert_allclose(np.asarray(out), np.asarray(ref),
                               rtol=5e-2, atol=2e-1)

    print("KERNEL_OK")
</pallas_src>

<mosaic_0001>
module attributes {stable_mosaic.version = 11 : i64} {
  func.func @_cnn_fused_kernel(%arg0: memref<128x432xbf16, #tpu.memory_space<vmem>>, %arg1: memref<432x128xbf16, #tpu.memory_space<vmem>>, %arg2: memref<1152x64xbf16, #tpu.memory_space<vmem>>, %arg3: memref<1600x64xbf16, #tpu.memory_space<vmem>>, %arg4: memref<256x128xbf16, #tpu.memory_space<vmem>>, %arg5: memref<8x128xf32, #tpu.memory_space<vmem>>, %arg6: memref<128x128xf32, #tpu.memory_space<vmem>>, %arg7: memref<8x128xf32, #tpu.memory_space<vmem>>, %arg8: memref<2x72x128xf32, #tpu.memory_space<vmem>>, %arg9: memref<2x48x1152xbf16, #tpu.memory_space<vmem>>, %arg10: memref<2x56x64xf32, #tpu.memory_space<vmem>>, %arg11: memref<2x16x1600xbf16, #tpu.memory_space<vmem>>, %arg12: memref<2x16x64xf32, #tpu.memory_space<vmem>>, %arg13: memref<8x256xbf16, #tpu.memory_space<vmem>>) attributes {dimension_semantics = [], scalar_prefetch = 0 : i64, scratch_operands = 6 : i64, tpu.core_type = #tpu.core_type<tc>} {
    %c0 = arith.constant 0 : index
    %c0_0 = arith.constant 0 : index
    %0 = vector.load %arg5[%c0, %c0_0] : memref<8x128xf32, #tpu.memory_space<vmem>>, vector<1x128xf32>
    %c1 = arith.constant 1 : index
    %c0_1 = arith.constant 0 : index
    %1 = vector.load %arg5[%c1, %c0_1] : memref<8x128xf32, #tpu.memory_space<vmem>>, vector<1x128xf32>
    %c2 = arith.constant 2 : index
    %c0_2 = arith.constant 0 : index
    %2 = vector.load %arg5[%c2, %c0_2] : memref<8x128xf32, #tpu.memory_space<vmem>>, vector<1x128xf32>
    %c3 = arith.constant 3 : index
    %c0_3 = arith.constant 0 : index
    %3 = vector.load %arg5[%c3, %c0_3] : memref<8x128xf32, #tpu.memory_space<vmem>>, vector<1x64xf32>
    %c4 = arith.constant 4 : index
    %c0_4 = arith.constant 0 : index
    %4 = vector.load %arg5[%c4, %c0_4] : memref<8x128xf32, #tpu.memory_space<vmem>>, vector<1x64xf32>
    %c5 = arith.constant 5 : index
    %c0_5 = arith.constant 0 : index
    %5 = vector.load %arg5[%c5, %c0_5] : memref<8x128xf32, #tpu.memory_space<vmem>>, vector<1x64xf32>
    %c6 = arith.constant 6 : index
    %c0_6 = arith.constant 0 : index
    %6 = vector.load %arg5[%c6, %c0_6] : memref<8x128xf32, #tpu.memory_space<vmem>>, vector<1x64xf32>
    %c7 = arith.constant 7 : index
    %c0_7 = arith.constant 0 : index
    %7 = vector.load %arg5[%c7, %c0_7] : memref<8x128xf32, #tpu.memory_space<vmem>>, vector<1x128xf32>
    %c0_8 = arith.constant 0 : index
    %c0_9 = arith.constant 0 : index
    %8 = vector.load %arg0[%c0_8, %c0_9] : memref<128x432xbf16, #tpu.memory_space<vmem>>, vector<128x432xbf16>
    %c0_10 = arith.constant 0 : index
    %c0_11 = arith.constant 0 : index
    %9 = vector.load %arg1[%c0_10, %c0_11] : memref<432x128xbf16, #tpu.memory_space<vmem>>, vector<432x128xbf16>
    %cst = arith.constant dense<0.000000e+00> : vector<128x128xf32>
    %10 = tpu.matmul %8, %9, %cst {dimension_numbers = #tpu.dot_dimension_numbers<[1], [0], [0], [1], [0, 0, 1, 1], [], []>} : vector<128x432xbf16>, vector<432x128xbf16>, vector<128x128xf32> -> vector<128x128xf32>
    %11 = vector.broadcast %0 : vector<1x128xf32> to vector<128x128xf32>
    %12 = arith.addf %10, %11 : vector<128x128xf32>
    %cst_12 = arith.constant 0.000000e+00 : f32
    %13 = vector.broadcast %cst_12 : f32 to vector<128x128xf32>
    %14 = arith.maximumf %12, %13 : vector<128x128xf32>
    %cst_13 = arith.constant dense<0.000000e+00> : vector<128xf32>
    %15 = vector.multi_reduction <add>, %14, %cst_13 [0] : vector<128x128xf32> to vector<128xf32>
    %16 = vector.shape_cast %15 : vector<128xf32> to vector<1x128xf32>
    %17 = arith.mulf %14, %14 : vector<128x128xf32>
    %cst_14 = arith.constant dense<0.000000e+00> : vector<128xf32>
    %18 = vector.multi_reduction <add>, %17, %cst_14 [0] : vector<128x128xf32> to vector<128xf32>
    %19 = vector.shape_cast %18 : vector<128xf32> to vector<1x128xf32>
    %c0_15 = arith.constant 0 : index
    %c0_16 = arith.constant 0 : index
    %20 = vector.load %arg6[%c0_15, %c0_16] : memref<128x128xf32, #tpu.memory_space<vmem>>, vector<128x128xf32>
    %cst_17 = arith.constant dense<0.000000e+00> : vector<1x128xf32>
    %21 = tpu.matmul %16, %20, %cst_17 {dimension_numbers = #tpu.dot_dimension_numbers<[1], [0], [0], [1], [0, 0, 1, 1], [], []>} : vector<1x128xf32>, vector<128x128xf32>, vector<1x128xf32> -> vector<1x128xf32>
    %cst_18 = arith.constant 5.120000e+02 : f32
    %22 = vector.broadcast %cst_18 : f32 to vector<1x128xf32>
    %23 = arith.divf %21, %22 : vector<1x128xf32>
    %c0_19 = arith.constant 0 : index
    %c0_20 = arith.constant 0 : index
    %24 = vector.load %arg6[%c0_19, %c0_20] : memref<128x128xf32, #tpu.memory_space<vmem>>, vector<128x128xf32>
    %cst_21 = arith.constant dense<0.000000e+00> : vector<1x128xf32>
    %25 = tpu.matmul %19, %24, %cst_21 {dimension_numbers = #tpu.dot_dimension_numbers<[1], [0], [0], [1], [0, 0, 1, 1], [], []>} : vector<1x128xf32>, vector<128x128xf32>, vector<1x128xf32> -> vector<1x128xf32>
    %cst_22 = arith.constant 5.120000e+02 : f32
    %26 = vector.broadcast %cst_22 : f32 to vector<1x128xf32>
    %27 = arith.divf %25, %26 : vector<1x128xf32>
    %28 = arith.mulf %23, %23 : vector<1x128xf32>
    %29 = arith.subf %27, %28 : vector<1x128xf32>
    %30 = vector.broadcast %23 : vector<1x128xf32> to vector<128x128xf32>
    %31 = arith.subf %14, %30 : vector<128x128xf32>
    %cst_23 = arith.constant 9.99999974E-6 : f32
    %32 = vector.broadcast %cst_23 : f32 to vector<1x128xf32>
    %33 = arith.addf %29, %32 : vector<1x128xf32>
    %34 = math.rsqrt %33 : vector<1x128xf32>
    %35 = vector.broadcast %34 : vector<1x128xf32> to vector<128x128xf32>
    %36 = arith.mulf %31, %35 : vector<128x128xf32>
    %37 = vector.broadcast %1 : vector<1x128xf32> to vector<128x128xf32>
    %38 = arith.mulf %36, %37 : vector<128x128xf32>
    %39 = vector.broadcast %2 : vector<1x128xf32> to vector<128x128xf32>
    %40 = arith.addf %38, %39 : vector<128x128xf32>
    %41 = vector.shape_cast %40 : vector<128x128xf32> to vector<2x64x128xf32>
    %c0_24 = arith.constant 0 : index
    %c0_25 = arith.constant 0 : index
    %c0_26 = arith.constant 0 : index
    %42 = vector.load %arg8[%c0_24, %c0_25, %c0_26] : memref<2x72x128xf32, #tpu.memory_space<vmem>>, vector<2x64x128xf32>
    tpu.vector_store %arg8[%c0_24, %c0_25, %c0_26], %41 {strides = array<i32>} : memref<2x72x128xf32, #tpu.memory_space<vmem>>, vector<2x64x128xf32>,
    %cst_27 = arith.constant 0.000000e+00 : f32
    %43 = vector.broadcast %cst_27 : f32 to vector<2x8x128xf32>
    %c0_28 = arith.constant 0 : index
    %c64 = arith.constant 64 : index
    %c0_29 = arith.constant 0 : index
    %44 = vector.load %arg8[%c0_28, %c64, %c0_29] : memref<2x72x128xf32, #tpu.memory_space<vmem>>, vector<2x8x128xf32>
    tpu.vector_store %arg8[%c0_28, %c64, %c0_29], %43 {strides = array<i32>} : memref<2x72x128xf32, #tpu.memory_space<vmem>>, vector<2x8x128xf32>,
    %c0_30 = arith.constant 0 : index
    %c0_31 = arith.constant 0 : index
    %c0_32 = arith.constant 0 : index
    %45 = vector.load %arg8[%c0_30, %c0_31, %c0_32] : memref<2x72x128xf32, #tpu.memory_space<vmem>>, vector<2x48x128xf32>
    %46 = arith.truncf %45 : vector<2x48x128xf32> to vector<2x48x128xbf16>
    %c0_33 = arith.constant 0 : index
    %c0_34 = arith.constant 0 : index
    %c0_35 = arith.constant 0 : index
    %47 = vector.load %arg9[%c0_33, %c0_34, %c0_35] : memref<2x48x1152xbf16, #tpu.memory_space<vmem>>, vector<2x48x128xbf16>
    tpu.vector_store %arg9[%c0_33, %c0_34, %c0_35], %46 {strides = array<i32>} : memref<2x48x1152xbf16, #tpu.memory_space<vmem>>, vector<2x48x128xbf16>,
    %c0_36 = arith.constant 0 : index
    %c1_37 = arith.constant 1 : index
    %c0_38 = arith.constant 0 : index
    %48 = vector.load %arg8[%c0_36, %c1_37, %c0_38] : memref<2x72x128xf32, #tpu.memory_space<vmem>>, vector<2x48x128xf32>
    %49 = arith.truncf %48 : vector<2x48x128xf32> to vector<2x48x128xbf16>
    %c0_39 = arith.constant 0 : index
    %c0_40 = arith.constant 0 : index
    %c128 = arith.constant 128 : index
    %50 = vector.load %arg9[%c0_39, %c0_40, %c128] : memref<2x48x1152xbf16, #tpu.memory_space<vmem>>, vector<2x48x128xbf16>
    tpu.vector_store %arg9[%c0_39, %c0_40, %c128], %49 {strides = array<i32>} : memref<2x48x1152xbf16, #tpu.memory_space<vmem>>, vector<2x48x128xbf16>,
    %c0_41 = arith.constant 0 : index
    %c2_42 = arith.constant 2 : index
    %c0_43 = arith.constant 0 : index
    %51 = vector.load %arg8[%c0_41, %c2_42, %c0_43] : memref<2x72x128xf32, #tpu.memory_space<vmem>>, vector<2x48x128xf32>
    %52 = arith.truncf %51 : vector<2x48x128xf32> to vector<2x48x128xbf16>
    %c0_44 = arith.constant 0 : index
    %c0_45 = arith.constant 0 : index
    %c256 = arith.constant 256 : index
    %53 = vector.load %arg9[%c0_44, %c0_45, %c256] : memref<2x48x1152xbf16, #tpu.memory_space<vmem>>, vector<2x48x128xbf16>
    tpu.vector_store %arg9[%c0_44, %c0_45, %c256], %52 {strides = array<i32>} : memref<2x48x1152xbf16, #tpu.memory_space<vmem>>, vector<2x48x128xbf16>,
    %c0_46 = arith.constant 0 : index
    %c8 = arith.constant 8 : index
    %c0_47 = arith.constant 0 : index
    %54 = vector.load %arg8[%c0_46, %c8, %c0_47] : memref<2x72x128xf32, #tpu.memory_space<vmem>>, vector<2x48x128xf32>
    %55 = arith.truncf %54 : vector<2x48x128xf32> to vector<2x48x128xbf16>
    %c0_48 = arith.constant 0 : index
    %c0_49 = arith.constant 0 : index
    %c384 = arith.constant 384 : index
    %56 = vector.load %arg9[%c0_48, %c0_49, %c384] : memref<2x48x1152xbf16, #tpu.memory_space<vmem>>, vector<2x48x128xbf16>
    tpu.vector_store %arg9[%c0_48, %c0_49, %c384], %55 {strides = array<i32>} : memref<2x48x1152xbf16, #tpu.memory_space<vmem>>, vector<2x48x128xbf16>,
    %c0_50 = arith.constant 0 : index
    %c9 = arith.constant 9 : index
    %c0_51 = arith.constant 0 : index
    %57 = vector.load %arg8[%c0_50, %c9, %c0_51] : memref<2x72x128xf32, #tpu.memory_space<vmem>>, vector<2x48x128xf32>
    %58 = arith.truncf %57 : vector<2x48x128xf32> to vector<2x48x128xbf16>
    %c0_52 = arith.constant 0 : index
    %c0_53 = arith.constant 0 : index
    %c512 = arith.constant 512 : index
    %59 = vector.load %arg9[%c0_52, %c0_53, %c512] : memref<2x48x1152xbf16, #tpu.memory_space<vmem>>, vector<2x48x128xbf16>
    tpu.vector_store %arg9[%c0_52, %c0_53, %c512], %58 {strides = array<i32>} : memref<2x48x1152xbf16, #tpu.memory_space<vmem>>, vector<2x48x128xbf16>,
    %c0_54 = arith.constant 0 : index
    %c10 = arith.constant 10 : index
    %c0_55 = arith.constant 0 : index
    %60 = vector.load %arg8[%c0_54, %c10, %c0_55] : memref<2x72x128xf32, #tpu.memory_space<vmem>>, vector<2x48x128xf32>
    %61 = arith.truncf %60 : vector<2x48x128xf32> to vector<2x48x128xbf16>
    %c0_56 = arith.constant 0 : index
    %c0_57 = arith.constant 0 : index
    %c640 = arith.constant 640 : index
    %62 = vector.load %arg9[%c0_56, %c0_57, %c640] : memref<2x48x1152xbf16, #tpu.memory_space<vmem>>, vector<2x48x128xbf16>
    tpu.vector_store %arg9[%c0_56, %c0_57, %c640], %61 {strides = array<i32>} : memref<2x48x1152xbf16, #tpu.memory_space<vmem>>, vector<2x48x128xbf16>,
    %c0_58 = arith.constant 0 : index
    %c16 = arith.constant 16 : index
    %c0_59 = arith.constant 0 : index
    %63 = vector.load %arg8[%c0_58, %c16, %c0_59] : memref<2x72x128xf32, #tpu.memory_space<vmem>>, vector<2x48x128xf32>
    %64 = arith.truncf %63 : vector<2x48x128xf32> to vector<2x48x128xbf16>
    %c0_60 = arith.constant 0 : index
    %c0_61 = arith.constant 0 : index
    %c768 = arith.constant 768 : index
    %65 = vector.load %arg9[%c0_60, %c0_61, %c768] : memref<2x48x1152xbf16, #tpu.memory_space<vmem>>, vector<2x48x128xbf16>
    tpu.vector_store %arg9[%c0_60, %c0_61, %c768], %64 {strides = array<i32>} : memref<2x48x1152xbf16, #tpu.memory_space<vmem>>, vector<2x48x128xbf16>,
    %c0_62 = arith.constant 0 : index
    %c17 = arith.constant 17 : index
    %c0_63 = arith.constant 0 : index
    %66 = vector.load %arg8[%c0_62, %c17, %c0_63] : memref<2x72x128xf32, #tpu.memory_space<vmem>>, vector<2x48x128xf32>
    %67 = arith.truncf %66 : vector<2x48x128xf32> to vector<2x48x128xbf16>
    %c0_64 = arith.constant 0 : index
    %c0_65 = arith.constant 0 : index
    %c896 = arith.constant 896 : index
    %68 = vector.load %arg9[%c0_64, %c0_65, %c896] : memref<2x48x1152xbf16, #tpu.memory_space<vmem>>, vector<2x48x128xbf16>
    tpu.vector_store %arg9[%c0_64, %c0_65, %c896], %67 {strides = array<i32>} : memref<2x48x1152xbf16, #tpu.memory_space<vmem>>, vector<2x48x128xbf16>,
    %c0_66 = arith.constant 0 : index
    %c18 = arith.constant 18 : index
    %c0_67 = arith.constant 0 : index
    %69 = vector.load %arg8[%c0_66, %c18, %c0_67] : memref<2x72x128xf32, #tpu.memory_space<vmem>>, vector<2x48x128xf32>
    %70 = arith.truncf %69 : vector<2x48x128xf32> to vector<2x48x128xbf16>
    %c0_68 = arith.constant 0 : index
    %c0_69 = arith.constant 0 : index
    %c1024 = arith.constant 1024 : index
    %71 = vector.load %arg9[%c0_68, %c0_69, %c1024] : memref<2x48x1152xbf16, #tpu.memory_space<vmem>>, vector<2x48x128xbf16>
    tpu.vector_store %arg9[%c0_68, %c0_69, %c1024], %70 {strides = array<i32>} : memref<2x48x1152xbf16, #tpu.memory_space<vmem>>, vector<2x48x128xbf16>,
    %c0_70 = arith.constant 0 : index
    %c0_71 = arith.constant 0 : index
    %c0_72 = arith.constant 0 : index
    %72 = vector.load %arg9[%c0_70, %c0_71, %c0_72] : memref<2x48x1152xbf16, #tpu.memory_space<vmem>>, vector<2x48x1152xbf16>
    %73 = vector.shape_cast %72 : vector<2x48x1152xbf16> to vector<96x1152xbf16>
    %c0_73 = arith.constant 0 : index
    %c0_74 = arith.constant 0 : index
    %74 = vector.load %arg2[%c0_73, %c0_74] : memref<1152x64xbf16, #tpu.memory_space<vmem>>, vector<1152x64xbf16>
    %cst_75 = arith.constant dense<0.000000e+00> : vector<96x64xf32>
    %75 = tpu.matmul %73, %74, %cst_75 {dimension_numbers = #tpu.dot_dimension_numbers<[1], [0], [0], [1], [0, 0, 1, 1], [], []>} : vector<96x1152xbf16>, vector<1152x64xbf16>, vector<96x64xf32> -> vector<96x64xf32>
    %76 = vector.broadcast %3 : vector<1x64xf32> to vector<96x64xf32>
    %77 = arith.addf %75, %76 : vector<96x64xf32>
    %cst_76 = arith.constant 0.000000e+00 : f32
    %78 = vector.broadcast %cst_76 : f32 to vector<96x64xf32>
    %79 = arith.maximumf %77, %78 : vector<96x64xf32>
    %80 = tpu.iota {dimensions = array<i32: 0>} : vector<96x1xi32>
    %c7_i32 = arith.constant 7 : i32
    %81 = vector.broadcast %c7_i32 : i32 to vector<96x1xi32>
    %82 = arith.andi %80, %81 : vector<96x1xi32>
    %c6_i32 = arith.constant 6 : i32
    %83 = vector.broadcast %c6_i32 : i32 to vector<96x1xi32>
    %84 = arith.cmpi slt, %82, %83 : vector<96x1xi32>
    %85 = arith.extui %84 : vector<96x1xi1> to vector<96x1xi32>
    %86 = arith.sitofp %85 : vector<96x1xi32> to vector<96x1xf32>
    %87 = vector.broadcast %86 : vector<96x1xf32> to vector<96x64xf32>
    %88 = arith.mulf %79, %87 : vector<96x64xf32>
    %cst_77 = arith.constant dense<0.000000e+00> : vector<64xf32>
    %89 = vector.multi_reduction <add>, %88, %cst_77 [0] : vector<96x64xf32> to vector<64xf32>
    %90 = vector.shape_cast %89 : vector<64xf32> to vector<1x64xf32>
    %cst_78 = arith.constant 7.200000e+01 : f32
    %91 = vector.broadcast %cst_78 : f32 to vector<1x64xf32>
    %92 = arith.divf %90, %91 : vector<1x64xf32>
    %93 = arith.mulf %88, %79 : vector<96x64xf32>
    %cst_79 = arith.constant dense<0.000000e+00> : vector<64xf32>
    %94 = vector.multi_reduction <add>, %93, %cst_79 [0] : vector<96x64xf32> to vector<64xf32>
    %95 = vector.shape_cast %94 : vector<64xf32> to vector<1x64xf32>
    %cst_80 = arith.constant 7.200000e+01 : f32
    %96 = vector.broadcast %cst_80 : f32 to vector<1x64xf32>
    %97 = arith.divf %95, %96 : vector<1x64xf32>
    %98 = arith.mulf %92, %92 : vector<1x64xf32>
    %99 = arith.subf %97, %98 : vector<1x64xf32>
    %100 = vector.broadcast %92 : vector<1x64xf32> to vector<96x64xf32>
    %101 = arith.subf %79, %100 : vector<96x64xf32>
    %cst_81 = arith.constant 9.99999974E-6 : f32
    %102 = vector.broadcast %cst_81 : f32 to vector<1x64xf32>
    %103 = arith.addf %99, %102 : vector<1x64xf32>
    %104 = math.rsqrt %103 : vector<1x64xf32>
    %105 = vector.broadcast %104 : vector<1x64xf32> to vector<96x64xf32>
    %106 = arith.mulf %101, %105 : vector<96x64xf32>
    %107 = vector.broadcast %4 : vector<1x64xf32> to vector<96x64xf32>
    %108 = arith.mulf %106, %107 : vector<96x64xf32>
    %109 = vector.broadcast %5 : vector<1x64xf32> to vector<96x64xf32>
    %110 = arith.addf %108, %109 : vector<96x64xf32>
    %111 = vector.shape_cast %110 : vector<96x64xf32> to vector<2x48x64xf32>
    %c0_82 = arith.constant 0 : index
    %c0_83 = arith.constant 0 : index
    %c0_84 = arith.constant 0 : index
    %112 = vector.load %arg10[%c0_82, %c0_83, %c0_84] : memref<2x56x64xf32, #tpu.memory_space<vmem>>, vector<2x48x64xf32>
    tpu.vector_store %arg10[%c0_82, %c0_83, %c0_84], %111 {strides = array<i32>} : memref<2x56x64xf32, #tpu.memory_space<vmem>>, vector<2x48x64xf32>,
    %cst_85 = arith.constant 0.000000e+00 : f32
    %113 = vector.broadcast %cst_85 : f32 to vector<2x8x64xf32>
    %c0_86 = arith.constant 0 : index
    %c48 = arith.constant 48 : index
    %c0_87 = arith.constant 0 : index
    %114 = vector.load %arg10[%c0_86, %c48, %c0_87] : memref<2x56x64xf32, #tpu.memory_space<vmem>>, vector<2x8x64xf32>
    tpu.vector_store %arg10[%c0_86, %c48, %c0_87], %113 {strides = array<i32>} : memref<2x56x64xf32, #tpu.memory_space<vmem>>, vector<2x8x64xf32>,
    %c0_88 = arith.constant 0 : index
    %c0_89 = arith.constant 0 : index
    %c0_90 = arith.constant 0 : index
    %115 = vector.load %arg10[%c0_88, %c0_89, %c0_90] : memref<2x56x64xf32, #tpu.memory_space<vmem>>, vector<2x16x64xf32>
    %116 = arith.truncf %115 : vector<2x16x64xf32> to vector<2x16x64xbf16>
    %c0_91 = arith.constant 0 : index
    %c0_92 = arith.constant 0 : index
    %c0_93 = arith.constant 0 : index
    %117 = vector.load %arg11[%c0_91, %c0_92, %c0_93] : memref<2x16x1600xbf16, #tpu.memory_space<vmem>>, vector<2x16x64xbf16>
    tpu.vector_store %arg11[%c0_91, %c0_92, %c0_93], %116 {strides = array<i32>} : memref<2x16x1600xbf16, #tpu.memory_space<vmem>>, vector<2x16x64xbf16>,
    %c0_94 = arith.constant 0 : index
    %c1_95 = arith.constant 1 : index
    %c0_96 = arith.constant 0 : index
    %118 = vector.load %arg10[%c0_94, %c1_95, %c0_96] : memref<2x56x64xf32, #tpu.memory_space<vmem>>, vector<2x16x64xf32>
    %119 = arith.truncf %118 : vector<2x16x64xf32> to vector<2x16x64xbf16>
    %c0_97 = arith.constant 0 : index
    %c0_98 = arith.constant 0 : index
    %c64_99 = arith.constant 64 : index
    %120 = vector.load %arg11[%c0_97, %c0_98, %c64_99] : memref<2x16x1600xbf16, #tpu.memory_space<vmem>>, vector<2x16x64xbf16>
    tpu.vector_store %arg11[%c0_97, %c0_98, %c64_99], %119 {strides = array<i32>} : memref<2x16x1600xbf16, #tpu.memory_space<vmem>>, vector<2x16x64xbf16>,
    %c0_100 = arith.constant 0 : index
    %c2_101 = arith.constant 2 : index
    %c0_102 = arith.constant 0 : index
    %121 = vector.load %arg10[%c0_100, %c2_101, %c0_102] : memref<2x56x64xf32, #tpu.memory_space<vmem>>, vector<2x16x64xf32>
    %122 = arith.truncf %121 : vector<2x16x64xf32> to vector<2x16x64xbf16>
    %c0_103 = arith.constant 0 : index
    %c0_104 = arith.constant 0 : index
    %c128_105 = arith.constant 128 : index
    %123 = vector.load %arg11[%c0_103, %c0_104, %c128_105] : memref<2x16x1600xbf16, #tpu.memory_space<vmem>>, vector<2x16x64xbf16>
    tpu.vector_store %arg11[%c0_103, %c0_104, %c128_105], %122 {strides = array<i32>} : memref<2x16x1600xbf16, #tpu.memory_space<vmem>>, vector<2x16x64xbf16>,
    %c0_106 = arith.constant 0 : index
    %c3_107 = arith.constant 3 : index
    %c0_108 = arith.constant 0 : index
    %124 = vector.load %arg10[%c0_106, %c3_107, %c0_108] : memref<2x56x64xf32, #tpu.memory_space<vmem>>, vector<2x16x64xf32>
    %125 = arith.truncf %124 : vector<2x16x64xf32> to vector<2x16x64xbf16>
    %c0_109 = arith.constant 0 : index
    %c0_110 = arith.constant 0 : index
    %c192 = arith.constant 192 : index
    %126 = vector.load %arg11[%c0_109, %c0_110, %c192] : memref<2x16x1600xbf16, #tpu.memory_space<vmem>>, vector<2x16x64xbf16>
    tpu.vector_store %arg11[%c0_109, %c0_110, %c192], %125 {strides = array<i32>} : memref<2x16x1600xbf16, #tpu.memory_space<vmem>>, vector<2x16x64xbf16>,
    %c0_111 = arith.constant 0 : index
    %c4_112 = arith.constant 4 : index
    %c0_113 = arith.constant 0 : index
    %127 = vector.load %arg10[%c0_111, %c4_112, %c0_113] : memref<2x56x64xf32, #tpu.memory_space<vmem>>, vector<2x16x64xf32>
    %128 = arith.truncf %127 : vector<2x16x64xf32> to vector<2x16x64xbf16>
    %c0_114 = arith.constant 0 : index
    %c0_115 = arith.constant 0 : index
    %c256_116 = arith.constant 256 : index
    %129 = vector.load %arg11[%c0_114, %c0_115, %c256_116] : memref<2x16x1600xbf16, #tpu.memory_space<vmem>>, vector<2x16x64xbf16>
    tpu.vector_store %arg11[%c0_114, %c0_115, %c256_116], %128 {strides = array<i32>} : memref<2x16x1600xbf16, #tpu.memory_space<vmem>>, vector<2x16x64xbf16>,
    %c0_117 = arith.constant 0 : index
    %c8_118 = arith.constant 8 : index
    %c0_119 = arith.constant 0 : index
    %130 = vector.load %arg10[%c0_117, %c8_118, %c0_119] : memref<2x56x64xf32, #tpu.memory_space<vmem>>, vector<2x16x64xf32>
    %131 = arith.truncf %130 : vector<2x16x64xf32> to vector<2x16x64xbf16>
    %c0_120 = arith.constant 0 : index
    %c0_121 = arith.constant 0 : index
    %c320 = arith.constant 320 : index
    %132 = vector.load %arg11[%c0_120, %c0_121, %c320] : memref<2x16x1600xbf16, #tpu.memory_space<vmem>>, vector<2x16x64xbf16>
    tpu.vector_store %arg11[%c0_120, %c0_121, %c320], %131 {strides = array<i32>} : memref<2x16x1600xbf16, #tpu.memory_space<vmem>>, vector<2x16x64xbf16>,
    %c0_122 = arith.constant 0 : index
    %c9_123 = arith.constant 9 : index
    %c0_124 = arith.constant 0 : index
    %133 = vector.load %arg10[%c0_122, %c9_123, %c0_124] : memref<2x56x64xf32, #tpu.memory_space<vmem>>, vector<2x16x64xf32>
    %134 = arith.truncf %133 : vector<2x16x64xf32> to vector<2x16x64xbf16>
    %c0_125 = arith.constant 0 : index
    %c0_126 = arith.constant 0 : index
    %c384_127 = arith.constant 384 : index
    %135 = vector.load %arg11[%c0_125, %c0_126, %c384_127] : memref<2x16x1600xbf16, #tpu.memory_space<vmem>>, vector<2x16x64xbf16>
    tpu.vector_store %arg11[%c0_125, %c0_126, %c384_127], %134 {strides = array<i32>} : memref<2x16x1600xbf16, #tpu.memory_space<vmem>>, vector<2x16x64xbf16>,
    %c0_128 = arith.constant 0 : index
    %c10_129 = arith.constant 10 : index
    %c0_130 = arith.constant 0 : index
    %136 = vector.load %arg10[%c0_128, %c10_129, %c0_130] : memref<2x56x64xf32, #tpu.memory_space<vmem>>, vector<2x16x64xf32>
    %137 = arith.truncf %136 : vector<2x16x64xf32> to vector<2x16x64xbf16>
    %c0_131 = arith.constant 0 : index
    %c0_132 = arith.constant 0 : index
    %c448 = arith.constant 448 : index
    %138 = vector.load %arg11[%c0_131, %c0_132, %c448] : memref<2x16x1600xbf16, #tpu.memory_space<vmem>>, vector<2x16x64xbf16>
    tpu.vector_store %arg11[%c0_131, %c0_132, %c448], %137 {strides = array<i32>} : memref<2x16x1600xbf16, #tpu.memory_space<vmem>>, vector<2x16x64xbf16>,
    %c0_133 = arith.constant 0 : index
    %c11 = arith.constant 11 : index
    %c0_134 = arith.constant 0 : index
    %139 = vector.load %arg10[%c0_133, %c11, %c0_134] : memref<2x56x64xf32, #tpu.memory_space<vmem>>, vector<2x16x64xf32>
    %140 = arith.truncf %139 : vector<2x16x64xf32> to vector<2x16x64xbf16>
    %c0_135 = arith.constant 0 : index
    %c0_136 = arith.constant 0 : index
    %c512_137 = arith.constant 512 : index
    %141 = vector.load %arg11[%c0_135, %c0_136, %c512_137] : memref<2x16x1600xbf16, #tpu.memory_space<vmem>>, vector<2x16x64xbf16>
    tpu.vector_store %arg11[%c0_135, %c0_136, %c512_137], %140 {strides = array<i32>} : memref<2x16x1600xbf16, #tpu.memory_space<vmem>>, vector<2x16x64xbf16>,
    %c0_138 = arith.constant 0 : index
    %c12 = arith.constant 12 : index
    %c0_139 = arith.constant 0 : index
    %142 = vector.load %arg10[%c0_138, %c12, %c0_139] : memref<2x56x64xf32, #tpu.memory_space<vmem>>, vector<2x16x64xf32>
    %143 = arith.truncf %142 : vector<2x16x64xf32> to vector<2x16x64xbf16>
    %c0_140 = arith.constant 0 : index
    %c0_141 = arith.constant 0 : index
    %c576 = arith.constant 576 : index
    %144 = vector.load %arg11[%c0_140, %c0_141, %c576] : memref<2x16x1600xbf16, #tpu.memory_space<vmem>>, vector<2x16x64xbf16>
    tpu.vector_store %arg11[%c0_140, %c0_141, %c576], %143 {strides = array<i32>} : memref<2x16x1600xbf16, #tpu.memory_space<vmem>>, vector<2x16x64xbf16>,
    %c0_142 = arith.constant 0 : index
    %c16_143 = arith.constant 16 : index
    %c0_144 = arith.constant 0 : index
    %145 = vector.load %arg10[%c0_142, %c16_143, %c0_144] : memref<2x56x64xf32, #tpu.memory_space<vmem>>, vector<2x16x64xf32>
    %146 = arith.truncf %145 : vector<2x16x64xf32> to vector<2x16x64xbf16>
    %c0_145 = arith.constant 0 : index
    %c0_146 = arith.constant 0 : index
    %c640_147 = arith.constant 640 : index
    %147 = vector.load %arg11[%c0_145, %c0_146, %c640_147] : memref<2x16x1600xbf16, #tpu.memory_space<vmem>>, vector<2x16x64xbf16>
    tpu.vector_store %arg11[%c0_145, %c0_146, %c640_147], %146 {strides = array<i32>} : memref<2x16x1600xbf16, #tpu.memory_space<vmem>>, vector<2x16x64xbf16>,
    %c0_148 = arith.constant 0 : index
    %c17_149 = arith.constant 17 : index
    %c0_150 = arith.constant 0 : index
    %148 = vector.load %arg10[%c0_148, %c17_149, %c0_150] : memref<2x56x64xf32, #tpu.memory_space<vmem>>, vector<2x16x64xf32>
    %149 = arith.truncf %148 : vector<2x16x64xf32> to vector<2x16x64xbf16>
    %c0_151 = arith.constant 0 : index
    %c0_152 = arith.constant 0 : index
    %c704 = arith.constant 704 : index
    %150 = vector.load %arg11[%c0_151, %c0_152, %c704] : memref<2x16x1600xbf16, #tpu.memory_space<vmem>>, vector<2x16x64xbf16>
    tpu.vector_store %arg11[%c0_151, %c0_152, %c704], %149 {strides = array<i32>} : memref<2x16x1600xbf16, #tpu.memory_space<vmem>>, vector<2x16x64xbf16>,
    %c0_153 = arith.constant 0 : index
    %c18_154 = arith.constant 18 : index
    %c0_155 = arith.constant 0 : index
    %151 = vector.load %arg10[%c0_153, %c18_154, %c0_155] : memref<2x56x64xf32, #tpu.memory_space<vmem>>, vector<2x16x64xf32>
    %152 = arith.truncf %151 : vector<2x16x64xf32> to vector<2x16x64xbf16>
    %c0_156 = arith.constant 0 : index
    %c0_157 = arith.constant 0 : index
    %c768_158 = arith.constant 768 : index
    %153 = vector.load %arg11[%c0_156, %c0_157, %c768_158] : memref<2x16x1600xbf16, #tpu.memory_space<vmem>>, vector<2x16x64xbf16>
    tpu.vector_store %arg11[%c0_156, %c0_157, %c768_158], %152 {strides = array<i32>} : memref<2x16x1600xbf16, #tpu.memory_space<vmem>>, vector<2x16x64xbf16>,
    %c0_159 = arith.constant 0 : index
    %c19 = arith.constant 19 : index
    %c0_160 = arith.constant 0 : index
    %154 = vector.load %arg10[%c0_159, %c19, %c0_160] : memref<2x56x64xf32, #tpu.memory_space<vmem>>, vector<2x16x64xf32>
    %155 = arith.truncf %154 : vector<2x16x64xf32> to vector<2x16x64xbf16>
    %c0_161 = arith.constant 0 : index
    %c0_162 = arith.constant 0 : index
    %c832 = arith.constant 832 : index
    %156 = vector.load %arg11[%c0_161, %c0_162, %c832] : memref<2x16x1600xbf16, #tpu.memory_space<vmem>>, vector<2x16x64xbf16>
    tpu.vector_store %arg11[%c0_161, %c0_162, %c832], %155 {strides = array<i32>} : memref<2x16x1600xbf16, #tpu.memory_space<vmem>>, vector<2x16x64xbf16>,
    %c0_163 = arith.constant 0 : index
    %c20 = arith.constant 20 : index
    %c0_164 = arith.constant 0 : index
    %157 = vector.load %arg10[%c0_163, %c20, %c0_164] : memref<2x56x64xf32, #tpu.memory_space<vmem>>, vector<2x16x64xf32>
    %158 = arith.truncf %157 : vector<2x16x64xf32> to vector<2x16x64xbf16>
    %c0_165 = arith.constant 0 : index
    %c0_166 = arith.constant 0 : index
    %c896_167 = arith.constant 896 : index
    %159 = vector.load %arg11[%c0_165, %c0_166, %c896_167] : memref<2x16x1600xbf16, #tpu.memory_space<vmem>>, vector<2x16x64xbf16>
    tpu.vector_store %arg11[%c0_165, %c0_166, %c896_167], %158 {strides = array<i32>} : memref<2x16x1600xbf16, #tpu.memory_space<vmem>>, vector<2x16x64xbf16>,
    %c0_168 = arith.constant 0 : index
    %c24 = arith.constant 24 : index
    %c0_169 = arith.constant 0 : index
    %160 = vector.load %arg10[%c0_168, %c24, %c0_169] : memref<2x56x64xf32, #tpu.memory_space<vmem>>, vector<2x16x64xf32>
    %161 = arith.truncf %160 : vector<2x16x64xf32> to vector<2x16x64xbf16>
    %c0_170 = arith.constant 0 : index
    %c0_171 = arith.constant 0 : index
    %c960 = arith.constant 960 : index
    %162 = vector.load %arg11[%c0_170, %c0_171, %c960] : memref<2x16x1600xbf16, #tpu.memory_space<vmem>>, vector<2x16x64xbf16>
    tpu.vector_store %arg11[%c0_170, %c0_171, %c960], %161 {strides = array<i32>} : memref<2x16x1600xbf16, #tpu.memory_space<vmem>>, vector<2x16x64xbf16>,
    %c0_172 = arith.constant 0 : index
    %c25 = arith.constant 25 : index
    %c0_173 = arith.constant 0 : index
    %163 = vector.load %arg10[%c0_172, %c25, %c0_173] : memref<2x56x64xf32, #tpu.memory_space<vmem>>, vector<2x16x64xf32>
    %164 = arith.truncf %163 : vector<2x16x64xf32> to vector<2x16x64xbf16>
    %c0_174 = arith.constant 0 : index
    %c0_175 = arith.constant 0 : index
    %c1024_176 = arith.constant 1024 : index
    %165 = vector.load %arg11[%c0_174, %c0_175, %c1024_176] : memref<2x16x1600xbf16, #tpu.memory_space<vmem>>, vector<2x16x64xbf16>
    tpu.vector_store %arg11[%c0_174, %c0_175, %c1024_176], %164 {strides = array<i32>} : memref<2x16x1600xbf16, #tpu.memory_space<vmem>>, vector<2x16x64xbf16>,
    %c0_177 = arith.constant 0 : index
    %c26 = arith.constant 26 : index
    %c0_178 = arith.constant 0 : index
    %166 = vector.load %arg10[%c0_177, %c26, %c0_178] : memref<2x56x64xf32, #tpu.memory_space<vmem>>, vector<2x16x64xf32>
    %167 = arith.truncf %166 : vector<2x16x64xf32> to vector<2x16x64xbf16>
    %c0_179 = arith.constant 0 : index
    %c0_180 = arith.constant 0 : index
    %c1088 = arith.constant 1088 : index
    %168 = vector.load %arg11[%c0_179, %c0_180, %c1088] : memref<2x16x1600xbf16, #tpu.memory_space<vmem>>, vector<2x16x64xbf16>
    tpu.vector_store %arg11[%c0_179, %c0_180, %c1088], %167 {strides = array<i32>} : memref<2x16x1600xbf16, #tpu.memory_space<vmem>>, vector<2x16x64xbf16>,
    %c0_181 = arith.constant 0 : index
    %c27 = arith.constant 27 : index
    %c0_182 = arith.constant 0 : index
    %169 = vector.load %arg10[%c0_181, %c27, %c0_182] : memref<2x56x64xf32, #tpu.memory_space<vmem>>, vector<2x16x64xf32>
    %170 = arith.truncf %169 : vector<2x16x64xf32> to vector<2x16x64xbf16>
    %c0_183 = arith.constant 0 : index
    %c0_184 = arith.constant 0 : index
    %c1152 = arith.constant 1152 : index
    %171 = vector.load %arg11[%c0_183, %c0_184, %c1152] : memref<2x16x1600xbf16, #tpu.memory_space<vmem>>, vector<2x16x64xbf16>
    tpu.vector_store %arg11[%c0_183, %c0_184, %c1152], %170 {strides = array<i32>} : memref<2x16x1600xbf16, #tpu.memory_space<vmem>>, vector<2x16x64xbf16>,
    %c0_185 = arith.constant 0 : index
    %c28 = arith.constant 28 : index
    %c0_186 = arith.constant 0 : index
    %172 = vector.load %arg10[%c0_185, %c28, %c0_186] : memref<2x56x64xf32, #tpu.memory_space<vmem>>, vector<2x16x64xf32>
    %173 = arith.truncf %172 : vector<2x16x64xf32> to vector<2x16x64xbf16>
    %c0_187 = arith.constant 0 : index
    %c0_188 = arith.constant 0 : index
    %c1216 = arith.constant 1216 : index
    %174 = vector.load %arg11[%c0_187, %c0_188, %c1216] : memref<2x16x1600xbf16, #tpu.memory_space<vmem>>, vector<2x16x64xbf16>
    tpu.vector_store %arg11[%c0_187, %c0_188, %c1216], %173 {strides = array<i32>} : memref<2x16x1600xbf16, #tpu.memory_space<vmem>>, vector<2x16x64xbf16>,
    %c0_189 = arith.constant 0 : index
    %c32 = arith.constant 32 : index
    %c0_190 = arith.constant 0 : index
    %175 = vector.load %arg10[%c0_189, %c32, %c0_190] : memref<2x56x64xf32, #tpu.memory_space<vmem>>, vector<2x16x64xf32>
    %176 = arith.truncf %175 : vector<2x16x64xf32> to vector<2x16x64xbf16>
    %c0_191 = arith.constant 0 : index
    %c0_192 = arith.constant 0 : index
    %c1280 = arith.constant 1280 : index
    %177 = vector.load %arg11[%c0_191, %c0_192, %c1280] : memref<2x16x1600xbf16, #tpu.memory_space<vmem>>, vector<2x16x64xbf16>
    tpu.vector_store %arg11[%c0_191, %c0_192, %c1280], %176 {strides = array<i32>} : memref<2x16x1600xbf16, #tpu.memory_space<vmem>>, vector<2x16x64xbf16>,
    %c0_193 = arith.constant 0 : index
    %c33 = arith.constant 33 : index
    %c0_194 = arith.constant 0 : index
    %178 = vector.load %arg10[%c0_193, %c33, %c0_194] : memref<2x56x64xf32, #tpu.memory_space<vmem>>, vector<2x16x64xf32>
    %179 = arith.truncf %178 : vector<2x16x64xf32> to vector<2x16x64xbf16>
    %c0_195 = arith.constant 0 : index
    %c0_196 = arith.constant 0 : index
    %c1344 = arith.constant 1344 : index
    %180 = vector.load %arg11[%c0_195, %c0_196, %c1344] : memref<2x16x1600xbf16, #tpu.memory_space<vmem>>, vector<2x16x64xbf16>
    tpu.vector_store %arg11[%c0_195, %c0_196, %c1344], %179 {strides = array<i32>} : memref<2x16x1600xbf16, #tpu.memory_space<vmem>>, vector<2x16x64xbf16>,
    %c0_197 = arith.constant 0 : index
    %c34 = arith.constant 34 : index
    %c0_198 = arith.constant 0 : index
    %181 = vector.load %arg10[%c0_197, %c34, %c0_198] : memref<2x56x64xf32, #tpu.memory_space<vmem>>, vector<2x16x64xf32>
    %182 = arith.truncf %181 : vector<2x16x64xf32> to vector<2x16x64xbf16>
    %c0_199 = arith.constant 0 : index
    %c0_200 = arith.constant 0 : index
    %c1408 = arith.constant 1408 : index
    %183 = vector.load %arg11[%c0_199, %c0_200, %c1408] : memref<2x16x1600xbf16, #tpu.memory_space<vmem>>, vector<2x16x64xbf16>
    tpu.vector_store %arg11[%c0_199, %c0_200, %c1408], %182 {strides = array<i32>} : memref<2x16x1600xbf16, #tpu.memory_space<vmem>>, vector<2x16x64xbf16>,
    %c0_201 = arith.constant 0 : index
    %c35 = arith.constant 35 : index
    %c0_202 = arith.constant 0 : index
    %184 = vector.load %arg10[%c0_201, %c35, %c0_202] : memref<2x56x64xf32, #tpu.memory_space<vmem>>, vector<2x16x64xf32>
    %185 = arith.truncf %184 : vector<2x16x64xf32> to vector<2x16x64xbf16>
    %c0_203 = arith.constant 0 : index
    %c0_204 = arith.constant 0 : index
    %c1472 = arith.constant 1472 : index
    %186 = vector.load %arg11[%c0_203, %c0_204, %c1472] : memref<2x16x1600xbf16, #tpu.memory_space<vmem>>, vector<2x16x64xbf16>
    tpu.vector_store %arg11[%c0_203, %c0_204, %c1472], %185 {strides = array<i32>} : memref<2x16x1600xbf16, #tpu.memory_space<vmem>>, vector<2x16x64xbf16>,
    %c0_205 = arith.constant 0 : index
    %c36 = arith.constant 36 : index
    %c0_206 = arith.constant 0 : index
    %187 = vector.load %arg10[%c0_205, %c36, %c0_206] : memref<2x56x64xf32, #tpu.memory_space<vmem>>, vector<2x16x64xf32>
    %188 = arith.truncf %187 : vector<2x16x64xf32> to vector<2x16x64xbf16>
    %c0_207 = arith.constant 0 : index
    %c0_208 = arith.constant 0 : index
    %c1536 = arith.constant 1536 : index
    %189 = vector.load %arg11[%c0_207, %c0_208, %c1536] : memref<2x16x1600xbf16, #tpu.memory_space<vmem>>, vector<2x16x64xbf16>
    tpu.vector_store %arg11[%c0_207, %c0_208, %c1536], %188 {strides = array<i32>} : memref<2x16x1600xbf16, #tpu.memory_space<vmem>>, vector<2x16x64xbf16>,
    %c0_209 = arith.constant 0 : index
    %c0_210 = arith.constant 0 : index
    %c0_211 = arith.constant 0 : index
    %190 = vector.load %arg11[%c0_209, %c0_210, %c0_211] : memref<2x16x1600xbf16, #tpu.memory_space<vmem>>, vector<2x16x1600xbf16>
    %191 = vector.shape_cast %190 : vector<2x16x1600xbf16> to vector<32x1600xbf16>
    %c0_212 = arith.constant 0 : index
    %c0_213 = arith.constant 0 : index
    %192 = vector.load %arg3[%c0_212, %c0_213] : memref<1600x64xbf16, #tpu.memory_space<vmem>>, vector<1600x64xbf16>
    %cst_214 = arith.constant dense<0.000000e+00> : vector<32x64xf32>
    %193 = tpu.matmul %191, %192, %cst_214 {dimension_numbers = #tpu.dot_dimension_numbers<[1], [0], [0], [1], [0, 0, 1, 1], [], []>} : vector<32x1600xbf16>, vector<1600x64xbf16>, vector<32x64xf32> -> vector<32x64xf32>
    %194 = vector.broadcast %6 : vector<1x64xf32> to vector<32x64xf32>
    %195 = arith.addf %193, %194 : vector<32x64xf32>
    %cst_215 = arith.constant 0.000000e+00 : f32
    %196 = vector.broadcast %cst_215 : f32 to vector<32x64xf32>
    %197 = arith.maximumf %195, %196 : vector<32x64xf32>
    %198 = vector.shape_cast %197 : vector<32x64xf32> to vector<2x16x64xf32>
    %c0_216 = arith.constant 0 : index
    %c0_217 = arith.constant 0 : index
    %c0_218 = arith.constant 0 : index
    %199 = vector.load %arg12[%c0_216, %c0_217, %c0_218] : memref<2x16x64xf32, #tpu.memory_space<vmem>>, vector<2x16x64xf32>
    tpu.vector_store %arg12[%c0_216, %c0_217, %c0_218], %198 {strides = array<i32>} : memref<2x16x64xf32, #tpu.memory_space<vmem>>, vector<2x16x64xf32>,
    %cst_219 = arith.constant 0.000000e+00 : bf16
    %200 = vector.broadcast %cst_219 : bf16 to vector<8x256xbf16>
    %c0_220 = arith.constant 0 : index
    %c0_221 = arith.constant 0 : index
    %201 = vector.load %arg13[%c0_220, %c0_221] : memref<8x256xbf16, #tpu.memory_space<vmem>>, vector<8x256xbf16>
    tpu.vector_store %arg13[%c0_220, %c0_221], %200 {strides = array<i32>} : memref<8x256xbf16, #tpu.memory_space<vmem>>, vector<8x256xbf16>,
    %c0_222 = arith.constant 0 : index
    %c0_223 = arith.constant 0 : index
    %c0_224 = arith.constant 0 : index
    %202 = vector.load %arg12[%c0_222, %c0_223, %c0_224] : memref<2x16x64xf32, #tpu.memory_space<vmem>>, vector<2x1x64xf32>
    %203 = vector.shape_cast %202 : vector<2x1x64xf32> to vector<2x64xf32>
    %204 = arith.truncf %203 : vector<2x64xf32> to vector<2x64xbf16>
    %c0_225 = arith.constant 0 : index
    %c0_226 = arith.constant 0 : index
    %205 = vector.load %arg13[%c0_225, %c0_226] : memref<8x256xbf16, #tpu.memory_space<vmem>>, vector<2x64xbf16>
    tpu.vector_store %arg13[%c0_225, %c0_226], %204 {strides = array<i32>} : memref<8x256xbf16, #tpu.memory_space<vmem>>, vector<2x64xbf16>,
    %c0_227 = arith.constant 0 : index
    %c1_228 = arith.constant 1 : index
    %c0_229 = arith.constant 0 : index
    %206 = vector.load %arg12[%c0_227, %c1_228, %c0_229] : memref<2x16x64xf32, #tpu.memory_space<vmem>>, vector<2x1x64xf32>
    %207 = vector.shape_cast %206 : vector<2x1x64xf32> to vector<2x64xf32>
    %208 = arith.truncf %207 : vector<2x64xf32> to vector<2x64xbf16>
    %c0_230 = arith.constant 0 : index
    %c64_231 = arith.constant 64 : index
    %209 = vector.load %arg13[%c0_230, %c64_231] : memref<8x256xbf16, #tpu.memory_space<vmem>>, vector<2x64xbf16>
    tpu.vector_store %arg13[%c0_230, %c64_231], %208 {strides = array<i32>} : memref<8x256xbf16, #tpu.memory_space<vmem>>, vector<2x64xbf16>,
    %c0_232 = arith.constant 0 : index
    %c8_233 = arith.constant 8 : index
    %c0_234 = arith.constant 0 : index
    %210 = vector.load %arg12[%c0_232, %c8_233, %c0_234] : memref<2x16x64xf32, #tpu.memory_space<vmem>>, vector<2x1x64xf32>
    %211 = vector.shape_cast %210 : vector<2x1x64xf32> to vector<2x64xf32>
    %212 = arith.truncf %211 : vector<2x64xf32> to vector<2x64xbf16>
    %c0_235 = arith.constant 0 : index
    %c128_236 = arith.constant 128 : index
    %213 = vector.load %arg13[%c0_235, %c128_236] : memref<8x256xbf16, #tpu.memory_space<vmem>>, vector<2x64xbf16>
    tpu.vector_store %arg13[%c0_235, %c128_236], %212 {strides = array<i32>} : memref<8x256xbf16, #tpu.memory_space<vmem>>, vector<2x64xbf16>,
    %c0_237 = arith.constant 0 : index
    %c9_238 = arith.constant 9 : index
    %c0_239 = arith.constant 0 : index
    %214 = vector.load %arg12[%c0_237, %c9_238, %c0_239] : memref<2x16x64xf32, #tpu.memory_space<vmem>>, vector<2x1x64xf32>
    %215 = vector.shape_cast %214 : vector<2x1x64xf32> to vector<2x64xf32>
    %216 = arith.truncf %215 : vector<2x64xf32> to vector<2x64xbf16>
    %c0_240 = arith.constant 0 : index
    %c192_241 = arith.constant 192 : index
    %217 = vector.load %arg13[%c0_240, %c192_241] : memref<8x256xbf16, #tpu.memory_space<vmem>>, vector<2x64xbf16>
    tpu.vector_store %arg13[%c0_240, %c192_241], %216 {strides = array<i32>} : memref<8x256xbf16, #tpu.memory_space<vmem>>, vector<2x64xbf16>,
    %c0_242 = arith.constant 0 : index
    %c0_243 = arith.constant 0 : index
    %218 = vector.load %arg13[%c0_242, %c0_243] : memref<8x256xbf16, #tpu.memory_space<vmem>>, vector<8x256xbf16>
    %c0_244 = arith.constant 0 : index
    %c0_245 = arith.constant 0 : index
    %219 = vector.load %arg4[%c0_244, %c0_245] : memref<256x128xbf16, #tpu.memory_space<vmem>>, vector<256x128xbf16>
    %cst_246 = arith.constant dense<0.000000e+00> : vector<8x128xf32>
    %220 = tpu.matmul %218, %219, %cst_246 {dimension_numbers = #tpu.dot_dimension_numbers<[1], [0], [0], [1], [0, 0, 1, 1], [], []>} : vector<8x256xbf16>, vector<256x128xbf16>, vector<8x128xf32> -> vector<8x128xf32>
    %221 = vector.broadcast %7 : vector<1x128xf32> to vector<8x128xf32>
    %222 = arith.addf %220, %221 : vector<8x128xf32>
    %c0_247 = arith.constant 0 : index
    %c0_248 = arith.constant 0 : index
    %223 = vector.load %arg7[%c0_247, %c0_248] : memref<8x128xf32, #tpu.memory_space<vmem>>, vector<8x128xf32>
    tpu.vector_store %arg7[%c0_247, %c0_248], %222 {strides = array<i32>} : memref<8x128xf32, #tpu.memory_space<vmem>>, vector<8x128xf32>,
    return
  }
}

</mosaic_0001>

<llo_original>
// kernel: cnn_forward.1
$region0: #{cnn_forward.1}
  #allocation0 [shape = 'u32[]', space=smem, size = 0x4, offset = 0x4, fixed_abs, tag = 'smem constant byte address 0x4 - core index']
  #allocation1 [shape = 'u32[144,128]{1,0:T(1,128)}', space=vmem, size = 0x12000, scoped, tag = 'internal scratch']
  #allocation2 [shape = 'f32[2,72,128]{2,1,0:T(8,128)}', space=vmem, size = 0x12000, scoped, tag = 'scratch operand']
  #allocation3 [shape = 'bf16[2,48,1152]{2,1,0:T(16,128)(2,1)}', space=vmem, size = 0x36000, scoped, tag = 'scratch operand']
  #allocation4 [shape = 'f32[2,56,64]{2,1,0:T(8,128)}', space=vmem, size = 0xe000, scoped, tag = 'scratch operand']
  #allocation5 [shape = 'bf16[2,16,1600]{2,1,0:T(16,128)(2,1)}', space=vmem, size = 0x1a000, scoped, tag = 'scratch operand']
  #allocation6 [shape = 'f32[2,16,64]{2,1,0:T(8,128)}', space=vmem, size = 0x4000, scoped, tag = 'scratch operand']
  #allocation7 [shape = 'bf16[8,256]{1,0:T(8,128)(2,1)}', space=vmem, size = 0x1000, scoped, tag = 'scratch operand']
  %s0 = inlined_call_operand.vmem [shape: bf16[128,432], index: 0, kind: input, shape index: {}]
  %s1 = inlined_call_operand.vmem [shape: bf16[432,128], index: 1, kind: input, shape index: {}]
  %s2 = inlined_call_operand.vmem [shape: bf16[1152,64], index: 2, kind: input, shape index: {}]
  %s3 = inlined_call_operand.vmem [shape: bf16[1600,64], index: 3, kind: input, shape index: {}]
  %s4 = inlined_call_operand.vmem [shape: bf16[256,128], index: 4, kind: input, shape index: {}]
  %s5 = inlined_call_operand.vmem [shape: f32[8,128], index: 5, kind: input, shape index: {}]
  %s6 = inlined_call_operand.vmem [shape: f32[128,128], index: 6, kind: input, shape index: {}]
  %s7 = inlined_call_operand.vmem [shape: f32[8,128], index: 7, kind: output, shape index: {}]
  %s8 = sld [smem:[#allocation0]]
  $region38: #{cnn_forward.1} parent=0
    _
  %s10 = ssub.s32 1, %s8
  %s11 = scalar_select 0, %s10, %s8
  // Predicated region
  $region2: #{cnn_forward.1} parent=0 // pred_check
    _
  $region3: #{cnn_forward.1} parent=0 // pred_check_branch
    %13 = sbr.rel (0) target = $region5
  $region4: #{cnn_forward.1} parent=0 // pred_region
    _
  $region5: #{cnn_forward.1} parent=0 // pred_fallthru
    _
  // Predicated region
  $region6: #{cnn_forward.1} parent=0 // pred_check
    _
  $region7: #{cnn_forward.1} parent=0 // pred_check_branch
    %15 = sbr.rel (0) target = $region9
  $region8: #{cnn_forward.1} parent=0 // pred_region
    _
  $region9: #{cnn_forward.1} parent=0 // pred_fallthru
    _
  // Predicated region
  $region10: #{cnn_forward.1} parent=0 // pred_check
    _
  $region11: #{cnn_forward.1} parent=0 // pred_check_branch
    %17 = sbr.rel (0) target = $region13
  $region12: #{cnn_forward.1} parent=0 // pred_region
    _
  $region13: #{cnn_forward.1} parent=0 // pred_fallthru
    _
  // Predicated region
  $region14: #{cnn_forward.1} parent=0 // pred_check
    _
  $region15: #{cnn_forward.1} parent=0 // pred_check_branch
    %19 = sbr.rel (0) target = $region17
  $region16: #{cnn_forward.1} parent=0 // pred_region
    _
  $region17: #{cnn_forward.1} parent=0 // pred_fallthru
    _
  // Predicated region
  $region18: #{cnn_forward.1} parent=0 // pred_check
    _
  $region19: #{cnn_forward.1} parent=0 // pred_check_branch
    %21 = sbr.rel (0) target = $region21
  $region20: #{cnn_forward.1} parent=0 // pred_region
    _
  $region21: #{cnn_forward.1} parent=0 // pred_fallthru
    _
  // Predicated region
  $region22: #{cnn_forward.1} parent=0 // pred_check
    _
  $region23: #{cnn_forward.1} parent=0 // pred_check_branch
    %23 = sbr.rel (0) target = $region25
  $region24: #{cnn_forward.1} parent=0 // pred_region
    _
  $region25: #{cnn_forward.1} parent=0 // pred_fallthru
    _
  // Predicated region
  $region26: #{cnn_forward.1} parent=0 // pred_check
    _
  $region27: #{cnn_forward.1} parent=0 // pred_check_branch
    %25 = sbr.rel (0) target = $region29
  $region28: #{cnn_forward.1} parent=0 // pred_region
    _
  $region29: #{cnn_forward.1} parent=0 // pred_fallthru
    _
  %v27 = vld [vmem:[%s5] sm:$0x1]
  %v28 = vld [vmem:[%s5 + $0x1] sm:$0x1]
  %v29 = vld [vmem:[%s5 + $0x2] sm:$0x1]
  %v30 = vld [vmem:[%s5 + $0x3] sm:$0x1]
  %v31 = vld [vmem:[%s5 + $0x4] sm:$0x1]
  %v32 = vld [vmem:[%s5 + $0x5] sm:$0x1]
  %v33 = vld [vmem:[%s5 + $0x6] sm:$0x1]
  %v34 = vld [vmem:[%s5 + $0x7] sm:$0x1]
  %v35 = vld [vmem:[%s0] sm:$0xff]
  %v36 = vld [vmem:[%s0 + $0x8] sm:$0xff]
  %v37 = vld [vmem:[%s0 + $0x10] sm:$0xff]
  %v38 = vld [vmem:[%s0 + $0x18] sm:$0xff]
  %v39 = vld [vmem:[%s0 + $0x20] sm:$0xff]
  %v40 = vld [vmem:[%s0 + $0x28] sm:$0xff]
  %v41 = vld [vmem:[%s0 + $0x30] sm:$0xff]
  %v42 = vld [vmem:[%s0 + $0x38] sm:$0xff]
  %v43 = vld [vmem:[%s0 + $0x40] sm:$0xff]
  %v44 = vld [vmem:[%s0 + $0x48] sm:$0xff]
  %v45 = vld [vmem:[%s0 + $0x50] sm:$0xff]
  %v46 = vld [vmem:[%s0 + $0x58] sm:$0xff]
  %v47 = vld [vmem:[%s0 + $0x60] sm:$0xff]
  %v48 = vld [vmem:[%s0 + $0x68] sm:$0xff]
  %v49 = vld [vmem:[%s0 + $0x70] sm:$0xff]
  %v50 = vld [vmem:[%s0 + $0x78] sm:$0xff]
  %v51 = vld [vmem:[%s0 + $0x80] sm:$0xff]
  %v52 = vld [vmem:[%s0 + $0x88] sm:$0xff]
  %v53 = vld [vmem:[%s0 + $0x90] sm:$0xff]
  %v54 = vld [vmem:[%s0 + $0x98] sm:$0xff]
  %v55 = vld [vmem:[%s0 + $0xa0] sm:$0xff]
  %v56 = vld [vmem:[%s0 + $0xa8] sm:$0xff]
  %v57 = vld [vmem:[%s0 + $0xb0] sm:$0xff]
  %v58 = vld [vmem:[%s0 + $0xb8] sm:$0xff]
  %v59 = vld [vmem:[%s0 + $0xc0] sm:$0xff]
  %v60 = vld [vmem:[%s0 + $0xc8] sm:$0xff]
  %v61 = vld [vmem:[%s0 + $0xd0] sm:$0xff]
  %v62 = vld [vmem:[%s0 + $0xd8] sm:$0xff]
  %v63 = vld [vmem:[%s0 + $0xe0] sm:$0xff]
  %v64 = vld [vmem:[%s0 + $0xe8] sm:$0xff]
  %v65 = vld [vmem:[%s0 + $0xf0] sm:$0xff]
  %v66 = vld [vmem:[%s0 + $0xf8] sm:$0xff]
  %v67 = vld [vmem:[%s1] sm:$0xf]
  %v68 = vld [vmem:[%s1 + $0x4] sm:$0xf]
  %v69 = vld [vmem:[%s1 + $0x8] sm:$0xf]
  %v70 = vld [vmem:[%s1 + $0xc] sm:$0xf]
  %v71 = vld [vmem:[%s1 + $0x10] sm:$0xf]
  %v72 = vld [vmem:[%s1 + $0x14] sm:$0xf]
  %v73 = vld [vmem:[%s1 + $0x18] sm:$0xf]
  %v74 = vld [vmem:[%s1 + $0x1c] sm:$0xf]
  %v75 = vld [vmem:[%s1 + $0x20] sm:$0xf]
  %v76 = vld [vmem:[%s1 + $0x24] sm:$0xf]
  %v77 = vld [vmem:[%s1 + $0x28] sm:$0xf]
  %v78 = vld [vmem:[%s1 + $0x2c] sm:$0xf]
  %v79 = vld [vmem:[%s1 + $0x30] sm:$0xf]
  %v80 = vld [vmem:[%s1 + $0x34] sm:$0xf]
  %v81 = vld [vmem:[%s1 + $0x38] sm:$0xf]
  %v82 = vld [vmem:[%s1 + $0x3c] sm:$0xf]
  %v83 = vld [vmem:[%s1 + $0x40] sm:$0xf]
  %v84 = vld [vmem:[%s1 + $0x44] sm:$0xf]
  %v85 = vld [vmem:[%s1 + $0x48] sm:$0xf]
  %v86 = vld [vmem:[%s1 + $0x4c] sm:$0xf]
  %v87 = vld [vmem:[%s1 + $0x50] sm:$0xf]
  %v88 = vld [vmem:[%s1 + $0x54] sm:$0xf]
  %v89 = vld [vmem:[%s1 + $0x58] sm:$0xf]
  %v90 = vld [vmem:[%s1 + $0x5c] sm:$0xf]
  %v91 = vld [vmem:[%s1 + $0x60] sm:$0xf]
  %v92 = vld [vmem:[%s1 + $0x64] sm:$0xf]
  %v93 = vld [vmem:[%s1 + $0x68] sm:$0xf]
  %v94 = vld [vmem:[%s1 + $0x6c] sm:$0xf]
  %v95 = vld [vmem:[%s1 + $0x70] sm:$0xf]
  %v96 = vld [vmem:[%s1 + $0x74] sm:$0xf]
  %v97 = vld [vmem:[%s1 + $0x78] sm:$0xf]
  %v98 = vld [vmem:[%s1 + $0x7c] sm:$0xf]
  %v99 = vld [vmem:[%s1 + $0x80] sm:$0xf]
  %v100 = vld [vmem:[%s1 + $0x84] sm:$0xf]
  %v101 = vld [vmem:[%s1 + $0x88] sm:$0xf]
  %v102 = vld [vmem:[%s1 + $0x8c] sm:$0xf]
  %v103 = vld [vmem:[%s1 + $0x90] sm:$0xf]
  %v104 = vld [vmem:[%s1 + $0x94] sm:$0xf]
  %v105 = vld [vmem:[%s1 + $0x98] sm:$0xf]
  %v106 = vld [vmem:[%s1 + $0x9c] sm:$0xf]
  %v107 = vld [vmem:[%s1 + $0xa0] sm:$0xf]
  %v108 = vld [vmem:[%s1 + $0xa4] sm:$0xf]
  %v109 = vld [vmem:[%s1 + $0xa8] sm:$0xf]
  %v110 = vld [vmem:[%s1 + $0xac] sm:$0xf]
  %v111 = vld [vmem:[%s1 + $0xb0] sm:$0xf]
  %v112 = vld [vmem:[%s1 + $0xb4] sm:$0xf]
  %v113 = vld [vmem:[%s1 + $0xb8] sm:$0xf]
  %v114 = vld [vmem:[%s1 + $0xbc] sm:$0xf]
  %v115 = vld [vmem:[%s1 + $0xc0] sm:$0xf]
  %v116 = vld [vmem:[%s1 + $0xc4] sm:$0xf]
  %v117 = vld [vmem:[%s1 + $0xc8] sm:$0xf]
  %v118 = vld [vmem:[%s1 + $0xcc] sm:$0xf]
  %v119 = vld [vmem:[%s1 + $0xd0] sm:$0xf]
  %v120 = vld [vmem:[%s1 + $0xd4] sm:$0xf]
  %v121 = vlaneseq
  %v122 = vshrl.u32 %v121, 7
  %v123 = vsub.s32 0, %v122
  %v124 = vrot.slane %v27, %v123
  %v157 = vunpack.c.l.b16 %v35
  %v158 = vunpack.c.h.b16 %v35
  %v159 = vunpack.c.l.b16 %v36
  %v160 = vunpack.c.h.b16 %v36
  %v161 = vunpack.c.l.b16 %v37
  %v162 = vunpack.c.h.b16 %v37
  %v163 = vunpack.c.l.b16 %v38
  %v164 = vunpack.c.h.b16 %v38
  %v165 = vunpack.c.l.b16 %v39
  %v166 = vunpack.c.h.b16 %v39
  %v167 = vunpack.c.l.b16 %v40
  %v168 = vunpack.c.h.b16 %v40
  %v169 = vunpack.c.l.b16 %v41
  %v170 = vunpack.c.h.b16 %v41
  %v171 = vunpack.c.l.b16 %v42
  %v172 = vunpack.c.h.b16 %v42
  %v173 = vunpack.c.l.b16 %v43
  %v174 = vunpack.c.h.b16 %v43
  %v175 = vunpack.c.l.b16 %v44
  %v176 = vunpack.c.h.b16 %v44
  %v177 = vunpack.c.l.b16 %v45
  %v178 = vunpack.c.h.b16 %v45
  %v179 = vunpack.c.l.b16 %v46
  %v180 = vunpack.c.h.b16 %v46
  %v181 = vunpack.c.l.b16 %v47
  %v182 = vunpack.c.h.b16 %v47
  %v183 = vunpack.c.l.b16 %v48
  %v184 = vunpack.c.h.b16 %v48
  %v185 = vunpack.c.l.b16 %v49
  %v186 = vunpack.c.h.b16 %v49
  %v187 = vunpack.c.l.b16 %v50
  %v188 = vunpack.c.h.b16 %v50
  %v189 = vunpack.c.l.b16 %v51
  %v190 = vunpack.c.h.b16 %v51
  %v191 = vunpack.c.l.b16 %v52
  %v192 = vunpack.c.h.b16 %v52
  %v193 = vunpack.c.l.b16 %v53
  %v194 = vunpack.c.h.b16 %v53
  %v195 = vunpack.c.l.b16 %v54
  %v196 = vunpack.c.h.b16 %v54
  %v197 = vunpack.c.l.b16 %v55
  %v198 = vunpack.c.h.b16 %v55
  %v199 = vunpack.c.l.b16 %v56
  %v200 = vunpack.c.h.b16 %v56
  %v201 = vunpack.c.l.b16 %v57
  %v202 = vunpack.c.h.b16 %v57
  %v203 = vunpack.c.l.b16 %v58
  %v204 = vunpack.c.h.b16 %v58
  %v205 = vunpack.c.l.b16 %v59
  %v206 = vunpack.c.h.b16 %v59
  %v207 = vunpack.c.l.b16 %v60
  %v208 = vunpack.c.h.b16 %v60
  %v209 = vunpack.c.l.b16 %v61
  %v210 = vunpack.c.h.b16 %v61
  %v211 = vunpack.c.l.b16 %v62
  %v212 = vunpack.c.h.b16 %v62
  %v213 = vunpack.c.l.b16 %v63
  %v214 = vunpack.c.h.b16 %v63
  %v215 = vunpack.c.l.b16 %v64
  %v216 = vunpack.c.h.b16 %v64
  %v217 = vunpack.c.l.b16 %v65
  %v218 = vunpack.c.h.b16 %v65
  %v219 = vunpack.c.l.b16 %v66
  %v220 = vunpack.c.h.b16 %v66
  %v221 = vpack.c.b16 %v161, %v157
  %v222 = vpack.c.b16 %v162, %v158
  %v223 = vpack.c.b16 %v163, %v159
  %v224 = vpack.c.b16 %v164, %v160
  %v225 = vpack.c.b16 %v169, %v165
  %v226 = vpack.c.b16 %v170, %v166
  %v227 = vpack.c.b16 %v171, %v167
  %v228 = vpack.c.b16 %v172, %v168
  %v229 = vpack.c.b16 %v177, %v173
  %v230 = vpack.c.b16 %v178, %v174
  %v231 = vpack.c.b16 %v179, %v175
  %v232 = vpack.c.b16 %v180, %v176
  %v233 = vpack.c.b16 %v185, %v181
  %v234 = vpack.c.b16 %v186, %v182
  %v235 = vpack.c.b16 %v187, %v183
  %v236 = vpack.c.b16 %v188, %v184
  %v237 = vpack.c.b16 %v193, %v189
  %v238 = vpack.c.b16 %v194, %v190
  %v239 = vpack.c.b16 %v195, %v191
  %v240 = vpack.c.b16 %v196, %v192
  %v241 = vpack.c.b16 %v201, %v197
  %v242 = vpack.c.b16 %v202, %v198
  %v243 = vpack.c.b16 %v203, %v199
  %v244 = vpack.c.b16 %v204, %v200
  %v245 = vpack.c.b16 %v209, %v205
  %v246 = vpack.c.b16 %v210, %v206
  %v247 = vpack.c.b16 %v211, %v207
  %v248 = vpack.c.b16 %v212, %v208
  %v249 = vpack.c.b16 %v217, %v213
  %v250 = vpack.c.b16 %v218, %v214
  %v251 = vpack.c.b16 %v219, %v215
  %v252 = vpack.c.b16 %v220, %v216
  %v331 = vunpack.c.l.b16 %v67
  %v332 = vunpack.c.l.b16 %v68
  %v333 = vunpack.c.l.b16 %v69
  %v334 = vunpack.c.l.b16 %v70
  %v335 = vunpack.c.l.b16 %v71
  %v336 = vunpack.c.l.b16 %v72
  %v337 = vunpack.c.l.b16 %v73
  %v338 = vunpack.c.l.b16 %v74
  %v339 = vunpack.c.l.b16 %v75
  %v340 = vunpack.c.l.b16 %v76
  %v341 = vunpack.c.l.b16 %v77
  %v342 = vunpack.c.l.b16 %v78
  %v343 = vunpack.c.l.b16 %v79
  %v344 = vunpack.c.l.b16 %v80
  %v345 = vunpack.c.l.b16 %v81
  %v346 = vunpack.c.l.b16 %v82
  %v347 = vunpack.c.l.b16 %v83
  %v348 = vunpack.c.l.b16 %v84
  %v349 = vunpack.c.l.b16 %v85
  %v350 = vunpack.c.l.b16 %v86
  %v351 = vunpack.c.l.b16 %v87
  %v352 = vunpack.c.l.b16 %v88
  %v353 = vunpack.c.l.b16 %v89
  %v354 = vunpack.c.l.b16 %v90
  %v355 = vunpack.c.l.b16 %v91
  %v356 = vunpack.c.l.b16 %v92
  %v357 = vunpack.c.l.b16 %v93
  %v358 = vunpack.c.l.b16 %v94
  %v359 = vunpack.c.l.b16 %v95
  %v360 = vunpack.c.l.b16 %v96
  %v361 = vunpack.c.l.b16 %v97
  %v362 = vunpack.c.l.b16 %v98
  %v363 = vunpack.c.l.b16 %v99
  %v364 = vunpack.c.l.b16 %v100
  %v365 = vunpack.c.l.b16 %v101
  %v366 = vunpack.c.l.b16 %v102
  %v367 = vunpack.c.l.b16 %v103
  %v368 = vunpack.c.l.b16 %v104
  %v369 = vunpack.c.l.b16 %v105
  %v370 = vunpack.c.l.b16 %v106
  %v371 = vunpack.c.l.b16 %v107
  %v372 = vunpack.c.l.b16 %v108
  %v373 = vunpack.c.l.b16 %v109
  %v374 = vunpack.c.l.b16 %v110
  %v375 = vunpack.c.l.b16 %v111
  %v376 = vunpack.c.l.b16 %v112
  %v377 = vunpack.c.l.b16 %v113
  %v378 = vunpack.c.l.b16 %v114
  %v379 = vunpack.c.l.b16 %v115
  %v380 = vunpack.c.l.b16 %v116
  %v381 = vunpack.c.l.b16 %v117
  %v382 = vunpack.c.l.b16 %v118
  %v383 = vunpack.c.l.b16 %v119
  %v384 = vunpack.c.l.b16 %v120
  %v385 = vpack.c.b16 %v332, %v331
  %v386 = vpack.c.b16 %v334, %v333
  %v387 = vpack.c.b16 %v336, %v335
  %v388 = vpack.c.b16 %v338, %v337
  %v389 = vpack.c.b16 %v340, %v339
  %v390 = vpack.c.b16 %v342, %v341
  %v391 = vpack.c.b16 %v344, %v343
  %v392 = vpack.c.b16 %v346, %v345
  %v393 = vpack.c.b16 %v348, %v347
  %v394 = vpack.c.b16 %v350, %v349
  %v395 = vpack.c.b16 %v352, %v351
  %v396 = vpack.c.b16 %v354, %v353
  %v397 = vpack.c.b16 %v356, %v355
  %v398 = vpack.c.b16 %v358, %v357
  %v399 = vpack.c.b16 %v360, %v359
  %v400 = vpack.c.b16 %v362, %v361
  %v401 = vpack.c.b16 %v364, %v363
  %v402 = vpack.c.b16 %v366, %v365
  %v403 = vpack.c.b16 %v368, %v367
  %v404 = vpack.c.b16 %v370, %v369
  %v405 = vpack.c.b16 %v372, %v371
  %v406 = vpack.c.b16 %v374, %v373
  %v407 = vpack.c.b16 %v376, %v375
  %v408 = vpack.c.b16 %v378, %v377
  %v409 = vpack.c.b16 %v380, %v379
  %v410 = vpack.c.b16 %v382, %v381
  %v411 = vpack.c.b16 %v384, %v383
  %vm439 = vcmask 392192
  %v441 = vsel %vm439, %v224, 0
  %v444 = vsel %vm439, %v228, 0
  %v447 = vsel %vm439, %v232, 0
  %v450 = vsel %vm439, %v236, 0
  %v453 = vsel %vm439, %v240, 0
  %v456 = vsel %vm439, %v244, 0
  %v459 = vsel %vm439, %v248, 0
  %v462 = vsel %vm439, %v252, 0
  %464 = vmatprep.subr.bf16.mxu0 0
  %465 = vmatpush1.bf16.msra.mxu0 %v385
  %466 = vmatprep.subr.bf16.mxu0 0
  %467 = vmatpush1.bf16.msra.mxu0 %v386
  %468 = vmatprep.subr.bf16.mxu0 0
  %469 = vmatpush1.bf16.msra.mxu0 %v387
  %470 = vmatprep.subr.bf16.mxu0 0
  %471 = vmatpush1.bf16.msra.mxu0 %v388
  %472 = vmatprep.subr.bf16.mxu0 0
  %473 = vmatpush1.bf16.msra.mxu0 %v389
  %474 = vmatprep.subr.bf16.mxu0 0
  %475 = vmatpush1.bf16.msra.mxu0 %v390
  %476 = vmatprep.subr.bf16.mxu0 0
  %477 = vmatpush1.bf16.msra.mxu0 %v391
  %478 = vmatprep.subr.bf16.mxu0 0
  %479 = vmatpush1.bf16.msra.mxu0 %v392
  %480 = vmatprep.subr.bf16.mxu0 0
  %481 = vmatpush1.bf16.msra.mxu0 %v393
  %482 = vmatprep.subr.bf16.mxu0 0
  %483 = vmatpush1.bf16.msra.mxu0 %v394
  %484 = vmatprep.subr.bf16.mxu0 0
  %485 = vmatpush1.bf16.msra.mxu0 %v395
  %486 = vmatprep.subr.bf16.mxu0 0
  %487 = vmatpush1.bf16.msra.mxu0 %v396
  %488 = vmatprep.subr.bf16.mxu0 0
  %489 = vmatpush1.bf16.msra.mxu0 %v397
  %490 = vmatprep.subr.bf16.mxu0 0
  %491 = vmatpush1.bf16.msra.mxu0 %v398
  %492 = vmatprep.subr.bf16.mxu0 0
  %493 = vmatpush1.bf16.msra.mxu0 %v399
  %494 = vmatprep.subr.bf16.mxu0 0
  %495 = vmatpush1.bf16.msra.mxu0 %v400
  %496 = vmatprep.mubr.bf16.mxu0 %v222
  %497 = vmatmul.mubr.bf16.gmra.mrb[0].mxu0 %v221
  %v498 = vpop.f32.mrb[0].mxu0
  %v499 = vadd.f32 %v124, %v498
  %v500 = vpop.f32.mrb[0].mxu0
  %v501 = vpop.f32.mrb[0].mxu0
  %v502 = vadd.f32 %v124, %v501
  %v503 = vpop.f32.mrb[0].mxu0
  %504 = vmatprep.mubr.bf16.mxu0 %v226
  %505 = vmatmul.mubr.bf16.gmra.mrb[0].mxu0 %v225
  %v506 = vpop.f32.mrb[0].mxu0
  %v507 = vadd.f32 %v124, %v506
  %v508 = vpop.f32.mrb[0].mxu0
  %v509 = vpop.f32.mrb[0].mxu0
  %v510 = vadd.f32 %v124, %v509
  %v511 = vpop.f32.mrb[0].mxu0
  %512 = vmatprep.mubr.bf16.mxu0 %v230
  %513 = vmatmul.mubr.bf16.gmra.mrb[0].mxu0 %v229
  %v514 = vpop.f32.mrb[0].mxu0
  %v515 = vadd.f32 %v124, %v514
  %v516 = vpop.f32.mrb[0].mxu0
  %v517 = vpop.f32.mrb[0].mxu0
  %v518 = vadd.f32 %v124, %v517
  %v519 = vpop.f32.mrb[0].mxu0
  %520 = vmatprep.mubr.bf16.mxu0 %v234
  %521 = vmatmul.mubr.bf16.gmra.mrb[0].mxu0 %v233
  %v522 = vpop.f32.mrb[0].mxu0
  %v523 = vadd.f32 %v124, %v522
  %v524 = vpop.f32.mrb[0].mxu0
  %v525 = vpop.f32.mrb[0].mxu0
  %v526 = vadd.f32 %v124, %v525
  %v527 = vpop.f32.mrb[0].mxu0
  %528 = vmatprep.mubr.bf16.mxu0 %v238
  %529 = vmatmul.mubr.bf16.gmra.mrb[0].mxu0 %v237
  %v530 = vpop.f32.mrb[0].mxu0
  %v531 = vadd.f32 %v124, %v530
  %v532 = vpop.f32.mrb[0].mxu0
  %v533 = vpop.f32.mrb[0].mxu0
  %v534 = vadd.f32 %v124, %v533
  %v535 = vpop.f32.mrb[0].mxu0
  %536 = vmatprep.mubr.bf16.mxu0 %v242
  %537 = vmatmul.mubr.bf16.gmra.mrb[0].mxu0 %v241
  %v538 = vpop.f32.mrb[0].mxu0
  %v539 = vadd.f32 %v124, %v538
  %v540 = vpop.f32.mrb[0].mxu0
  %v541 = vpop.f32.mrb[0].mxu0
  %v542 = vadd.f32 %v124, %v541
  %v543 = vpop.f32.mrb[0].mxu0
  %544 = vmatprep.mubr.bf16.mxu0 %v246
  %545 = vmatmul.mubr.bf16.gmra.mrb[0].mxu0 %v245
  %v546 = vpop.f32.mrb[0].mxu0
  %v547 = vadd.f32 %v124, %v546
  %v548 = vpop.f32.mrb[0].mxu0
  %v549 = vpop.f32.mrb[0].mxu0
  %v550 = vadd.f32 %v124, %v549
  %v551 = vpop.f32.mrb[0].mxu0
  %552 = vmatprep.mubr.bf16.mxu0 %v250
  %553 = vmatmul.mubr.bf16.gmra.mrb[0].mxu0 %v249
  %v554 = vpop.f32.mrb[0].mxu0
  %v555 = vadd.f32 %v124, %v554
  %v556 = vpop.f32.mrb[0].mxu0
  %v557 = vpop.f32.mrb[0].mxu0
  %v558 = vadd.f32 %v124, %v557
  %v559 = vpop.f32.mrb[0].mxu0
  %560 = vdwg.mxu0
  %561 = vmatprep.subr.bf16.mxu0 0
  %562 = vmatpush1.bf16.msra.mxu0 %v401
  %563 = vmatprep.subr.bf16.mxu0 0
  %564 = vmatpush1.bf16.msra.mxu0 %v402
  %565 = vmatprep.subr.bf16.mxu0 0
  %566 = vmatpush1.bf16.msra.mxu0 %v403
  %567 = vmatprep.subr.bf16.mxu0 0
  %568 = vmatpush1.bf16.msra.mxu0 %v404
  %569 = vmatprep.subr.bf16.mxu0 0
  %570 = vmatpush1.bf16.msra.mxu0 %v405
  %571 = vmatprep.subr.bf16.mxu0 0
  %572 = vmatpush1.bf16.msra.mxu0 %v406
  %573 = vmatprep.subr.bf16.mxu0 0
  %574 = vmatpush1.bf16.msra.mxu0 %v407
  %575 = vmatprep.subr.bf16.mxu0 0
  %576 = vmatpush1.bf16.msra.mxu0 %v408
  %577 = vmatprep.subr.bf16.mxu0 0
  %578 = vmatpush1.bf16.msra.mxu0 %v409
  %579 = vmatprep.subr.bf16.mxu0 0
  %580 = vmatpush1.bf16.msra.mxu0 %v410
  %581 = vmatprep.subr.bf16.mxu0 0
  %582 = vmatpush1.bf16.msra.mxu0 %v411
  %583 = vmatprep.subr.bf16.mxu0 0
  %584 = vmatpush1.bf16.msra.mxu0 0
  %585 = vmatprep.subr.bf16.mxu0 0
  %586 = vmatpush1.bf16.msra.mxu0 0
  %587 = vmatprep.subr.bf16.mxu0 0
  %588 = vmatpush1.bf16.msra.mxu0 0
  %589 = vmatprep.subr.bf16.mxu0 0
  %590 = vmatpush1.bf16.msra.mxu0 0
  %591 = vmatprep.subr.bf16.mxu0 0
  %592 = vmatpush1.bf16.msra.mxu0 0
  %593 = vmatprep.mubr.bf16.mxu0 %v441
  %594 = vmatmul.mubr.bf16.gmra.mrb[0].mxu0 %v223
  %v595 = vpop.f32.mrb[0].mxu0
  %v596 = vadd.f32 %v499, %v595
  %v597 = vpop.f32.mrb[0].mxu0
  %v598 = vpop.f32.mrb[0].mxu0
  %v599 = vadd.f32 %v502, %v598
  %v600 = vpop.f32.mrb[0].mxu0
  %601 = vmatprep.mubr.bf16.mxu0 %v444
  %602 = vmatmul.mubr.bf16.gmra.mrb[0].mxu0 %v227
  %v603 = vpop.f32.mrb[0].mxu0
  %v604 = vadd.f32 %v507, %v603
  %v605 = vpop.f32.mrb[0].mxu0
  %v606 = vpop.f32.mrb[0].mxu0
  %v607 = vadd.f32 %v510, %v606
  %v608 = vpop.f32.mrb[0].mxu0
  %609 = vmatprep.mubr.bf16.mxu0 %v447
  %610 = vmatmul.mubr.bf16.gmra.mrb[0].mxu0 %v231
  %v611 = vpop.f32.mrb[0].mxu0
  %v612 = vadd.f32 %v515, %v611
  %v613 = vpop.f32.mrb[0].mxu0
  %v614 = vpop.f32.mrb[0].mxu0
  %v615 = vadd.f32 %v518, %v614
  %v616 = vpop.f32.mrb[0].mxu0
  %617 = vmatprep.mubr.bf16.mxu0 %v450
  %618 = vmatmul.mubr.bf16.gmra.mrb[0].mxu0 %v235
  %v619 = vpop.f32.mrb[0].mxu0
  %v620 = vadd.f32 %v523, %v619
  %v621 = vpop.f32.mrb[0].mxu0
  %v622 = vpop.f32.mrb[0].mxu0
  %v623 = vadd.f32 %v526, %v622
  %v624 = vpop.f32.mrb[0].mxu0
  %625 = vmatprep.mubr.bf16.mxu0 %v453
  %626 = vmatmul.mubr.bf16.gmra.mrb[0].mxu0 %v239
  %v627 = vpop.f32.mrb[0].mxu0
  %v628 = vadd.f32 %v531, %v627
  %v629 = vpop.f32.mrb[0].mxu0
  %v630 = vpop.f32.mrb[0].mxu0
  %v631 = vadd.f32 %v534, %v630
  %v632 = vpop.f32.mrb[0].mxu0
  %633 = vmatprep.mubr.bf16.mxu0 %v456
  %634 = vmatmul.mubr.bf16.gmra.mrb[0].mxu0 %v243
  %v635 = vpop.f32.mrb[0].mxu0
  %v636 = vadd.f32 %v539, %v635
  %v637 = vpop.f32.mrb[0].mxu0
  %v638 = vpop.f32.mrb[0].mxu0
  %v639 = vadd.f32 %v542, %v638
  %v640 = vpop.f32.mrb[0].mxu0
  %641 = vmatprep.mubr.bf16.mxu0 %v459
  %642 = vmatmul.mubr.bf16.gmra.mrb[0].mxu0 %v247
  %v643 = vpop.f32.mrb[0].mxu0
  %v644 = vadd.f32 %v547, %v643
  %v645 = vpop.f32.mrb[0].mxu0
  %v646 = vpop.f32.mrb[0].mxu0
  %v647 = vadd.f32 %v550, %v646
  %v648 = vpop.f32.mrb[0].mxu0
  %649 = vmatprep.mubr.bf16.mxu0 %v462
  %650 = vmatmul.mubr.bf16.gmra.mrb[0].mxu0 %v251
  %v651 = vpop.f32.mrb[0].mxu0
  %v652 = vadd.f32 %v555, %v651
  %v653 = vpop.f32.mrb[0].mxu0
  %v654 = vpop.f32.mrb[0].mxu0
  %v655 = vadd.f32 %v558, %v654
  %v656 = vpop.f32.mrb[0].mxu0
  %657 = vdwg.mxu0
  %v658 = vmax.f32 %v596, 0.0
  %v659 = vmax.f32 %v599, 0.0
  %v660 = vmax.f32 %v604, 0.0
  %v661 = vmax.f32 %v607, 0.0
  %v662 = vmax.f32 %v612, 0.0
  %v663 = vmax.f32 %v615, 0.0
  %v664 = vmax.f32 %v620, 0.0
  %v665 = vmax.f32 %v623, 0.0
  %v666 = vmax.f32 %v628, 0.0
  %v667 = vmax.f32 %v631, 0.0
  %v668 = vmax.f32 %v636, 0.0
  %v669 = vmax.f32 %v639, 0.0
  %v670 = vmax.f32 %v644, 0.0
  %v671 = vmax.f32 %v647, 0.0
  %v672 = vmax.f32 %v652, 0.0
  %v673 = vmax.f32 %v655, 0.0
  %v674 = vadd.f32 %v658, %v659
  %v675 = vadd.f32 %v674, %v660
  %v676 = vadd.f32 %v675, %v661
  %v677 = vadd.f32 %v676, %v662
  %v678 = vadd.f32 %v677, %v663
  %v679 = vadd.f32 %v678, %v664
  %v680 = vadd.f32 %v679, %v665
  %v681 = vadd.f32 %v680, %v666
  %v682 = vadd.f32 %v681, %v667
  %v683 = vadd.f32 %v682, %v668
  %v684 = vadd.f32 %v683, %v669
  %v685 = vadd.f32 %v684, %v670
  %v686 = vadd.f32 %v685, %v671
  %v687 = vadd.f32 %v686, %v672
  %v688 = vadd.f32 %v687, %v673
  %v689 = vrot.slane %v688, 4
  %v690 = vadd.f32 %v688, %v689
  %v691 = vrot.slane %v690, 2
  %v692 = vadd.f32 %v690, %v691
  %v693 = vrot.slane %v692, 1
  %v694 = vadd.f32 %v692, %v693
  %v695 = vmul.f32 %v658, %v658
  %v696 = vmul.f32 %v659, %v659
  %v697 = vmul.f32 %v660, %v660
  %v698 = vmul.f32 %v661, %v661
  %v699 = vmul.f32 %v662, %v662
  %v700 = vmul.f32 %v663, %v663
  %v701 = vmul.f32 %v664, %v664
  %v702 = vmul.f32 %v665, %v665
  %v703 = vmul.f32 %v666, %v666
  %v704 = vmul.f32 %v667, %v667
  %v705 = vmul.f32 %v668, %v668
  %v706 = vmul.f32 %v669, %v669
  %v707 = vmul.f32 %v670, %v670
  %v708 = vmul.f32 %v671, %v671
  %v709 = vmul.f32 %v672, %v672
  %v710 = vmul.f32 %v673, %v673
  %v711 = vadd.f32 %v695, %v696
  %v712 = vadd.f32 %v711, %v697
  %v713 = vadd.f32 %v712, %v698
  %v714 = vadd.f32 %v713, %v699
  %v715 = vadd.f32 %v714, %v700
  %v716 = vadd.f32 %v715, %v701
  %v717 = vadd.f32 %v716, %v702
  %v718 = vadd.f32 %v717, %v703
  %v719 = vadd.f32 %v718, %v704
  %v720 = vadd.f32 %v719, %v705
  %v721 = vadd.f32 %v720, %v706
  %v722 = vadd.f32 %v721, %v707
  %v723 = vadd.f32 %v722, %v708
  %v724 = vadd.f32 %v723, %v709
  %v725 = vadd.f32 %v724, %v710
  %v726 = vrot.slane %v725, 4
  %v727 = vadd.f32 %v725, %v726
  %v728 = vrot.slane %v727, 2
  %v729 = vadd.f32 %v727, %v728
  %v730 = vrot.slane %v729, 1
  %v731 = vadd.f32 %v729, %v730
  %v732 = vld [vmem:[%s6] sm:$0xff]
  %v733 = vld [vmem:[%s6 + $0x8] sm:$0xff]
  %v734 = vld [vmem:[%s6 + $0x10] sm:$0xff]
  %v735 = vld [vmem:[%s6 + $0x18] sm:$0xff]
  %v736 = vld [vmem:[%s6 + $0x20] sm:$0xff]
  %v737 = vld [vmem:[%s6 + $0x28] sm:$0xff]
  %v738 = vld [vmem:[%s6 + $0x30] sm:$0xff]
  %v739 = vld [vmem:[%s6 + $0x38] sm:$0xff]
  %v740 = vld [vmem:[%s6 + $0x40] sm:$0xff]
  %v741 = vld [vmem:[%s6 + $0x48] sm:$0xff]
  %v742 = vld [vmem:[%s6 + $0x50] sm:$0xff]
  %v743 = vld [vmem:[%s6 + $0x58] sm:$0xff]
  %v744 = vld [vmem:[%s6 + $0x60] sm:$0xff]
  %v745 = vld [vmem:[%s6 + $0x68] sm:$0xff]
  %v746 = vld [vmem:[%s6 + $0x70] sm:$0xff]
  %v747 = vld [vmem:[%s6 + $0x78] sm:$0xff]
  %748 = vmatprep.subr.mxu0 0.0
  %749 = vmatpush1.msra.mxu0 %v732
  %750 = vmatprep.subr.mxu0 0.0
  %751 = vmatpush1.msra.mxu0 %v733
  %752 = vmatprep.subr.mxu0 0.0
  %753 = vmatpush1.msra.mxu0 %v734
  %754 = vmatprep.subr.mxu0 0.0
  %755 = vmatpush1.msra.mxu0 %v735
  %756 = vmatprep.subr.mxu0 0.0
  %757 = vmatpush1.msra.mxu0 %v736
  %758 = vmatprep.subr.mxu0 0.0
  %759 = vmatpush1.msra.mxu0 %v737
  %760 = vmatprep.subr.mxu0 0.0
  %761 = vmatpush1.msra.mxu0 %v738
  %762 = vmatprep.subr.mxu0 0.0
  %763 = vmatpush1.msra.mxu0 %v739
  %764 = vmatprep.subr.mxu0 0.0
  %765 = vmatpush1.msra.mxu0 %v740
  %766 = vmatprep.subr.mxu0 0.0
  %767 = vmatpush1.msra.mxu0 %v741
  %768 = vmatprep.subr.mxu0 0.0
  %769 = vmatpush1.msra.mxu0 %v742
  %770 = vmatprep.subr.mxu0 0.0
  %771 = vmatpush1.msra.mxu0 %v743
  %772 = vmatprep.subr.mxu0 0.0
  %773 = vmatpush1.msra.mxu0 %v744
  %774 = vmatprep.subr.mxu0 0.0
  %775 = vmatpush1.msra.mxu0 %v745
  %776 = vmatprep.subr.mxu0 0.0
  %777 = vmatpush1.msra.mxu0 %v746
  %778 = vmatprep.subr.mxu0 0.0
  %779 = vmatpush1.msra.mxu0 %v747
  %780 = vmatprep.subr.mxu0 0.0
  %781 = vmatpush1.msra.mxu0 0.0
  %782 = vmatprep.subr.mxu0 0.0
  %783 = vmatpush1.msra.mxu0 0.0
  %784 = vmatprep.subr.mxu0 0.0
  %785 = vmatpush1.msra.mxu0 0.0
  %786 = vmatprep.subr.mxu0 0.0
  %787 = vmatpush1.msra.mxu0 0.0
  %788 = vmatprep.subr.mxu0 0.0
  %789 = vmatpush1.msra.mxu0 0.0
  %790 = vmatprep.subr.mxu0 0.0
  %791 = vmatpush1.msra.mxu0 0.0
  %792 = vmatprep.subr.mxu0 0.0
  %793 = vmatpush1.msra.mxu0 0.0
  %794 = vmatprep.subr.mxu0 0.0
  %795 = vmatpush1.msra.mxu0 0.0
  %796 = vmatprep.subr.mxu0 0.0
  %797 = vmatpush1.msra.mxu0 0.0
  %798 = vmatprep.subr.mxu0 0.0
  %799 = vmatpush1.msra.mxu0 0.0
  %800 = vmatprep.subr.mxu0 0.0
  %801 = vmatpush1.msra.mxu0 0.0
  %802 = vmatprep.subr.mxu0 0.0
  %803 = vmatpush1.msra.mxu0 0.0
  %804 = vmatprep.subr.mxu0 0.0
  %805 = vmatpush1.msra.mxu0 0.0
  %806 = vmatprep.subr.mxu0 0.0
  %807 = vmatpush1.msra.mxu0 0.0
  %808 = vmatprep.subr.mxu0 0.0
  %809 = vmatpush1.msra.mxu0 0.0
  %810 = vmatprep.subr.mxu0 0.0
  %811 = vmatpush1.msra.mxu0 0.0
  %812 = vmatprep.mubr.f32.mxu0 0.0
  %813 = vmatmul.mubr.f32.gmra.mrb[0].mxu0 %v694
  %v814 = vpop.f32.mrb[0].mxu0
  %v815 = vadd.f32 0.0, %v814
  %v816 = vpop.f32.mrb[0].mxu0
  %817 = vdwg.mxu0
  %v818 = vrcp.pop 512.0
  %v819 = vmul.f32 %v815, %v818
  %820 = vmatprep.subr.mxu0 0.0
  %821 = vmatpush1.msra.mxu0 %v732
  %822 = vmatprep.subr.mxu0 0.0
  %823 = vmatpush1.msra.mxu0 %v733
  %824 = vmatprep.subr.mxu0 0.0
  %825 = vmatpush1.msra.mxu0 %v734
  %826 = vmatprep.subr.mxu0 0.0
  %827 = vmatpush1.msra.mxu0 %v735
  %828 = vmatprep.subr.mxu0 0.0
  %829 = vmatpush1.msra.mxu0 %v736
  %830 = vmatprep.subr.mxu0 0.0
  %831 = vmatpush1.msra.mxu0 %v737
  %832 = vmatprep.subr.mxu0 0.0
  %833 = vmatpush1.msra.mxu0 %v738
  %834 = vmatprep.subr.mxu0 0.0
  %835 = vmatpush1.msra.mxu0 %v739
  %836 = vmatprep.subr.mxu0 0.0
  %837 = vmatpush1.msra.mxu0 %v740
  %838 = vmatprep.subr.mxu0 0.0
  %839 = vmatpush1.msra.mxu0 %v741
  %840 = vmatprep.subr.mxu0 0.0
  %841 = vmatpush1.msra.mxu0 %v742
  %842 = vmatprep.subr.mxu0 0.0
  %843 = vmatpush1.msra.mxu0 %v743
  %844 = vmatprep.subr.mxu0 0.0
  %845 = vmatpush1.msra.mxu0 %v744
  %846 = vmatprep.subr.mxu0 0.0
  %847 = vmatpush1.msra.mxu0 %v745
  %848 = vmatprep.subr.mxu0 0.0
  %849 = vmatpush1.msra.mxu0 %v746
  %850 = vmatprep.subr.mxu0 0.0
  %851 = vmatpush1.msra.mxu0 %v747
  %852 = vmatprep.subr.mxu0 0.0
  %853 = vmatpush1.msra.mxu0 0.0
  %854 = vmatprep.subr.mxu0 0.0
  %855 = vmatpush1.msra.mxu0 0.0
  %856 = vmatprep.subr.mxu0 0.0
  %857 = vmatpush1.msra.mxu0 0.0
  %858 = vmatprep.subr.mxu0 0.0
  %859 = vmatpush1.msra.mxu0 0.0
  %860 = vmatprep.subr.mxu0 0.0
  %861 = vmatpush1.msra.mxu0 0.0
  %862 = vmatprep.subr.mxu0 0.0
  %863 = vmatpush1.msra.mxu0 0.0
  %864 = vmatprep.subr.mxu0 0.0
  %865 = vmatpush1.msra.mxu0 0.0
  %866 = vmatprep.subr.mxu0 0.0
  %867 = vmatpush1.msra.mxu0 0.0
  %868 = vmatprep.subr.mxu0 0.0
  %869 = vmatpush1.msra.mxu0 0.0
  %870 = vmatprep.subr.mxu0 0.0
  %871 = vmatpush1.msra.mxu0 0.0
  %872 = vmatprep.subr.mxu0 0.0
  %873 = vmatpush1.msra.mxu0 0.0
  %874 = vmatprep.subr.mxu0 0.0
  %875 = vmatpush1.msra.mxu0 0.0
  %876 = vmatprep.subr.mxu0 0.0
  %877 = vmatpush1.msra.mxu0 0.0
  %878 = vmatprep.subr.mxu0 0.0
  %879 = vmatpush1.msra.mxu0 0.0
  %880 = vmatprep.subr.mxu0 0.0
  %881 = vmatpush1.msra.mxu0 0.0
  %882 = vmatprep.subr.mxu0 0.0
  %883 = vmatpush1.msra.mxu0 0.0
  %884 = vmatprep.mubr.f32.mxu0 0.0
  %885 = vmatmul.mubr.f32.gmra.mrb[0].mxu0 %v731
  %v886 = vpop.f32.mrb[0].mxu0
  %v887 = vadd.f32 0.0, %v886
  %v888 = vpop.f32.mrb[0].mxu0
  %889 = vdwg.mxu0
  %v890 = vmul.f32 %v887, %v818
  %v891 = vmul.f32 %v819, %v819
  %v892 = vsub.f32 %v890, %v891
  %v893 = vlaneseq
  %v894 = vshrl.u32 %v893, 7
  %v895 = vsub.s32 0, %v894
  %v896 = vrot.slane %v819, %v895
  %v897 = vsub.f32 %v658, %v896
  %v898 = vsub.f32 %v659, %v896
  %v899 = vsub.f32 %v660, %v896
  %v900 = vsub.f32 %v661, %v896
  %v901 = vsub.f32 %v662, %v896
  %v902 = vsub.f32 %v663, %v896
  %v903 = vsub.f32 %v664, %v896
  %v904 = vsub.f32 %v665, %v896
  %v905 = vsub.f32 %v666, %v896
  %v906 = vsub.f32 %v667, %v896
  %v907 = vsub.f32 %v668, %v896
  %v908 = vsub.f32 %v669, %v896
  %v909 = vsub.f32 %v670, %v896
  %v910 = vsub.f32 %v671, %v896
  %v911 = vsub.f32 %v672, %v896
  %v912 = vsub.f32 %v673, %v896
  %v913 = vadd.f32 %v892, 1e-05
  %v914 = vrsqrt.pop %v913
  %v915 = vlaneseq
  %v916 = vshrl.u32 %v915, 7
  %v917 = vsub.s32 0, %v916
  %v918 = vrot.slane %v914, %v917
  %v919 = vmul.f32 %v897, %v918
  %v920 = vmul.f32 %v898, %v918
  %v921 = vmul.f32 %v899, %v918
  %v922 = vmul.f32 %v900, %v918
  %v923 = vmul.f32 %v901, %v918
  %v924 = vmul.f32 %v902, %v918
  %v925 = vmul.f32 %v903, %v918
  %v926 = vmul.f32 %v904, %v918
  %v927 = vmul.f32 %v905, %v918
  %v928 = vmul.f32 %v906, %v918
  %v929 = vmul.f32 %v907, %v918
  %v930 = vmul.f32 %v908, %v918
  %v931 = vmul.f32 %v909, %v918
  %v932 = vmul.f32 %v910, %v918
  %v933 = vmul.f32 %v911, %v918
  %v934 = vmul.f32 %v912, %v918
  %v935 = vlaneseq
  %v936 = vshrl.u32 %v935, 7
  %v937 = vsub.s32 0, %v936
  %v938 = vrot.slane %v28, %v937
  %v939 = vmul.f32 %v919, %v938
  %v940 = vmul.f32 %v920, %v938
  %v941 = vmul.f32 %v921, %v938
  %v942 = vmul.f32 %v922, %v938
  %v943 = vmul.f32 %v923, %v938
  %v944 = vmul.f32 %v924, %v938
  %v945 = vmul.f32 %v925, %v938
  %v946 = vmul.f32 %v926, %v938
  %v947 = vmul.f32 %v927, %v938
  %v948 = vmul.f32 %v928, %v938
  %v949 = vmul.f32 %v929, %v938
  %v950 = vmul.f32 %v930, %v938
  %v951 = vmul.f32 %v931, %v938
  %v952 = vmul.f32 %v932, %v938
  %v953 = vmul.f32 %v933, %v938
  %v954 = vmul.f32 %v934, %v938
  %v955 = vlaneseq
  %v956 = vshrl.u32 %v955, 7
  %v957 = vsub.s32 0, %v956
  %v958 = vrot.slane %v29, %v957
  %v959 = vadd.f32 %v939, %v958
  %v960 = vadd.f32 %v940, %v958
  %v961 = vadd.f32 %v941, %v958
  %v962 = vadd.f32 %v942, %v958
  %v963 = vadd.f32 %v943, %v958
  %v964 = vadd.f32 %v944, %v958
  %v965 = vadd.f32 %v945, %v958
  %v966 = vadd.f32 %v946, %v958
  %v967 = vadd.f32 %v947, %v958
  %v968 = vadd.f32 %v948, %v958
  %v969 = vadd.f32 %v949, %v958
  %v970 = vadd.f32 %v950, %v958
  %v971 = vadd.f32 %v951, %v958
  %v972 = vadd.f32 %v952, %v958
  %v973 = vadd.f32 %v953, %v958
  %v974 = vadd.f32 %v954, %v958
  %975 = vst [vmem:[#allocation2] sm:$0xff] %v959
  %976 = vst [vmem:[#allocation2 + $0x8] sm:$0xff] %v960
  %977 = vst [vmem:[#allocation2 + $0x10] sm:$0xff] %v961
  %978 = vst [vmem:[#allocation2 + $0x18] sm:$0xff] %v962
  %979 = vst [vmem:[#allocation2 + $0x20] sm:$0xff] %v963
  %980 = vst [vmem:[#allocation2 + $0x28] sm:$0xff] %v964
  %981 = vst [vmem:[#allocation2 + $0x30] sm:$0xff] %v965
  %982 = vst [vmem:[#allocation2 + $0x38] sm:$0xff] %v966
  %983 = vst [vmem:[#allocation2 + $0x48] sm:$0xff] %v967
  %984 = vst [vmem:[#allocation2 + $0x50] sm:$0xff] %v968
  %985 = vst [vmem:[#allocation2 + $0x58] sm:$0xff] %v969
  %986 = vst [vmem:[#allocation2 + $0x60] sm:$0xff] %v970
  %987 = vst [vmem:[#allocation2 + $0x68] sm:$0xff] %v971
  %988 = vst [vmem:[#allocation2 + $0x70] sm:$0xff] %v972
  %989 = vst [vmem:[#allocation2 + $0x78] sm:$0xff] %v973
  %990 = vst [vmem:[#allocation2 + $0x80] sm:$0xff] %v974
  %991 = vst [vmem:[#allocation2 + $0x40] sm:$0xff] 0.0
  %992 = vst [vmem:[#allocation2 + $0x88] sm:$0xff] 0.0
  %v993 = vld [vmem:[#allocation2] sm:$0xff]
  %v994 = vld [vmem:[#allocation2 + $0x8] sm:$0xff]
  %v995 = vld [vmem:[#allocation2 + $0x10] sm:$0xff]
  %v996 = vld [vmem:[#allocation2 + $0x18] sm:$0xff]
  %v997 = vld [vmem:[#allocation2 + $0x20] sm:$0xff]
  %v998 = vld [vmem:[#allocation2 + $0x28] sm:$0xff]
  %v999 = vld [vmem:[#allocation2 + $0x48] sm:$0xff]
  %v1000 = vld [vmem:[#allocation2 + $0x50] sm:$0xff]
  %v1001 = vld [vmem:[#allocation2 + $0x58] sm:$0xff]
  %v1002 = vld [vmem:[#allocation2 + $0x60] sm:$0xff]
  %v1003 = vld [vmem:[#allocation2 + $0x68] sm:$0xff]
  %v1004 = vld [vmem:[#allocation2 + $0x70] sm:$0xff]
  %v1005 = vpack.c.bf16 %v994, %v993
  %v1006 = vpack.c.bf16 %v996, %v995
  %v1007 = vpack.c.bf16 %v998, %v997
  %v1008 = vpack.c.bf16 %v1000, %v999
  %v1009 = vpack.c.bf16 %v1002, %v1001
  %v1010 = vpack.c.bf16 %v1004, %v1003
  %1011 = vst [vmem:[#allocation3] sm:$0xff] %v1005
  %1012 = vst [vmem:[#allocation3 + $0x48] sm:$0xff] %v1006
  %1013 = vst [vmem:[#allocation3 + $0x90] sm:$0xff] %v1007
  %1014 = vst [vmem:[#allocation3 + $0xd8] sm:$0xff] %v1008
  %1015 = vst [vmem:[#allocation3 + $0x120] sm:$0xff] %v1009
  %1016 = vst [vmem:[#allocation3 + $0x168] sm:$0xff] %v1010
  %v1017 = vld [vmem:[#allocation2 + $0x1] sm:$0xff]
  %v1018 = vld [vmem:[#allocation2 + $0x9] sm:$0xff]
  %v1019 = vld [vmem:[#allocation2 + $0x11] sm:$0xff]
  %v1020 = vld [vmem:[#allocation2 + $0x19] sm:$0xff]
  %v1021 = vld [vmem:[#allocation2 + $0x21] sm:$0xff]
  %v1022 = vld [vmem:[#allocation2 + $0x29] sm:$0xff]
  %v1023 = vld [vmem:[#allocation2 + $0x49] sm:$0xff]
  %v1024 = vld [vmem:[#allocation2 + $0x51] sm:$0xff]
  %v1025 = vld [vmem:[#allocation2 + $0x59] sm:$0xff]
  %v1026 = vld [vmem:[#allocation2 + $0x61] sm:$0xff]
  %v1027 = vld [vmem:[#allocation2 + $0x69] sm:$0xff]
  %v1028 = vld [vmem:[#allocation2 + $0x71] sm:$0xff]
  %v1029 = vpack.c.bf16 %v1018, %v1017
  %v1030 = vpack.c.bf16 %v1020, %v1019
  %v1031 = vpack.c.bf16 %v1022, %v1021
  %v1032 = vpack.c.bf16 %v1024, %v1023
  %v1033 = vpack.c.bf16 %v1026, %v1025
  %v1034 = vpack.c.bf16 %v1028, %v1027
  %1035 = vst [vmem:[#allocation3 + $0x8] sm:$0xff] %v1029
  %1036 = vst [vmem:[#allocation3 + $0x50] sm:$0xff] %v1030
  %1037 = vst [vmem:[#allocation3 + $0x98] sm:$0xff] %v1031
  %1038 = vst [vmem:[#allocation3 + $0xe0] sm:$0xff] %v1032
  %1039 = vst [vmem:[#allocation3 + $0x128] sm:$0xff] %v1033
  %1040 = vst [vmem:[#allocation3 + $0x170] sm:$0xff] %v1034
  %v1041 = vld [vmem:[#allocation2 + $0x2] sm:$0xff]
  %v1042 = vld [vmem:[#allocation2 + $0xa] sm:$0xff]
  %v1043 = vld [vmem:[#allocation2 + $0x12] sm:$0xff]
  %v1044 = vld [vmem:[#allocation2 + $0x1a] sm:$0xff]
  %v1045 = vld [vmem:[#allocation2 + $0x22] sm:$0xff]
  %v1046 = vld [vmem:[#allocation2 + $0x2a] sm:$0xff]
  %v1047 = vld [vmem:[#allocation2 + $0x4a] sm:$0xff]
  %v1048 = vld [vmem:[#allocation2 + $0x52] sm:$0xff]
  %v1049 = vld [vmem:[#allocation2 + $0x5a] sm:$0xff]
  %v1050 = vld [vmem:[#allocation2 + $0x62] sm:$0xff]
  %v1051 = vld [vmem:[#allocation2 + $0x6a] sm:$0xff]
  %v1052 = vld [vmem:[#allocation2 + $0x72] sm:$0xff]
  %v1053 = vpack.c.bf16 %v1042, %v1041
  %v1054 = vpack.c.bf16 %v1044, %v1043
  %v1055 = vpack.c.bf16 %v1046, %v1045
  %v1056 = vpack.c.bf16 %v1048, %v1047
  %v1057 = vpack.c.bf16 %v1050, %v1049
  %v1058 = vpack.c.bf16 %v1052, %v1051
  %1059 = vst [vmem:[#allocation3 + $0x10] sm:$0xff] %v1053
  %1060 = vst [vmem:[#allocation3 + $0x58] sm:$0xff] %v1054
  %1061 = vst [vmem:[#allocation3 + $0xa0] sm:$0xff] %v1055
  %1062 = vst [vmem:[#allocation3 + $0xe8] sm:$0xff] %v1056
  %1063 = vst [vmem:[#allocation3 + $0x130] sm:$0xff] %v1057
  %1064 = vst [vmem:[#allocation3 + $0x178] sm:$0xff] %v1058
  %v1065 = vld [vmem:[#allocation2 + $0x8] sm:$0xff]
  %v1066 = vld [vmem:[#allocation2 + $0x10] sm:$0xff]
  %v1067 = vld [vmem:[#allocation2 + $0x18] sm:$0xff]
  %v1068 = vld [vmem:[#allocation2 + $0x20] sm:$0xff]
  %v1069 = vld [vmem:[#allocation2 + $0x28] sm:$0xff]
  %v1070 = vld [vmem:[#allocation2 + $0x30] sm:$0xff]
  %v1071 = vld [vmem:[#allocation2 + $0x50] sm:$0xff]
  %v1072 = vld [vmem:[#allocation2 + $0x58] sm:$0xff]
  %v1073 = vld [vmem:[#allocation2 + $0x60] sm:$0xff]
  %v1074 = vld [vmem:[#allocation2 + $0x68] sm:$0xff]
  %v1075 = vld [vmem:[#allocation2 + $0x70] sm:$0xff]
  %v1076 = vld [vmem:[#allocation2 + $0x78] sm:$0xff]
  %v1077 = vpack.c.bf16 %v1066, %v1065
  %v1078 = vpack.c.bf16 %v1068, %v1067
  %v1079 = vpack.c.bf16 %v1070, %v1069
  %v1080 = vpack.c.bf16 %v1072, %v1071
  %v1081 = vpack.c.bf16 %v1074, %v1073
  %v1082 = vpack.c.bf16 %v1076, %v1075
  %1083 = vst [vmem:[#allocation3 + $0x18] sm:$0xff] %v1077
  %1084 = vst [vmem:[#allocation3 + $0x60] sm:$0xff] %v1078
  %1085 = vst [vmem:[#allocation3 + $0xa8] sm:$0xff] %v1079
  %1086 = vst [vmem:[#allocation3 + $0xf0] sm:$0xff] %v1080
  %1087 = vst [vmem:[#allocation3 + $0x138] sm:$0xff] %v1081
  %1088 = vst [vmem:[#allocation3 + $0x180] sm:$0xff] %v1082
  %v1089 = vld [vmem:[#allocation2 + $0x9] sm:$0xff]
  %v1090 = vld [vmem:[#allocation2 + $0x11] sm:$0xff]
  %v1091 = vld [vmem:[#allocation2 + $0x19] sm:$0xff]
  %v1092 = vld [vmem:[#allocation2 + $0x21] sm:$0xff]
  %v1093 = vld [vmem:[#allocation2 + $0x29] sm:$0xff]
  %v1094 = vld [vmem:[#allocation2 + $0x31] sm:$0xff]
  %v1095 = vld [vmem:[#allocation2 + $0x51] sm:$0xff]
  %v1096 = vld [vmem:[#allocation2 + $0x59] sm:$0xff]
  %v1097 = vld [vmem:[#allocation2 + $0x61] sm:$0xff]
  %v1098 = vld [vmem:[#allocation2 + $0x69] sm:$0xff]
  %v1099 = vld [vmem:[#allocation2 + $0x71] sm:$0xff]
  %v1100 = vld [vmem:[#allocation2 + $0x79] sm:$0xff]
  %v1101 = vpack.c.bf16 %v1090, %v1089
  %v1102 = vpack.c.bf16 %v1092, %v1091
  %v1103 = vpack.c.bf16 %v1094, %v1093
  %v1104 = vpack.c.bf16 %v1096, %v1095
  %v1105 = vpack.c.bf16 %v1098, %v1097
  %v1106 = vpack.c.bf16 %v1100, %v1099
  %1107 = vst [vmem:[#allocation3 + $0x20] sm:$0xff] %v1101
  %1108 = vst [vmem:[#allocation3 + $0x68] sm:$0xff] %v1102
  %1109 = vst [vmem:[#allocation3 + $0xb0] sm:$0xff] %v1103
  %1110 = vst [vmem:[#allocation3 + $0xf8] sm:$0xff] %v1104
  %1111 = vst [vmem:[#allocation3 + $0x140] sm:$0xff] %v1105
  %1112 = vst [vmem:[#allocation3 + $0x188] sm:$0xff] %v1106
  %v1113 = vld [vmem:[#allocation2 + $0xa] sm:$0xff]
  %v1114 = vld [vmem:[#allocation2 + $0x12] sm:$0xff]
  %v1115 = vld [vmem:[#allocation2 + $0x1a] sm:$0xff]
  %v1116 = vld [vmem:[#allocation2 + $0x22] sm:$0xff]
  %v1117 = vld [vmem:[#allocation2 + $0x2a] sm:$0xff]
  %v1118 = vld [vmem:[#allocation2 + $0x32] sm:$0xff]
  %v1119 = vld [vmem:[#allocation2 + $0x52] sm:$0xff]
  %v1120 = vld [vmem:[#allocation2 + $0x5a] sm:$0xff]
  %v1121 = vld [vmem:[#allocation2 + $0x62] sm:$0xff]
  %v1122 = vld [vmem:[#allocation2 + $0x6a] sm:$0xff]
  %v1123 = vld [vmem:[#allocation2 + $0x72] sm:$0xff]
  %v1124 = vld [vmem:[#allocation2 + $0x7a] sm:$0xff]
  %v1125 = vpack.c.bf16 %v1114, %v1113
  %v1126 = vpack.c.bf16 %v1116, %v1115
  %v1127 = vpack.c.bf16 %v1118, %v1117
  %v1128 = vpack.c.bf16 %v1120, %v1119
  %v1129 = vpack.c.bf16 %v1122, %v1121
  %v1130 = vpack.c.bf16 %v1124, %v1123
  %1131 = vst [vmem:[#allocation3 + $0x28] sm:$0xff] %v1125
  %1132 = vst [vmem:[#allocation3 + $0x70] sm:$0xff] %v1126
  %1133 = vst [vmem:[#allocation3 + $0xb8] sm:$0xff] %v1127
  %1134 = vst [vmem:[#allocation3 + $0x100] sm:$0xff] %v1128
  %1135 = vst [vmem:[#allocation3 + $0x148] sm:$0xff] %v1129
  %1136 = vst [vmem:[#allocation3 + $0x190] sm:$0xff] %v1130
  %v1137 = vld [vmem:[#allocation2 + $0x10] sm:$0xff]
  %v1138 = vld [vmem:[#allocation2 + $0x18] sm:$0xff]
  %v1139 = vld [vmem:[#allocation2 + $0x20] sm:$0xff]
  %v1140 = vld [vmem:[#allocation2 + $0x28] sm:$0xff]
  %v1141 = vld [vmem:[#allocation2 + $0x30] sm:$0xff]
  %v1142 = vld [vmem:[#allocation2 + $0x38] sm:$0xff]
  %v1143 = vld [vmem:[#allocation2 + $0x58] sm:$0xff]
  %v1144 = vld [vmem:[#allocation2 + $0x60] sm:$0xff]
  %v1145 = vld [vmem:[#allocation2 + $0x68] sm:$0xff]
  %v1146 = vld [vmem:[#allocation2 + $0x70] sm:$0xff]
  %v1147 = vld [vmem:[#allocation2 + $0x78] sm:$0xff]
  %v1148 = vld [vmem:[#allocation2 + $0x80] sm:$0xff]
  %v1149 = vpack.c.bf16 %v1138, %v1137
  %v1150 = vpack.c.bf16 %v1140, %v1139
  %v1151 = vpack.c.bf16 %v1142, %v1141
  %v1152 = vpack.c.bf16 %v1144, %v1143
  %v1153 = vpack.c.bf16 %v1146, %v1145
  %v1154 = vpack.c.bf16 %v1148, %v1147
  %1155 = vst [vmem:[#allocation3 + $0x30] sm:$0xff] %v1149
  %1156 = vst [vmem:[#allocation3 + $0x78] sm:$0xff] %v1150
  %1157 = vst [vmem:[#allocation3 + $0xc0] sm:$0xff] %v1151
  %1158 = vst [vmem:[#allocation3 + $0x108] sm:$0xff] %v1152
  %1159 = vst [vmem:[#allocation3 + $0x150] sm:$0xff] %v1153
  %1160 = vst [vmem:[#allocation3 + $0x198] sm:$0xff] %v1154
  %v1161 = vld [vmem:[#allocation2 + $0x11] sm:$0xff]
  %v1162 = vld [vmem:[#allocation2 + $0x19] sm:$0xff]
  %v1163 = vld [vmem:[#allocation2 + $0x21] sm:$0xff]
  %v1164 = vld [vmem:[#allocation2 + $0x29] sm:$0xff]
  %v1165 = vld [vmem:[#allocation2 + $0x31] sm:$0xff]
  %v1166 = vld [vmem:[#allocation2 + $0x39] sm:$0xff]
  %v1167 = vld [vmem:[#allocation2 + $0x59] sm:$0xff]
  %v1168 = vld [vmem:[#allocation2 + $0x61] sm:$0xff]
  %v1169 = vld [vmem:[#allocation2 + $0x69] sm:$0xff]
  %v1170 = vld [vmem:[#allocation2 + $0x71] sm:$0xff]
  %v1171 = vld [vmem:[#allocation2 + $0x79] sm:$0xff]
  %v1172 = vld [vmem:[#allocation2 + $0x81] sm:$0xff]
  %v1173 = vpack.c.bf16 %v1162, %v1161
  %v1174 = vpack.c.bf16 %v1164, %v1163
  %v1175 = vpack.c.bf16 %v1166, %v1165
  %v1176 = vpack.c.bf16 %v1168, %v1167
  %v1177 = vpack.c.bf16 %v1170, %v1169
  %v1178 = vpack.c.bf16 %v1172, %v1171
  %1179 = vst [vmem:[#allocation3 + $0x38] sm:$0xff] %v1173
  %1180 = vst [vmem:[#allocation3 + $0x80] sm:$0xff] %v1174
  %1181 = vst [vmem:[#allocation3 + $0xc8] sm:$0xff] %v1175
  %1182 = vst [vmem:[#allocation3 + $0x110] sm:$0xff] %v1176
  %1183 = vst [vmem:[#allocation3 + $0x158] sm:$0xff] %v1177
  %1184 = vst [vmem:[#allocation3 + $0x1a0] sm:$0xff] %v1178
  %v1185 = vld [vmem:[#allocation2 + $0x12] sm:$0xff]
  %v1186 = vld [vmem:[#allocation2 + $0x1a] sm:$0xff]
  %v1187 = vld [vmem:[#allocation2 + $0x22] sm:$0xff]
  %v1188 = vld [vmem:[#allocation2 + $0x2a] sm:$0xff]
  %v1189 = vld [vmem:[#allocation2 + $0x32] sm:$0xff]
  %v1190 = vld [vmem:[#allocation2 + $0x3a] sm:$0xff]
  %v1191 = vld [vmem:[#allocation2 + $0x5a] sm:$0xff]
  %v1192 = vld [vmem:[#allocation2 + $0x62] sm:$0xff]
  %v1193 = vld [vmem:[#allocation2 + $0x6a] sm:$0xff]
  %v1194 = vld [vmem:[#allocation2 + $0x72] sm:$0xff]
  %v1195 = vld [vmem:[#allocation2 + $0x7a] sm:$0xff]
  %v1196 = vld [vmem:[#allocation2 + $0x82] sm:$0xff]
  %v1197 = vpack.c.bf16 %v1186, %v1185
  %v1198 = vpack.c.bf16 %v1188, %v1187
  %v1199 = vpack.c.bf16 %v1190, %v1189
  %v1200 = vpack.c.bf16 %v1192, %v1191
  %v1201 = vpack.c.bf16 %v1194, %v1193
  %v1202 = vpack.c.bf16 %v1196, %v1195
  %1203 = vst [vmem:[#allocation3 + $0x40] sm:$0xff] %v1197
  %1204 = vst [vmem:[#allocation3 + $0x88] sm:$0xff] %v1198
  %1205 = vst [vmem:[#allocation3 + $0xd0] sm:$0xff] %v1199
  %1206 = vst [vmem:[#allocation3 + $0x118] sm:$0xff] %v1200
  %1207 = vst [vmem:[#allocation3 + $0x160] sm:$0xff] %v1201
  %1208 = vst [vmem:[#allocation3 + $0x1a8] sm:$0xff] %v1202
  %v1209 = vld [vmem:[#allocation3] sm:$0xff]
  %v1210 = vld [vmem:[#allocation3 + $0x8] sm:$0xff]
  %v1211 = vld [vmem:[#allocation3 + $0x10] sm:$0xff]
  %v1212 = vld [vmem:[#allocation3 + $0x18] sm:$0xff]
  %v1213 = vld [vmem:[#allocation3 + $0x20] sm:$0xff]
  %v1214 = vld [vmem:[#allocation3 + $0x28] sm:$0xff]
  %v1215 = vld [vmem:[#allocation3 + $0x30] sm:$0xff]
  %v1216 = vld [vmem:[#allocation3 + $0x38] sm:$0xff]
  %v1217 = vld [vmem:[#allocation3 + $0x40] sm:$0xff]
  %v1218 = vld [vmem:[#allocation3 + $0x48] sm:$0xff]
  %v1219 = vld [vmem:[#allocation3 + $0x50] sm:$0xff]
  %v1220 = vld [vmem:[#allocation3 + $0x58] sm:$0xff]
  %v1221 = vld [vmem:[#allocation3 + $0x60] sm:$0xff]
  %v1222 = vld [vmem:[#allocation3 + $0x68] sm:$0xff]
  %v1223 = vld [vmem:[#allocation3 + $0x70] sm:$0xff]
  %v1224 = vld [vmem:[#allocation3 + $0x78] sm:$0xff]
  %v1225 = vld [vmem:[#allocation3 + $0x80] sm:$0xff]
  %v1226 = vld [vmem:[#allocation3 + $0x88] sm:$0xff]
  %v1227 = vld [vmem:[#allocation3 + $0x90] sm:$0xff]
  %v1228 = vld [vmem:[#allocation3 + $0x98] sm:$0xff]
  %v1229 = vld [vmem:[#allocation3 + $0xa0] sm:$0xff]
  %v1230 = vld [vmem:[#allocation3 + $0xa8] sm:$0xff]
  %v1231 = vld [vmem:[#allocation3 + $0xb0] sm:$0xff]
  %v1232 = vld [vmem:[#allocation3 + $0xb8] sm:$0xff]
  %v1233 = vld [vmem:[#allocation3 + $0xc0] sm:$0xff]
  %v1234 = vld [vmem:[#allocation3 + $0xc8] sm:$0xff]
  %v1235 = vld [vmem:[#allocation3 + $0xd0] sm:$0xff]
  %v1236 = vld [vmem:[#allocation3 + $0xd8] sm:$0xff]
  %v1237 = vld [vmem:[#allocation3 + $0xe0] sm:$0xff]
  %v1238 = vld [vmem:[#allocation3 + $0xe8] sm:$0xff]
  %v1239 = vld [vmem:[#allocation3 + $0xf0] sm:$0xff]
  %v1240 = vld [vmem:[#allocation3 + $0xf8] sm:$0xff]
  %v1241 = vld [vmem:[#allocation3 + $0x100] sm:$0xff]
  %v1242 = vld [vmem:[#allocation3 + $0x108] sm:$0xff]
  %v1243 = vld [vmem:[#allocation3 + $0x110] sm:$0xff]
  %v1244 = vld [vmem:[#allocation3 + $0x118] sm:$0xff]
  %v1245 = vld [vmem:[#allocation3 + $0x120] sm:$0xff]
  %v1246 = vld [vmem:[#allocation3 + $0x128] sm:$0xff]
  %v1247 = vld [vmem:[#allocation3 + $0x130] sm:$0xff]
  %v1248 = vld [vmem:[#allocation3 + $0x138] sm:$0xff]
  %v1249 = vld [vmem:[#allocation3 + $0x140] sm:$0xff]
  %v1250 = vld [vmem:[#allocation3 + $0x148] sm:$0xff]
  %v1251 = vld [vmem:[#allocation3 + $0x150] sm:$0xff]
  %v1252 = vld [vmem:[#allocation3 + $0x158] sm:$0xff]
  %v1253 = vld [vmem:[#allocation3 + $0x160] sm:$0xff]
  %v1254 = vld [vmem:[#allocation3 + $0x168] sm:$0xff]
  %v1255 = vld [vmem:[#allocation3 + $0x170] sm:$0xff]
  %v1256 = vld [vmem:[#allocation3 + $0x178] sm:$0xff]
  %v1257 = vld [vmem:[#allocation3 + $0x180] sm:$0xff]
  %v1258 = vld [vmem:[#allocation3 + $0x188] sm:$0xff]
  %v1259 = vld [vmem:[#allocation3 + $0x190] sm:$0xff]
  %v1260 = vld [vmem:[#allocation3 + $0x198] sm:$0xff]
  %v1261 = vld [vmem:[#allocation3 + $0x1a0] sm:$0xff]
  %v1262 = vld [vmem:[#allocation3 + $0x1a8] sm:$0xff]
  %v1263 = vld [vmem:[%s2] sm:$0xf]
  %v1264 = vld [vmem:[%s2 + $0x4] sm:$0xf]
  %v1265 = vld [vmem:[%s2 + $0x8] sm:$0xf]
  %v1266 = vld [vmem:[%s2 + $0xc] sm:$0xf]
  %v1267 = vld [vmem:[%s2 + $0x10] sm:$0xf]
  %v1268 = vld [vmem:[%s2 + $0x14] sm:$0xf]
  %v1269 = vld [vmem:[%s2 + $0x18] sm:$0xf]
  %v1270 = vld [vmem:[%s2 + $0x1c] sm:$0xf]
  %v1271 = vld [vmem:[%s2 + $0x20] sm:$0xf]
  %v1272 = vld [vmem:[%s2 + $0x24] sm:$0xf]
  %v1273 = vld [vmem:[%s2 + $0x28] sm:$0xf]
  %v1274 = vld [vmem:[%s2 + $0x2c] sm:$0xf]
  %v1275 = vld [vmem:[%s2 + $0x30] sm:$0xf]
  %v1276 = vld [vmem:[%s2 + $0x34] sm:$0xf]
  %v1277 = vld [vmem:[%s2 + $0x38] sm:$0xf]
  %v1278 = vld [vmem:[%s2 + $0x3c] sm:$0xf]
  %v1279 = vld [vmem:[%s2 + $0x40] sm:$0xf]
  %v1280 = vld [vmem:[%s2 + $0x44] sm:$0xf]
  %v1281 = vld [vmem:[%s2 + $0x48] sm:$0xf]
  %v1282 = vld [vmem:[%s2 + $0x4c] sm:$0xf]
  %v1283 = vld [vmem:[%s2 + $0x50] sm:$0xf]
  %v1284 = vld [vmem:[%s2 + $0x54] sm:$0xf]
  %v1285 = vld [vmem:[%s2 + $0x58] sm:$0xf]
  %v1286 = vld [vmem:[%s2 + $0x5c] sm:$0xf]
  %v1287 = vld [vmem:[%s2 + $0x60] sm:$0xf]
  %v1288 = vld [vmem:[%s2 + $0x64] sm:$0xf]
  %v1289 = vld [vmem:[%s2 + $0x68] sm:$0xf]
  %v1290 = vld [vmem:[%s2 + $0x6c] sm:$0xf]
  %v1291 = vld [vmem:[%s2 + $0x70] sm:$0xf]
  %v1292 = vld [vmem:[%s2 + $0x74] sm:$0xf]
  %v1293 = vld [vmem:[%s2 + $0x78] sm:$0xf]
  %v1294 = vld [vmem:[%s2 + $0x7c] sm:$0xf]
  %v1295 = vld [vmem:[%s2 + $0x80] sm:$0xf]
  %v1296 = vld [vmem:[%s2 + $0x84] sm:$0xf]
  %v1297 = vld [vmem:[%s2 + $0x88] sm:$0xf]
  %v1298 = vld [vmem:[%s2 + $0x8c] sm:$0xf]
  %v1299 = vld [vmem:[%s2 + $0x90] sm:$0xf]
  %v1300 = vld [vmem:[%s2 + $0x94] sm:$0xf]
  %v1301 = vld [vmem:[%s2 + $0x98] sm:$0xf]
  %v1302 = vld [vmem:[%s2 + $0x9c] sm:$0xf]
  %v1303 = vld [vmem:[%s2 + $0xa0] sm:$0xf]
  %v1304 = vld [vmem:[%s2 + $0xa4] sm:$0xf]
  %v1305 = vld [vmem:[%s2 + $0xa8] sm:$0xf]
  %v1306 = vld [vmem:[%s2 + $0xac] sm:$0xf]
  %v1307 = vld [vmem:[%s2 + $0xb0] sm:$0xf]
  %v1308 = vld [vmem:[%s2 + $0xb4] sm:$0xf]
  %v1309 = vld [vmem:[%s2 + $0xb8] sm:$0xf]
  %v1310 = vld [vmem:[%s2 + $0xbc] sm:$0xf]
  %v1311 = vld [vmem:[%s2 + $0xc0] sm:$0xf]
  %v1312 = vld [vmem:[%s2 + $0xc4] sm:$0xf]
  %v1313 = vld [vmem:[%s2 + $0xc8] sm:$0xf]
  %v1314 = vld [vmem:[%s2 + $0xcc] sm:$0xf]
  %v1315 = vld [vmem:[%s2 + $0xd0] sm:$0xf]
  %v1316 = vld [vmem:[%s2 + $0xd4] sm:$0xf]
  %v1317 = vld [vmem:[%s2 + $0xd8] sm:$0xf]
  %v1318 = vld [vmem:[%s2 + $0xdc] sm:$0xf]
  %v1319 = vld [vmem:[%s2 + $0xe0] sm:$0xf]
  %v1320 = vld [vmem:[%s2 + $0xe4] sm:$0xf]
  %v1321 = vld [vmem:[%s2 + $0xe8] sm:$0xf]
  %v1322 = vld [vmem:[%s2 + $0xec] sm:$0xf]
  %v1323 = vld [vmem:[%s2 + $0xf0] sm:$0xf]
  %v1324 = vld [vmem:[%s2 + $0xf4] sm:$0xf]
  %v1325 = vld [vmem:[%s2 + $0xf8] sm:$0xf]
  %v1326 = vld [vmem:[%s2 + $0xfc] sm:$0xf]
  %v1327 = vld [vmem:[%s2 + $0x100] sm:$0xf]
  %v1328 = vld [vmem:[%s2 + $0x104] sm:$0xf]
  %v1329 = vld [vmem:[%s2 + $0x108] sm:$0xf]
  %v1330 = vld [vmem:[%s2 + $0x10c] sm:$0xf]
  %v1331 = vld [vmem:[%s2 + $0x110] sm:$0xf]
  %v1332 = vld [vmem:[%s2 + $0x114] sm:$0xf]
  %v1333 = vld [vmem:[%s2 + $0x118] sm:$0xf]
  %v1334 = vld [vmem:[%s2 + $0x11c] sm:$0xf]
  %v1335 = vld [vmem:[%s2 + $0x120] sm:$0xf]
  %v1336 = vld [vmem:[%s2 + $0x124] sm:$0xf]
  %v1337 = vld [vmem:[%s2 + $0x128] sm:$0xf]
  %v1338 = vld [vmem:[%s2 + $0x12c] sm:$0xf]
  %v1339 = vld [vmem:[%s2 + $0x130] sm:$0xf]
  %v1340 = vld [vmem:[%s2 + $0x134] sm:$0xf]
  %v1341 = vld [vmem:[%s2 + $0x138] sm:$0xf]
  %v1342 = vld [vmem:[%s2 + $0x13c] sm:$0xf]
  %v1343 = vld [vmem:[%s2 + $0x140] sm:$0xf]
  %v1344 = vld [vmem:[%s2 + $0x144] sm:$0xf]
  %v1345 = vld [vmem:[%s2 + $0x148] sm:$0xf]
  %v1346 = vld [vmem:[%s2 + $0x14c] sm:$0xf]
  %v1347 = vld [vmem:[%s2 + $0x150] sm:$0xf]
  %v1348 = vld [vmem:[%s2 + $0x154] sm:$0xf]
  %v1349 = vld [vmem:[%s2 + $0x158] sm:$0xf]
  %v1350 = vld [vmem:[%s2 + $0x15c] sm:$0xf]
  %v1351 = vld [vmem:[%s2 + $0x160] sm:$0xf]
  %v1352 = vld [vmem:[%s2 + $0x164] sm:$0xf]
  %v1353 = vld [vmem:[%s2 + $0x168] sm:$0xf]
  %v1354 = vld [vmem:[%s2 + $0x16c] sm:$0xf]
  %v1355 = vld [vmem:[%s2 + $0x170] sm:$0xf]
  %v1356 = vld [vmem:[%s2 + $0x174] sm:$0xf]
  %v1357 = vld [vmem:[%s2 + $0x178] sm:$0xf]
  %v1358 = vld [vmem:[%s2 + $0x17c] sm:$0xf]
  %v1359 = vld [vmem:[%s2 + $0x180] sm:$0xf]
  %v1360 = vld [vmem:[%s2 + $0x184] sm:$0xf]
  %v1361 = vld [vmem:[%s2 + $0x188] sm:$0xf]
  %v1362 = vld [vmem:[%s2 + $0x18c] sm:$0xf]
  %v1363 = vld [vmem:[%s2 + $0x190] sm:$0xf]
  %v1364 = vld [vmem:[%s2 + $0x194] sm:$0xf]
  %v1365 = vld [vmem:[%s2 + $0x198] sm:$0xf]
  %v1366 = vld [vmem:[%s2 + $0x19c] sm:$0xf]
  %v1367 = vld [vmem:[%s2 + $0x1a0] sm:$0xf]
  %v1368 = vld [vmem:[%s2 + $0x1a4] sm:$0xf]
  %v1369 = vld [vmem:[%s2 + $0x1a8] sm:$0xf]
  %v1370 = vld [vmem:[%s2 + $0x1ac] sm:$0xf]
  %v1371 = vld [vmem:[%s2 + $0x1b0] sm:$0xf]
  %v1372 = vld [vmem:[%s2 + $0x1b4] sm:$0xf]
  %v1373 = vld [vmem:[%s2 + $0x1b8] sm:$0xf]
  %v1374 = vld [vmem:[%s2 + $0x1bc] sm:$0xf]
  %v1375 = vld [vmem:[%s2 + $0x1c0] sm:$0xf]
  %v1376 = vld [vmem:[%s2 + $0x1c4] sm:$0xf]
  %v1377 = vld [vmem:[%s2 + $0x1c8] sm:$0xf]
  %v1378 = vld [vmem:[%s2 + $0x1cc] sm:$0xf]
  %v1379 = vld [vmem:[%s2 + $0x1d0] sm:$0xf]
  %v1380 = vld [vmem:[%s2 + $0x1d4] sm:$0xf]
  %v1381 = vld [vmem:[%s2 + $0x1d8] sm:$0xf]
  %v1382 = vld [vmem:[%s2 + $0x1dc] sm:$0xf]
  %v1383 = vld [vmem:[%s2 + $0x1e0] sm:$0xf]
  %v1384 = vld [vmem:[%s2 + $0x1e4] sm:$0xf]
  %v1385 = vld [vmem:[%s2 + $0x1e8] sm:$0xf]
  %v1386 = vld [vmem:[%s2 + $0x1ec] sm:$0xf]
  %v1387 = vld [vmem:[%s2 + $0x1f0] sm:$0xf]
  %v1388 = vld [vmem:[%s2 + $0x1f4] sm:$0xf]
  %v1389 = vld [vmem:[%s2 + $0x1f8] sm:$0xf]
  %v1390 = vld [vmem:[%s2 + $0x1fc] sm:$0xf]
  %v1391 = vld [vmem:[%s2 + $0x200] sm:$0xf]
  %v1392 = vld [vmem:[%s2 + $0x204] sm:$0xf]
  %v1393 = vld [vmem:[%s2 + $0x208] sm:$0xf]
  %v1394 = vld [vmem:[%s2 + $0x20c] sm:$0xf]
  %v1395 = vld [vmem:[%s2 + $0x210] sm:$0xf]
  %v1396 = vld [vmem:[%s2 + $0x214] sm:$0xf]
  %v1397 = vld [vmem:[%s2 + $0x218] sm:$0xf]
  %v1398 = vld [vmem:[%s2 + $0x21c] sm:$0xf]
  %v1399 = vld [vmem:[%s2 + $0x220] sm:$0xf]
  %v1400 = vld [vmem:[%s2 + $0x224] sm:$0xf]
  %v1401 = vld [vmem:[%s2 + $0x228] sm:$0xf]
  %v1402 = vld [vmem:[%s2 + $0x22c] sm:$0xf]
  %v1403 = vld [vmem:[%s2 + $0x230] sm:$0xf]
  %v1404 = vld [vmem:[%s2 + $0x234] sm:$0xf]
  %v1405 = vld [vmem:[%s2 + $0x238] sm:$0xf]
  %v1406 = vld [vmem:[%s2 + $0x23c] sm:$0xf]
  %v1407 = vlaneseq
  %v1408 = vshrl.u32 %v1407, 7
  %v1409 = vsub.s32 0, %v1408
  %v1410 = vrot.slane %v30, %v1409
  %v1555 = vunpack.c.l.b16 %v1263
  %v1556 = vunpack.c.l.b16 %v1264
  %v1557 = vunpack.c.l.b16 %v1265
  %v1558 = vunpack.c.l.b16 %v1266
  %v1559 = vunpack.c.l.b16 %v1267
  %v1560 = vunpack.c.l.b16 %v1268
  %v1561 = vunpack.c.l.b16 %v1269
  %v1562 = vunpack.c.l.b16 %v1270
  %v1563 = vunpack.c.l.b16 %v1271
  %v1564 = vunpack.c.l.b16 %v1272
  %v1565 = vunpack.c.l.b16 %v1273
  %v1566 = vunpack.c.l.b16 %v1274
  %v1567 = vunpack.c.l.b16 %v1275
  %v1568 = vunpack.c.l.b16 %v1276
  %v1569 = vunpack.c.l.b16 %v1277
  %v1570 = vunpack.c.l.b16 %v1278
  %v1571 = vunpack.c.l.b16 %v1279
  %v1572 = vunpack.c.l.b16 %v1280
  %v1573 = vunpack.c.l.b16 %v1281
  %v1574 = vunpack.c.l.b16 %v1282
  %v1575 = vunpack.c.l.b16 %v1283
  %v1576 = vunpack.c.l.b16 %v1284
  %v1577 = vunpack.c.l.b16 %v1285
  %v1578 = vunpack.c.l.b16 %v1286
  %v1579 = vunpack.c.l.b16 %v1287
  %v1580 = vunpack.c.l.b16 %v1288
  %v1581 = vunpack.c.l.b16 %v1289
  %v1582 = vunpack.c.l.b16 %v1290
  %v1583 = vunpack.c.l.b16 %v1291
  %v1584 = vunpack.c.l.b16 %v1292
  %v1585 = vunpack.c.l.b16 %v1293
  %v1586 = vunpack.c.l.b16 %v1294
  %v1587 = vunpack.c.l.b16 %v1295
  %v1588 = vunpack.c.l.b16 %v1296
  %v1589 = vunpack.c.l.b16 %v1297
  %v1590 = vunpack.c.l.b16 %v1298
  %v1591 = vunpack.c.l.b16 %v1299
  %v1592 = vunpack.c.l.b16 %v1300
  %v1593 = vunpack.c.l.b16 %v1301
  %v1594 = vunpack.c.l.b16 %v1302
  %v1595 = vunpack.c.l.b16 %v1303
  %v1596 = vunpack.c.l.b16 %v1304
  %v1597 = vunpack.c.l.b16 %v1305
  %v1598 = vunpack.c.l.b16 %v1306
  %v1599 = vunpack.c.l.b16 %v1307
  %v1600 = vunpack.c.l.b16 %v1308
  %v1601 = vunpack.c.l.b16 %v1309
  %v1602 = vunpack.c.l.b16 %v1310
  %v1603 = vunpack.c.l.b16 %v1311
  %v1604 = vunpack.c.l.b16 %v1312
  %v1605 = vunpack.c.l.b16 %v1313
  %v1606 = vunpack.c.l.b16 %v1314
  %v1607 = vunpack.c.l.b16 %v1315
  %v1608 = vunpack.c.l.b16 %v1316
  %v1609 = vunpack.c.l.b16 %v1317
  %v1610 = vunpack.c.l.b16 %v1318
  %v1611 = vunpack.c.l.b16 %v1319
  %v1612 = vunpack.c.l.b16 %v1320
  %v1613 = vunpack.c.l.b16 %v1321
  %v1614 = vunpack.c.l.b16 %v1322
  %v1615 = vunpack.c.l.b16 %v1323
  %v1616 = vunpack.c.l.b16 %v1324
  %v1617 = vunpack.c.l.b16 %v1325
  %v1618 = vunpack.c.l.b16 %v1326
  %v1619 = vunpack.c.l.b16 %v1327
  %v1620 = vunpack.c.l.b16 %v1328
  %v1621 = vunpack.c.l.b16 %v1329
  %v1622 = vunpack.c.l.b16 %v1330
  %v1623 = vunpack.c.l.b16 %v1331
  %v1624 = vunpack.c.l.b16 %v1332
  %v1625 = vunpack.c.l.b16 %v1333
  %v1626 = vunpack.c.l.b16 %v1334
  %v1627 = vunpack.c.l.b16 %v1335
  %v1628 = vunpack.c.l.b16 %v1336
  %v1629 = vunpack.c.l.b16 %v1337
  %v1630 = vunpack.c.l.b16 %v1338
  %v1631 = vunpack.c.l.b16 %v1339
  %v1632 = vunpack.c.l.b16 %v1340
  %v1633 = vunpack.c.l.b16 %v1341
  %v1634 = vunpack.c.l.b16 %v1342
  %v1635 = vunpack.c.l.b16 %v1343
  %v1636 = vunpack.c.l.b16 %v1344
  %v1637 = vunpack.c.l.b16 %v1345
  %v1638 = vunpack.c.l.b16 %v1346
  %v1639 = vunpack.c.l.b16 %v1347
  %v1640 = vunpack.c.l.b16 %v1348
  %v1641 = vunpack.c.l.b16 %v1349
  %v1642 = vunpack.c.l.b16 %v1350
  %v1643 = vunpack.c.l.b16 %v1351
  %v1644 = vunpack.c.l.b16 %v1352
  %v1645 = vunpack.c.l.b16 %v1353
  %v1646 = vunpack.c.l.b16 %v1354
  %v1647 = vunpack.c.l.b16 %v1355
  %v1648 = vunpack.c.l.b16 %v1356
  %v1649 = vunpack.c.l.b16 %v1357
  %v1650 = vunpack.c.l.b16 %v1358
  %v1651 = vunpack.c.l.b16 %v1359
  %v1652 = vunpack.c.l.b16 %v1360
  %v1653 = vunpack.c.l.b16 %v1361
  %v1654 = vunpack.c.l.b16 %v1362
  %v1655 = vunpack.c.l.b16 %v1363
  %v1656 = vunpack.c.l.b16 %v1364
  %v1657 = vunpack.c.l.b16 %v1365
  %v1658 = vunpack.c.l.b16 %v1366
  %v1659 = vunpack.c.l.b16 %v1367
  %v1660 = vunpack.c.l.b16 %v1368
  %v1661 = vunpack.c.l.b16 %v1369
  %v1662 = vunpack.c.l.b16 %v1370
  %v1663 = vunpack.c.l.b16 %v1371
  %v1664 = vunpack.c.l.b16 %v1372
  %v1665 = vunpack.c.l.b16 %v1373
  %v1666 = vunpack.c.l.b16 %v1374
  %v1667 = vunpack.c.l.b16 %v1375
  %v1668 = vunpack.c.l.b16 %v1376
  %v1669 = vunpack.c.l.b16 %v1377
  %v1670 = vunpack.c.l.b16 %v1378
  %v1671 = vunpack.c.l.b16 %v1379
  %v1672 = vunpack.c.l.b16 %v1380
  %v1673 = vunpack.c.l.b16 %v1381
  %v1674 = vunpack.c.l.b16 %v1382
  %v1675 = vunpack.c.l.b16 %v1383
  %v1676 = vunpack.c.l.b16 %v1384
  %v1677 = vunpack.c.l.b16 %v1385
  %v1678 = vunpack.c.l.b16 %v1386
  %v1679 = vunpack.c.l.b16 %v1387
  %v1680 = vunpack.c.l.b16 %v1388
  %v1681 = vunpack.c.l.b16 %v1389
  %v1682 = vunpack.c.l.b16 %v1390
  %v1683 = vunpack.c.l.b16 %v1391
  %v1684 = vunpack.c.l.b16 %v1392
  %v1685 = vunpack.c.l.b16 %v1393
  %v1686 = vunpack.c.l.b16 %v1394
  %v1687 = vunpack.c.l.b16 %v1395
  %v1688 = vunpack.c.l.b16 %v1396
  %v1689 = vunpack.c.l.b16 %v1397
  %v1690 = vunpack.c.l.b16 %v1398
  %v1691 = vunpack.c.l.b16 %v1399
  %v1692 = vunpack.c.l.b16 %v1400
  %v1693 = vunpack.c.l.b16 %v1401
  %v1694 = vunpack.c.l.b16 %v1402
  %v1695 = vunpack.c.l.b16 %v1403
  %v1696 = vunpack.c.l.b16 %v1404
  %v1697 = vunpack.c.l.b16 %v1405
  %v1698 = vunpack.c.l.b16 %v1406
  %v1699 = vpack.c.b16 %v1556, %v1555
  %v1700 = vpack.c.b16 %v1558, %v1557
  %v1701 = vpack.c.b16 %v1560, %v1559
  %v1702 = vpack.c.b16 %v1562, %v1561
  %v1703 = vpack.c.b16 %v1564, %v1563
  %v1704 = vpack.c.b16 %v1566, %v1565
  %v1705 = vpack.c.b16 %v1568, %v1567
  %v1706 = vpack.c.b16 %v1570, %v1569
  %v1707 = vpack.c.b16 %v1572, %v1571
  %v1708 = vpack.c.b16 %v1574, %v1573
  %v1709 = vpack.c.b16 %v1576, %v1575
  %v1710 = vpack.c.b16 %v1578, %v1577
  %v1711 = vpack.c.b16 %v1580, %v1579
  %v1712 = vpack.c.b16 %v1582, %v1581
  %v1713 = vpack.c.b16 %v1584, %v1583
  %v1714 = vpack.c.b16 %v1586, %v1585
  %v1715 = vpack.c.b16 %v1588, %v1587
  %v1716 = vpack.c.b16 %v1590, %v1589
  %v1717 = vpack.c.b16 %v1592, %v1591
  %v1718 = vpack.c.b16 %v1594, %v1593
  %v1719 = vpack.c.b16 %v1596, %v1595
  %v1720 = vpack.c.b16 %v1598, %v1597
  %v1721 = vpack.c.b16 %v1600, %v1599
  %v1722 = vpack.c.b16 %v1602, %v1601
  %v1723 = vpack.c.b16 %v1604, %v1603
  %v1724 = vpack.c.b16 %v1606, %v1605
  %v1725 = vpack.c.b16 %v1608, %v1607
  %v1726 = vpack.c.b16 %v1610, %v1609
  %v1727 = vpack.c.b16 %v1612, %v1611
  %v1728 = vpack.c.b16 %v1614, %v1613
  %v1729 = vpack.c.b16 %v1616, %v1615
  %v1730 = vpack.c.b16 %v1618, %v1617
  %v1731 = vpack.c.b16 %v1620, %v1619
  %v1732 = vpack.c.b16 %v1622, %v1621
  %v1733 = vpack.c.b16 %v1624, %v1623
  %v1734 = vpack.c.b16 %v1626, %v1625
  %v1735 = vpack.c.b16 %v1628, %v1627
  %v1736 = vpack.c.b16 %v1630, %v1629
  %v1737 = vpack.c.b16 %v1632, %v1631
  %v1738 = vpack.c.b16 %v1634, %v1633
  %v1739 = vpack.c.b16 %v1636, %v1635
  %v1740 = vpack.c.b16 %v1638, %v1637
  %v1741 = vpack.c.b16 %v1640, %v1639
  %v1742 = vpack.c.b16 %v1642, %v1641
  %v1743 = vpack.c.b16 %v1644, %v1643
  %v1744 = vpack.c.b16 %v1646, %v1645
  %v1745 = vpack.c.b16 %v1648, %v1647
  %v1746 = vpack.c.b16 %v1650, %v1649
  %v1747 = vpack.c.b16 %v1652, %v1651
  %v1748 = vpack.c.b16 %v1654, %v1653
  %v1749 = vpack.c.b16 %v1656, %v1655
  %v1750 = vpack.c.b16 %v1658, %v1657
  %v1751 = vpack.c.b16 %v1660, %v1659
  %v1752 = vpack.c.b16 %v1662, %v1661
  %v1753 = vpack.c.b16 %v1664, %v1663
  %v1754 = vpack.c.b16 %v1666, %v1665
  %v1755 = vpack.c.b16 %v1668, %v1667
  %v1756 = vpack.c.b16 %v1670, %v1669
  %v1757 = vpack.c.b16 %v1672, %v1671
  %v1758 = vpack.c.b16 %v1674, %v1673
  %v1759 = vpack.c.b16 %v1676, %v1675
  %v1760 = vpack.c.b16 %v1678, %v1677
  %v1761 = vpack.c.b16 %v1680, %v1679
  %v1762 = vpack.c.b16 %v1682, %v1681
  %v1763 = vpack.c.b16 %v1684, %v1683
  %v1764 = vpack.c.b16 %v1686, %v1685
  %v1765 = vpack.c.b16 %v1688, %v1687
  %v1766 = vpack.c.b16 %v1690, %v1689
  %v1767 = vpack.c.b16 %v1692, %v1691
  %v1768 = vpack.c.b16 %v1694, %v1693
  %v1769 = vpack.c.b16 %v1696, %v1695
  %v1770 = vpack.c.b16 %v1698, %v1697
  %1843 = vmatprep.subr.bf16.mxu0 0
  %1844 = vmatpush1.bf16.msra.mxu0 %v1699
  %1845 = vmatprep.subr.bf16.mxu0 0
  %1846 = vmatpush1.bf16.msra.mxu0 %v1700
  %1847 = vmatprep.subr.bf16.mxu0 0
  %1848 = vmatpush1.bf16.msra.mxu0 %v1701
  %1849 = vmatprep.subr.bf16.mxu0 0
  %1850 = vmatpush1.bf16.msra.mxu0 %v1702
  %1851 = vmatprep.subr.bf16.mxu0 0
  %1852 = vmatpush1.bf16.msra.mxu0 %v1703
  %1853 = vmatprep.subr.bf16.mxu0 0
  %1854 = vmatpush1.bf16.msra.mxu0 %v1704
  %1855 = vmatprep.subr.bf16.mxu0 0
  %1856 = vmatpush1.bf16.msra.mxu0 %v1705
  %1857 = vmatprep.subr.bf16.mxu0 0
  %1858 = vmatpush1.bf16.msra.mxu0 %v1706
  %1859 = vmatprep.subr.bf16.mxu0 0
  %1860 = vmatpush1.bf16.msra.mxu0 %v1707
  %1861 = vmatprep.subr.bf16.mxu0 0
  %1862 = vmatpush1.bf16.msra.mxu0 %v1708
  %1863 = vmatprep.subr.bf16.mxu0 0
  %1864 = vmatpush1.bf16.msra.mxu0 %v1709
  %1865 = vmatprep.subr.bf16.mxu0 0
  %1866 = vmatpush1.bf16.msra.mxu0 %v1710
  %1867 = vmatprep.subr.bf16.mxu0 0
  %1868 = vmatpush1.bf16.msra.mxu0 %v1711
  %1869 = vmatprep.subr.bf16.mxu0 0
  %1870 = vmatpush1.bf16.msra.mxu0 %v1712
  %1871 = vmatprep.subr.bf16.mxu0 0
  %1872 = vmatpush1.bf16.msra.mxu0 %v1713
  %1873 = vmatprep.subr.bf16.mxu0 0
  %1874 = vmatpush1.bf16.msra.mxu0 %v1714
  %1875 = vmatprep.mubr.bf16.mxu0 %v1210
  %1876 = vmatmul.mubr.bf16.gmra.mrb[0].mxu0 %v1209
  %v1877 = vpop.f32.mrb[0].mxu0
  %v1878 = vadd.f32 %v1410, %v1877
  %v1879 = vpop.f32.mrb[0].mxu0
  %v1880 = vpop.f32.mrb[0].mxu0
  %v1881 = vadd.f32 %v1410, %v1880
  %v1882 = vpop.f32.mrb[0].mxu0
  %1883 = vmatprep.mubr.bf16.mxu0 %v1219
  %1884 = vmatmul.mubr.bf16.gmra.mrb[0].mxu0 %v1218
  %v1885 = vpop.f32.mrb[0].mxu0
  %v1886 = vadd.f32 %v1410, %v1885
  %v1887 = vpop.f32.mrb[0].mxu0
  %v1888 = vpop.f32.mrb[0].mxu0
  %v1889 = vadd.f32 %v1410, %v1888
  %v1890 = vpop.f32.mrb[0].mxu0
  %1891 = vmatprep.mubr.bf16.mxu0 %v1228
  %1892 = vmatmul.mubr.bf16.gmra.mrb[0].mxu0 %v1227
  %v1893 = vpop.f32.mrb[0].mxu0
  %v1894 = vadd.f32 %v1410, %v1893
  %v1895 = vpop.f32.mrb[0].mxu0
  %v1896 = vpop.f32.mrb[0].mxu0
  %v1897 = vadd.f32 %v1410, %v1896
  %v1898 = vpop.f32.mrb[0].mxu0
  %1899 = vmatprep.mubr.bf16.mxu0 %v1237
  %1900 = vmatmul.mubr.bf16.gmra.mrb[0].mxu0 %v1236
  %v1901 = vpop.f32.mrb[0].mxu0
  %v1902 = vadd.f32 %v1410, %v1901
  %v1903 = vpop.f32.mrb[0].mxu0
  %v1904 = vpop.f32.mrb[0].mxu0
  %v1905 = vadd.f32 %v1410, %v1904
  %v1906 = vpop.f32.mrb[0].mxu0
  %1907 = vmatprep.mubr.bf16.mxu0 %v1246
  %1908 = vmatmul.mubr.bf16.gmra.mrb[0].mxu0 %v1245
  %v1909 = vpop.f32.mrb[0].mxu0
  %v1910 = vadd.f32 %v1410, %v1909
  %v1911 = vpop.f32.mrb[0].mxu0
  %v1912 = vpop.f32.mrb[0].mxu0
  %v1913 = vadd.f32 %v1410, %v1912
  %v1914 = vpop.f32.mrb[0].mxu0
  %1915 = vmatprep.mubr.bf16.mxu0 %v1255
  %1916 = vmatmul.mubr.bf16.gmra.mrb[0].mxu0 %v1254
  %v1917 = vpop.f32.mrb[0].mxu0
  %v1918 = vadd.f32 %v1410, %v1917
  %v1919 = vpop.f32.mrb[0].mxu0
  %v1920 = vpop.f32.mrb[0].mxu0
  %v1921 = vadd.f32 %v1410, %v1920
  %v1922 = vpop.f32.mrb[0].mxu0
  %1923 = vdwg.mxu0
  %1924 = vmatprep.subr.bf16.mxu0 0
  %1925 = vmatpush1.bf16.msra.mxu0 %v1715
  %1926 = vmatprep.subr.bf16.mxu0 0
  %1927 = vmatpush1.bf16.msra.mxu0 %v1716
  %1928 = vmatprep.subr.bf16.mxu0 0
  %1929 = vmatpush1.bf16.msra.mxu0 %v1717
  %1930 = vmatprep.subr.bf16.mxu0 0
  %1931 = vmatpush1.bf16.msra.mxu0 %v1718
  %1932 = vmatprep.subr.bf16.mxu0 0
  %1933 = vmatpush1.bf16.msra.mxu0 %v1719
  %1934 = vmatprep.subr.bf16.mxu0 0
  %1935 = vmatpush1.bf16.msra.mxu0 %v1720
  %1936 = vmatprep.subr.bf16.mxu0 0
  %1937 = vmatpush1.bf16.msra.mxu0 %v1721
  %1938 = vmatprep.subr.bf16.mxu0 0
  %1939 = vmatpush1.bf16.msra.mxu0 %v1722
  %1940 = vmatprep.subr.bf16.mxu0 0
  %1941 = vmatpush1.bf16.msra.mxu0 %v1723
  %1942 = vmatprep.subr.bf16.mxu0 0
  %1943 = vmatpush1.bf16.msra.mxu0 %v1724
  %1944 = vmatprep.subr.bf16.mxu0 0
  %1945 = vmatpush1.bf16.msra.mxu0 %v1725
  %1946 = vmatprep.subr.bf16.mxu0 0
  %1947 = vmatpush1.bf16.msra.mxu0 %v1726
  %1948 = vmatprep.subr.bf16.mxu0 0
  %1949 = vmatpush1.bf16.msra.mxu0 %v1727
  %1950 = vmatprep.subr.bf16.mxu0 0
  %1951 = vmatpush1.bf16.msra.mxu0 %v1728
  %1952 = vmatprep.subr.bf16.mxu0 0
  %1953 = vmatpush1.bf16.msra.mxu0 %v1729
  %1954 = vmatprep.subr.bf16.mxu0 0
  %1955 = vmatpush1.bf16.msra.mxu0 %v1730
  %1956 = vmatprep.mubr.bf16.mxu0 %v1212
  %1957 = vmatmul.mubr.bf16.gmra.mrb[0].mxu0 %v1211
  %v1958 = vpop.f32.mrb[0].mxu0
  %v1959 = vadd.f32 %v1878, %v1958
  %v1960 = vpop.f32.mrb[0].mxu0
  %v1961 = vpop.f32.mrb[0].mxu0
  %v1962 = vadd.f32 %v1881, %v1961
  %v1963 = vpop.f32.mrb[0].mxu0
  %1964 = vmatprep.mubr.bf16.mxu0 %v1221
  %1965 = vmatmul.mubr.bf16.gmra.mrb[0].mxu0 %v1220
  %v1966 = vpop.f32.mrb[0].mxu0
  %v1967 = vadd.f32 %v1886, %v1966
  %v1968 = vpop.f32.mrb[0].mxu0
  %v1969 = vpop.f32.mrb[0].mxu0
  %v1970 = vadd.f32 %v1889, %v1969
  %v1971 = vpop.f32.mrb[0].mxu0
  %1972 = vmatprep.mubr.bf16.mxu0 %v1230
  %1973 = vmatmul.mubr.bf16.gmra.mrb[0].mxu0 %v1229
  %v1974 = vpop.f32.mrb[0].mxu0
  %v1975 = vadd.f32 %v1894, %v1974
  %v1976 = vpop.f32.mrb[0].mxu0
  %v1977 = vpop.f32.mrb[0].mxu0
  %v1978 = vadd.f32 %v1897, %v1977
  %v1979 = vpop.f32.mrb[0].mxu0
  %1980 = vmatprep.mubr.bf16.mxu0 %v1239
  %1981 = vmatmul.mubr.bf16.gmra.mrb[0].mxu0 %v1238
  %v1982 = vpop.f32.mrb[0].mxu0
  %v1983 = vadd.f32 %v1902, %v1982
  %v1984 = vpop.f32.mrb[0].mxu0
  %v1985 = vpop.f32.mrb[0].mxu0
  %v1986 = vadd.f32 %v1905, %v1985
  %v1987 = vpop.f32.mrb[0].mxu0
  %1988 = vmatprep.mubr.bf16.mxu0 %v1248
  %1989 = vmatmul.mubr.bf16.gmra.mrb[0].mxu0 %v1247
  %v1990 = vpop.f32.mrb[0].mxu0
  %v1991 = vadd.f32 %v1910, %v1990
  %v1992 = vpop.f32.mrb[0].mxu0
  %v1993 = vpop.f32.mrb[0].mxu0
  %v1994 = vadd.f32 %v1913, %v1993
  %v1995 = vpop.f32.mrb[0].mxu0
  %1996 = vmatprep.mubr.bf16.mxu0 %v1257
  %1997 = vmatmul.mubr.bf16.gmra.mrb[0].mxu0 %v1256
  %v1998 = vpop.f32.mrb[0].mxu0
  %v1999 = vadd.f32 %v1918, %v1998
  %v2000 = vpop.f32.mrb[0].mxu0
  %v2001 = vpop.f32.mrb[0].mxu0
  %v2002 = vadd.f32 %v1921, %v2001
  %v2003 = vpop.f32.mrb[0].mxu0
  %2004 = vdwg.mxu0
  %2005 = vmatprep.subr.bf16.mxu0 0
  %2006 = vmatpush1.bf16.msra.mxu0 %v1731
  %2007 = vmatprep.subr.bf16.mxu0 0
  %2008 = vmatpush1.bf16.msra.mxu0 %v1732
  %2009 = vmatprep.subr.bf16.mxu0 0
  %2010 = vmatpush1.bf16.msra.mxu0 %v1733
  %2011 = vmatprep.subr.bf16.mxu0 0
  %2012 = vmatpush1.bf16.msra.mxu0 %v1734
  %2013 = vmatprep.subr.bf16.mxu0 0
  %2014 = vmatpush1.bf16.msra.mxu0 %v1735
  %2015 = vmatprep.subr.bf16.mxu0 0
  %2016 = vmatpush1.bf16.msra.mxu0 %v1736
  %2017 = vmatprep.subr.bf16.mxu0 0
  %2018 = vmatpush1.bf16.msra.mxu0 %v1737
  %2019 = vmatprep.subr.bf16.mxu0 0
  %2020 = vmatpush1.bf16.msra.mxu0 %v1738
  %2021 = vmatprep.subr.bf16.mxu0 0
  %2022 = vmatpush1.bf16.msra.mxu0 %v1739
  %2023 = vmatprep.subr.bf16.mxu0 0
  %2024 = vmatpush1.bf16.msra.mxu0 %v1740
  %2025 = vmatprep.subr.bf16.mxu0 0
  %2026 = vmatpush1.bf16.msra.mxu0 %v1741
  %2027 = vmatprep.subr.bf16.mxu0 0
  %2028 = vmatpush1.bf16.msra.mxu0 %v1742
  %2029 = vmatprep.subr.bf16.mxu0 0
  %2030 = vmatpush1.bf16.msra.mxu0 %v1743
  %2031 = vmatprep.subr.bf16.mxu0 0
  %2032 = vmatpush1.bf16.msra.mxu0 %v1744
  %2033 = vmatprep.subr.bf16.mxu0 0
  %2034 = vmatpush1.bf16.msra.mxu0 %v1745
  %2035 = vmatprep.subr.bf16.mxu0 0
  %2036 = vmatpush1.bf16.msra.mxu0 %v1746
  %2037 = vmatprep.mubr.bf16.mxu0 %v1214
  %2038 = vmatmul.mubr.bf16.gmra.mrb[0].mxu0 %v1213
  %v2039 = vpop.f32.mrb[0].mxu0
  %v2040 = vadd.f32 %v1959, %v2039
  %v2041 = vpop.f32.mrb[0].mxu0
  %v2042 = vpop.f32.mrb[0].mxu0
  %v2043 = vadd.f32 %v1962, %v2042
  %v2044 = vpop.f32.mrb[0].mxu0
  %2045 = vmatprep.mubr.bf16.mxu0 %v1223
  %2046 = vmatmul.mubr.bf16.gmra.mrb[0].mxu0 %v1222
  %v2047 = vpop.f32.mrb[0].mxu0
  %v2048 = vadd.f32 %v1967, %v2047
  %v2049 = vpop.f32.mrb[0].mxu0
  %v2050 = vpop.f32.mrb[0].mxu0
  %v2051 = vadd.f32 %v1970, %v2050
  %v2052 = vpop.f32.mrb[0].mxu0
  %2053 = vmatprep.mubr.bf16.mxu0 %v1232
  %2054 = vmatmul.mubr.bf16.gmra.mrb[0].mxu0 %v1231
  %v2055 = vpop.f32.mrb[0].mxu0
  %v2056 = vadd.f32 %v1975, %v2055
  %v2057 = vpop.f32.mrb[0].mxu0
  %v2058 = vpop.f32.mrb[0].mxu0
  %v2059 = vadd.f32 %v1978, %v2058
  %v2060 = vpop.f32.mrb[0].mxu0
  %2061 = vmatprep.mubr.bf16.mxu0 %v1241
  %2062 = vmatmul.mubr.bf16.gmra.mrb[0].mxu0 %v1240
  %v2063 = vpop.f32.mrb[0].mxu0
  %v2064 = vadd.f32 %v1983, %v2063
  %v2065 = vpop.f32.mrb[0].mxu0
  %v2066 = vpop.f32.mrb[0].mxu0
  %v2067 = vadd.f32 %v1986, %v2066
  %v2068 = vpop.f32.mrb[0].mxu0
  %2069 = vmatprep.mubr.bf16.mxu0 %v1250
  %2070 = vmatmul.mubr.bf16.gmra.mrb[0].mxu0 %v1249
  %v2071 = vpop.f32.mrb[0].mxu0
  %v2072 = vadd.f32 %v1991, %v2071
  %v2073 = vpop.f32.mrb[0].mxu0
  %v2074 = vpop.f32.mrb[0].mxu0
  %v2075 = vadd.f32 %v1994, %v2074
  %v2076 = vpop.f32.mrb[0].mxu0
  %2077 = vmatprep.mubr.bf16.mxu0 %v1259
  %2078 = vmatmul.mubr.bf16.gmra.mrb[0].mxu0 %v1258
  %v2079 = vpop.f32.mrb[0].mxu0
  %v2080 = vadd.f32 %v1999, %v2079
  %v2081 = vpop.f32.mrb[0].mxu0
  %v2082 = vpop.f32.mrb[0].mxu0
  %v2083 = vadd.f32 %v2002, %v2082
  %v2084 = vpop.f32.mrb[0].mxu0
  %2085 = vdwg.mxu0
  %2086 = vmatprep.subr.bf16.mxu0 0
  %2087 = vmatpush1.bf16.msra.mxu0 %v1747
  %2088 = vmatprep.subr.bf16.mxu0 0
  %2089 = vmatpush1.bf16.msra.mxu0 %v1748
  %2090 = vmatprep.subr.bf16.mxu0 0
  %2091 = vmatpush1.bf16.msra.mxu0 %v1749
  %2092 = vmatprep.subr.bf16.mxu0 0
  %2093 = vmatpush1.bf16.msra.mxu0 %v1750
  %2094 = vmatprep.subr.bf16.mxu0 0
  %2095 = vmatpush1.bf16.msra.mxu0 %v1751
  %2096 = vmatprep.subr.bf16.mxu0 0
  %2097 = vmatpush1.bf16.msra.mxu0 %v1752
  %2098 = vmatprep.subr.bf16.mxu0 0
  %2099 = vmatpush1.bf16.msra.mxu0 %v1753
  %2100 = vmatprep.subr.bf16.mxu0 0
  %2101 = vmatpush1.bf16.msra.mxu0 %v1754
  %2102 = vmatprep.subr.bf16.mxu0 0
  %2103 = vmatpush1.bf16.msra.mxu0 %v1755
  %2104 = vmatprep.subr.bf16.mxu0 0
  %2105 = vmatpush1.bf16.msra.mxu0 %v1756
  %2106 = vmatprep.subr.bf16.mxu0 0
  %2107 = vmatpush1.bf16.msra.mxu0 %v1757
  %2108 = vmatprep.subr.bf16.mxu0 0
  %2109 = vmatpush1.bf16.msra.mxu0 %v1758
  %2110 = vmatprep.subr.bf16.mxu0 0
  %2111 = vmatpush1.bf16.msra.mxu0 %v1759
  %2112 = vmatprep.subr.bf16.mxu0 0
  %2113 = vmatpush1.bf16.msra.mxu0 %v1760
  %2114 = vmatprep.subr.bf16.mxu0 0
  %2115 = vmatpush1.bf16.msra.mxu0 %v1761
  %2116 = vmatprep.subr.bf16.mxu0 0
  %2117 = vmatpush1.bf16.msra.mxu0 %v1762
  %2118 = vmatprep.mubr.bf16.mxu0 %v1216
  %2119 = vmatmul.mubr.bf16.gmra.mrb[0].mxu0 %v1215
  %v2120 = vpop.f32.mrb[0].mxu0
  %v2121 = vadd.f32 %v2040, %v2120
  %v2122 = vpop.f32.mrb[0].mxu0
  %v2123 = vpop.f32.mrb[0].mxu0
  %v2124 = vadd.f32 %v2043, %v2123
  %v2125 = vpop.f32.mrb[0].mxu0
  %2126 = vmatprep.mubr.bf16.mxu0 %v1225
  %2127 = vmatmul.mubr.bf16.gmra.mrb[0].mxu0 %v1224
  %v2128 = vpop.f32.mrb[0].mxu0
  %v2129 = vadd.f32 %v2048, %v2128
  %v2130 = vpop.f32.mrb[0].mxu0
  %v2131 = vpop.f32.mrb[0].mxu0
  %v2132 = vadd.f32 %v2051, %v2131
  %v2133 = vpop.f32.mrb[0].mxu0
  %2134 = vmatprep.mubr.bf16.mxu0 %v1234
  %2135 = vmatmul.mubr.bf16.gmra.mrb[0].mxu0 %v1233
  %v2136 = vpop.f32.mrb[0].mxu0
  %v2137 = vadd.f32 %v2056, %v2136
  %v2138 = vpop.f32.mrb[0].mxu0
  %v2139 = vpop.f32.mrb[0].mxu0
  %v2140 = vadd.f32 %v2059, %v2139
  %v2141 = vpop.f32.mrb[0].mxu0
  %2142 = vmatprep.mubr.bf16.mxu0 %v1243
  %2143 = vmatmul.mubr.bf16.gmra.mrb[0].mxu0 %v1242
  %v2144 = vpop.f32.mrb[0].mxu0
  %v2145 = vadd.f32 %v2064, %v2144
  %v2146 = vpop.f32.mrb[0].mxu0
  %v2147 = vpop.f32.mrb[0].mxu0
  %v2148 = vadd.f32 %v2067, %v2147
  %v2149 = vpop.f32.mrb[0].mxu0
  %2150 = vmatprep.mubr.bf16.mxu0 %v1252
  %2151 = vmatmul.mubr.bf16.gmra.mrb[0].mxu0 %v1251
  %v2152 = vpop.f32.mrb[0].mxu0
  %v2153 = vadd.f32 %v2072, %v2152
  %v2154 = vpop.f32.mrb[0].mxu0
  %v2155 = vpop.f32.mrb[0].mxu0
  %v2156 = vadd.f32 %v2075, %v2155
  %v2157 = vpop.f32.mrb[0].mxu0
  %2158 = vmatprep.mubr.bf16.mxu0 %v1261
  %2159 = vmatmul.mubr.bf16.gmra.mrb[0].mxu0 %v1260
  %v2160 = vpop.f32.mrb[0].mxu0
  %v2161 = vadd.f32 %v2080, %v2160
  %v2162 = vpop.f32.mrb[0].mxu0
  %v2163 = vpop.f32.mrb[0].mxu0
  %v2164 = vadd.f32 %v2083, %v2163
  %v2165 = vpop.f32.mrb[0].mxu0
  %2166 = vdwg.mxu0
  %2167 = vmatprep.subr.bf16.mxu0 0
  %2168 = vmatpush1.bf16.msra.mxu0 %v1763
  %2169 = vmatprep.subr.bf16.mxu0 0
  %2170 = vmatpush1.bf16.msra.mxu0 %v1764
  %2171 = vmatprep.subr.bf16.mxu0 0
  %2172 = vmatpush1.bf16.msra.mxu0 %v1765
  %2173 = vmatprep.subr.bf16.mxu0 0
  %2174 = vmatpush1.bf16.msra.mxu0 %v1766
  %2175 = vmatprep.subr.bf16.mxu0 0
  %2176 = vmatpush1.bf16.msra.mxu0 %v1767
  %2177 = vmatprep.subr.bf16.mxu0 0
  %2178 = vmatpush1.bf16.msra.mxu0 %v1768
  %2179 = vmatprep.subr.bf16.mxu0 0
  %2180 = vmatpush1.bf16.msra.mxu0 %v1769
  %2181 = vmatprep.subr.bf16.mxu0 0
  %2182 = vmatpush1.bf16.msra.mxu0 %v1770
  %2183 = vmatprep.subr.bf16.mxu0 0
  %2184 = vmatpush1.bf16.msra.mxu0 0
  %2185 = vmatprep.subr.bf16.mxu0 0
  %2186 = vmatpush1.bf16.msra.mxu0 0
  %2187 = vmatprep.subr.bf16.mxu0 0
  %2188 = vmatpush1.bf16.msra.mxu0 0
  %2189 = vmatprep.subr.bf16.mxu0 0
  %2190 = vmatpush1.bf16.msra.mxu0 0
  %2191 = vmatprep.subr.bf16.mxu0 0
  %2192 = vmatpush1.bf16.msra.mxu0 0
  %2193 = vmatprep.subr.bf16.mxu0 0
  %2194 = vmatpush1.bf16.msra.mxu0 0
  %2195 = vmatprep.subr.bf16.mxu0 0
  %2196 = vmatpush1.bf16.msra.mxu0 0
  %2197 = vmatprep.subr.bf16.mxu0 0
  %2198 = vmatpush1.bf16.msra.mxu0 0
  %2199 = vmatprep.mubr.bf16.mxu0 0
  %2200 = vmatmul.mubr.bf16.gmra.mrb[0].mxu0 %v1217
  %v2201 = vpop.f32.mrb[0].mxu0
  %v2202 = vadd.f32 %v2121, %v2201
  %v2203 = vpop.f32.mrb[0].mxu0
  %v2204 = vpop.f32.mrb[0].mxu0
  %v2205 = vadd.f32 %v2124, %v2204
  %v2206 = vpop.f32.mrb[0].mxu0
  %2207 = vmatprep.mubr.bf16.mxu0 0
  %2208 = vmatmul.mubr.bf16.gmra.mrb[0].mxu0 %v1226
  %v2209 = vpop.f32.mrb[0].mxu0
  %v2210 = vadd.f32 %v2129, %v2209
  %v2211 = vpop.f32.mrb[0].mxu0
  %v2212 = vpop.f32.mrb[0].mxu0
  %v2213 = vadd.f32 %v2132, %v2212
  %v2214 = vpop.f32.mrb[0].mxu0
  %2215 = vmatprep.mubr.bf16.mxu0 0
  %2216 = vmatmul.mubr.bf16.gmra.mrb[0].mxu0 %v1235
  %v2217 = vpop.f32.mrb[0].mxu0
  %v2218 = vadd.f32 %v2137, %v2217
  %v2219 = vpop.f32.mrb[0].mxu0
  %v2220 = vpop.f32.mrb[0].mxu0
  %v2221 = vadd.f32 %v2140, %v2220
  %v2222 = vpop.f32.mrb[0].mxu0
  %2223 = vmatprep.mubr.bf16.mxu0 0
  %2224 = vmatmul.mubr.bf16.gmra.mrb[0].mxu0 %v1244
  %v2225 = vpop.f32.mrb[0].mxu0
  %v2226 = vadd.f32 %v2145, %v2225
  %v2227 = vpop.f32.mrb[0].mxu0
  %v2228 = vpop.f32.mrb[0].mxu0
  %v2229 = vadd.f32 %v2148, %v2228
  %v2230 = vpop.f32.mrb[0].mxu0
  %2231 = vmatprep.mubr.bf16.mxu0 0
  %2232 = vmatmul.mubr.bf16.gmra.mrb[0].mxu0 %v1253
  %v2233 = vpop.f32.mrb[0].mxu0
  %v2234 = vadd.f32 %v2153, %v2233
  %v2235 = vpop.f32.mrb[0].mxu0
  %v2236 = vpop.f32.mrb[0].mxu0
  %v2237 = vadd.f32 %v2156, %v2236
  %v2238 = vpop.f32.mrb[0].mxu0
  %2239 = vmatprep.mubr.bf16.mxu0 0
  %2240 = vmatmul.mubr.bf16.gmra.mrb[0].mxu0 %v1262
  %v2241 = vpop.f32.mrb[0].mxu0
  %v2242 = vadd.f32 %v2161, %v2241
  %v2243 = vpop.f32.mrb[0].mxu0
  %v2244 = vpop.f32.mrb[0].mxu0
  %v2245 = vadd.f32 %v2164, %v2244
  %v2246 = vpop.f32.mrb[0].mxu0
  %2247 = vdwg.mxu0
  %v2248 = vmax.f32 %v2202, 0.0
  %v2249 = vmax.f32 %v2205, 0.0
  %v2250 = vmax.f32 %v2210, 0.0
  %v2251 = vmax.f32 %v2213, 0.0
  %v2252 = vmax.f32 %v2218, 0.0
  %v2253 = vmax.f32 %v2221, 0.0
  %v2254 = vmax.f32 %v2226, 0.0
  %v2255 = vmax.f32 %v2229, 0.0
  %v2256 = vmax.f32 %v2234, 0.0
  %v2257 = vmax.f32 %v2237, 0.0
  %v2258 = vmax.f32 %v2242, 0.0
  %v2259 = vmax.f32 %v2245, 0.0
  %v2260 = vlaneseq
  %v2261 = vshrl.u32 %v2260, 7
  %v2262 = vadd.s32 %v2261, 8
  %v2263 = vadd.s32 %v2261, 16
  %v2264 = vadd.s32 %v2261, 24
  %v2265 = vadd.s32 %v2261, 32
  %v2266 = vadd.s32 %v2261, 40
  %v2267 = vadd.s32 %v2261, 48
  %v2268 = vadd.s32 %v2261, 56
  %v2269 = vadd.s32 %v2261, 64
  %v2270 = vadd.s32 %v2261, 72
  %v2271 = vadd.s32 %v2261, 80
  %v2272 = vadd.s32 %v2261, 88
  %v2273 = vand.u32 %v2261, 7
  %v2274 = vand.u32 %v2262, 7
  %v2275 = vand.u32 %v2263, 7
  %v2276 = vand.u32 %v2264, 7
  %v2277 = vand.u32 %v2265, 7
  %v2278 = vand.u32 %v2266, 7
  %v2279 = vand.u32 %v2267, 7
  %v2280 = vand.u32 %v2268, 7
  %v2281 = vand.u32 %v2269, 7
  %v2282 = vand.u32 %v2270, 7
  %v2283 = vand.u32 %v2271, 7
  %v2284 = vand.u32 %v2272, 7
  %vm2285 = vcmp.lt.s32.totalorder %v2273, 6
  %vm2286 = vcmp.lt.s32.totalorder %v2274, 6
  %vm2287 = vcmp.lt.s32.totalorder %v2275, 6
  %vm2288 = vcmp.lt.s32.totalorder %v2276, 6
  %vm2289 = vcmp.lt.s32.totalorder %v2277, 6
  %vm2290 = vcmp.lt.s32.totalorder %v2278, 6
  %vm2291 = vcmp.lt.s32.totalorder %v2279, 6
  %vm2292 = vcmp.lt.s32.totalorder %v2280, 6
  %vm2293 = vcmp.lt.s32.totalorder %v2281, 6
  %vm2294 = vcmp.lt.s32.totalorder %v2282, 6
  %vm2295 = vcmp.lt.s32.totalorder %v2283, 6
  %vm2296 = vcmp.lt.s32.totalorder %v2284, 6
  %v2297 = vsel %vm2285, 1, 0
  %v2298 = vsel %vm2286, 1, 0
  %v2299 = vsel %vm2287, 1, 0
  %v2300 = vsel %vm2288, 1, 0
  %v2301 = vsel %vm2289, 1, 0
  %v2302 = vsel %vm2290, 1, 0
  %v2303 = vsel %vm2291, 1, 0
  %v2304 = vsel %vm2292, 1, 0
  %v2305 = vsel %vm2293, 1, 0
  %v2306 = vsel %vm2294, 1, 0
  %v2307 = vsel %vm2295, 1, 0
  %v2308 = vsel %vm2296, 1, 0
  %v2309 = vcvt.s32.f32 %v2297
  %v2310 = vcvt.s32.f32 %v2298
  %v2311 = vcvt.s32.f32 %v2299
  %v2312 = vcvt.s32.f32 %v2300
  %v2313 = vcvt.s32.f32 %v2301
  %v2314 = vcvt.s32.f32 %v2302
  %v2315 = vcvt.s32.f32 %v2303
  %v2316 = vcvt.s32.f32 %v2304
  %v2317 = vcvt.s32.f32 %v2305
  %v2318 = vcvt.s32.f32 %v2306
  %v2319 = vcvt.s32.f32 %v2307
  %v2320 = vcvt.s32.f32 %v2308
  %v2321 = vmul.f32 %v2248, %v2309
  %v2322 = vmul.f32 %v2249, %v2310
  %v2323 = vmul.f32 %v2250, %v2311
  %v2324 = vmul.f32 %v2251, %v2312
  %v2325 = vmul.f32 %v2252, %v2313
  %v2326 = vmul.f32 %v2253, %v2314
  %v2327 = vmul.f32 %v2254, %v2315
  %v2328 = vmul.f32 %v2255, %v2316
  %v2329 = vmul.f32 %v2256, %v2317
  %v2330 = vmul.f32 %v2257, %v2318
  %v2331 = vmul.f32 %v2258, %v2319
  %v2332 = vmul.f32 %v2259, %v2320
  %vm2333 = vcmask 523264
  %v2334 = vsel %vm2333, %v2321, 0.0
  %v2335 = vsel %vm2333, %v2322, 0.0
  %v2336 = vadd.f32 %v2334, %v2335
  %v2337 = vsel %vm2333, %v2323, 0.0
  %v2338 = vadd.f32 %v2336, %v2337
  %v2339 = vsel %vm2333, %v2324, 0.0
  %v2340 = vadd.f32 %v2338, %v2339
  %v2341 = vsel %vm2333, %v2325, 0.0
  %v2342 = vadd.f32 %v2340, %v2341
  %v2343 = vsel %vm2333, %v2326, 0.0
  %v2344 = vadd.f32 %v2342, %v2343
  %v2345 = vsel %vm2333, %v2327, 0.0
  %v2346 = vadd.f32 %v2344, %v2345
  %v2347 = vsel %vm2333, %v2328, 0.0
  %v2348 = vadd.f32 %v2346, %v2347
  %v2349 = vsel %vm2333, %v2329, 0.0
  %v2350 = vadd.f32 %v2348, %v2349
  %v2351 = vsel %vm2333, %v2330, 0.0
  %v2352 = vadd.f32 %v2350, %v2351
  %v2353 = vsel %vm2333, %v2331, 0.0
  %v2354 = vadd.f32 %v2352, %v2353
  %v2355 = vsel %vm2333, %v2332, 0.0
  %v2356 = vadd.f32 %v2354, %v2355
  %v2357 = vrot.slane %v2356, 4
  %v2358 = vadd.f32 %v2356, %v2357
  %v2359 = vrot.slane %v2358, 2
  %v2360 = vadd.f32 %v2358, %v2359
  %v2361 = vrot.slane %v2360, 1
  %v2362 = vadd.f32 %v2360, %v2361
  %v2363 = vrcp.pop 72.0
  %v2364 = vmul.f32 %v2362, %v2363
  %v2365 = vmul.f32 %v2321, %v2248
  %v2366 = vmul.f32 %v2322, %v2249
  %v2367 = vmul.f32 %v2323, %v2250
  %v2368 = vmul.f32 %v2324, %v2251
  %v2369 = vmul.f32 %v2325, %v2252
  %v2370 = vmul.f32 %v2326, %v2253
  %v2371 = vmul.f32 %v2327, %v2254
  %v2372 = vmul.f32 %v2328, %v2255
  %v2373 = vmul.f32 %v2329, %v2256
  %v2374 = vmul.f32 %v2330, %v2257
  %v2375 = vmul.f32 %v2331, %v2258
  %v2376 = vmul.f32 %v2332, %v2259
  %v2377 = vsel %vm2333, %v2365, 0.0
  %v2378 = vsel %vm2333, %v2366, 0.0
  %v2379 = vadd.f32 %v2377, %v2378
  %v2380 = vsel %vm2333, %v2367, 0.0
  %v2381 = vadd.f32 %v2379, %v2380
  %v2382 = vsel %vm2333, %v2368, 0.0
  %v2383 = vadd.f32 %v2381, %v2382
  %v2384 = vsel %vm2333, %v2369, 0.0
  %v2385 = vadd.f32 %v2383, %v2384
  %v2386 = vsel %vm2333, %v2370, 0.0
  %v2387 = vadd.f32 %v2385, %v2386
  %v2388 = vsel %vm2333, %v2371, 0.0
  %v2389 = vadd.f32 %v2387, %v2388
  %v2390 = vsel %vm2333, %v2372, 0.0
  %v2391 = vadd.f32 %v2389, %v2390
  %v2392 = vsel %vm2333, %v2373, 0.0
  %v2393 = vadd.f32 %v2391, %v2392
  %v2394 = vsel %vm2333, %v2374, 0.0
  %v2395 = vadd.f32 %v2393, %v2394
  %v2396 = vsel %vm2333, %v2375, 0.0
  %v2397 = vadd.f32 %v2395, %v2396
  %v2398 = vsel %vm2333, %v2376, 0.0
  %v2399 = vadd.f32 %v2397, %v2398
  %v2400 = vrot.slane %v2399, 4
  %v2401 = vadd.f32 %v2399, %v2400
  %v2402 = vrot.slane %v2401, 2
  %v2403 = vadd.f32 %v2401, %v2402
  %v2404 = vrot.slane %v2403, 1
  %v2405 = vadd.f32 %v2403, %v2404
  %v2406 = vmul.f32 %v2405, %v2363
  %v2407 = vmul.f32 %v2364, %v2364
  %v2408 = vsub.f32 %v2406, %v2407
  %v2409 = vsub.f32 %v2248, %v2364
  %v2410 = vsub.f32 %v2249, %v2364
  %v2411 = vsub.f32 %v2250, %v2364
  %v2412 = vsub.f32 %v2251, %v2364
  %v2413 = vsub.f32 %v2252, %v2364
  %v2414 = vsub.f32 %v2253, %v2364
  %v2415 = vsub.f32 %v2254, %v2364
  %v2416 = vsub.f32 %v2255, %v2364
  %v2417 = vsub.f32 %v2256, %v2364
  %v2418 = vsub.f32 %v2257, %v2364
  %v2419 = vsub.f32 %v2258, %v2364
  %v2420 = vsub.f32 %v2259, %v2364
  %v2421 = vadd.f32 %v2408, 1e-05
  %v2422 = vrsqrt.pop %v2421
  %v2423 = vmul.f32 %v2409, %v2422
  %v2424 = vmul.f32 %v2410, %v2422
  %v2425 = vmul.f32 %v2411, %v2422
  %v2426 = vmul.f32 %v2412, %v2422
  %v2427 = vmul.f32 %v2413, %v2422
  %v2428 = vmul.f32 %v2414, %v2422
  %v2429 = vmul.f32 %v2415, %v2422
  %v2430 = vmul.f32 %v2416, %v2422
  %v2431 = vmul.f32 %v2417, %v2422
  %v2432 = vmul.f32 %v2418, %v2422
  %v2433 = vmul.f32 %v2419, %v2422
  %v2434 = vmul.f32 %v2420, %v2422
  %v2435 = vlaneseq
  %v2436 = vshrl.u32 %v2435, 7
  %v2437 = vsub.s32 0, %v2436
  %v2438 = vrot.slane %v31, %v2437
  %v2439 = vmul.f32 %v2423, %v2438
  %v2440 = vmul.f32 %v2424, %v2438
  %v2441 = vmul.f32 %v2425, %v2438
  %v2442 = vmul.f32 %v2426, %v2438
  %v2443 = vmul.f32 %v2427, %v2438
  %v2444 = vmul.f32 %v2428, %v2438
  %v2445 = vmul.f32 %v2429, %v2438
  %v2446 = vmul.f32 %v2430, %v2438
  %v2447 = vmul.f32 %v2431, %v2438
  %v2448 = vmul.f32 %v2432, %v2438
  %v2449 = vmul.f32 %v2433, %v2438
  %v2450 = vmul.f32 %v2434, %v2438
  %v2451 = vlaneseq
  %v2452 = vshrl.u32 %v2451, 7
  %v2453 = vsub.s32 0, %v2452
  %v2454 = vrot.slane %v32, %v2453
  %v2455 = vadd.f32 %v2439, %v2454
  %v2456 = vadd.f32 %v2440, %v2454
  %v2457 = vadd.f32 %v2441, %v2454
  %v2458 = vadd.f32 %v2442, %v2454
  %v2459 = vadd.f32 %v2443, %v2454
  %v2460 = vadd.f32 %v2444, %v2454
  %v2461 = vadd.f32 %v2445, %v2454
  %v2462 = vadd.f32 %v2446, %v2454
  %v2463 = vadd.f32 %v2447, %v2454
  %v2464 = vadd.f32 %v2448, %v2454
  %v2465 = vadd.f32 %v2449, %v2454
  %v2466 = vadd.f32 %v2450, %v2454
  %2467 = vst.msk [vmem:[#allocation4] sm:$0xff] %vm2333, %v2455
  %2468 = vst.msk [vmem:[#allocation4 + $0x8] sm:$0xff] %vm2333, %v2456
  %2469 = vst.msk [vmem:[#allocation4 + $0x10] sm:$0xff] %vm2333, %v2457
  %2470 = vst.msk [vmem:[#allocation4 + $0x18] sm:$0xff] %vm2333, %v2458
  %2471 = vst.msk [vmem:[#allocation4 + $0x20] sm:$0xff] %vm2333, %v2459
  %2472 = vst.msk [vmem:[#allocation4 + $0x28] sm:$0xff] %vm2333, %v2460
  %2473 = vst.msk [vmem:[#allocation4 + $0x38] sm:$0xff] %vm2333, %v2461
  %2474 = vst.msk [vmem:[#allocation4 + $0x40] sm:$0xff] %vm2333, %v2462
  %2475 = vst.msk [vmem:[#allocation4 + $0x48] sm:$0xff] %vm2333, %v2463
  %2476 = vst.msk [vmem:[#allocation4 + $0x50] sm:$0xff] %vm2333, %v2464
  %2477 = vst.msk [vmem:[#allocation4 + $0x58] sm:$0xff] %vm2333, %v2465
  %2478 = vst.msk [vmem:[#allocation4 + $0x60] sm:$0xff] %vm2333, %v2466
  %2479 = vst.msk [vmem:[#allocation4 + $0x30] sm:$0xff] %vm2333, 0.0
  %2480 = vst.msk [vmem:[#allocation4 + $0x68] sm:$0xff] %vm2333, 0.0
  %v2481 = vld [vmem:[#allocation4] sm:$0xff]
  %v2482 = vld [vmem:[#allocation4 + $0x8] sm:$0xff]
  %v2483 = vld [vmem:[#allocation4 + $0x38] sm:$0xff]
  %v2484 = vld [vmem:[#allocation4 + $0x40] sm:$0xff]
  %v2485 = vpack.c.bf16 %v2482, %v2481
  %v2486 = vpack.c.bf16 %v2484, %v2483
  %2487 = vst.msk [vmem:[#allocation5] sm:$0xff] %vm2333, %v2485
  %2488 = vst.msk [vmem:[#allocation5 + $0x68] sm:$0xff] %vm2333, %v2486
  %v2489 = vld [vmem:[#allocation4 + $0x1] sm:$0xff]
  %v2490 = vld [vmem:[#allocation4 + $0x9] sm:$0xff]
  %v2491 = vld [vmem:[#allocation4 + $0x39] sm:$0xff]
  %v2492 = vld [vmem:[#allocation4 + $0x41] sm:$0xff]
  %v2493 = vpack.c.bf16 %v2490, %v2489
  %v2494 = vpack.c.bf16 %v2492, %v2491
  %2497 = vrot.lane.b32.xlu0 %v2493, 64
  %v2498 = vpop.permute.xlu0 %2497
  %2499 = vrot.lane.b32.xlu0 %v2494, 64
  %v2500 = vpop.permute.xlu0 %2499
  %vm2503 = vcmask 1048064
  %2504 = vst.msk [vmem:[#allocation5] sm:$0xff] %vm2503, %v2498
  %2505 = vst.msk [vmem:[#allocation5 + $0x68] sm:$0xff] %vm2503, %v2500
  %v2506 = vld [vmem:[#allocation4 + $0x2] sm:$0xff]
  %v2507 = vld [vmem:[#allocation4 + $0xa] sm:$0xff]
  %v2508 = vld [vmem:[#allocation4 + $0x3a] sm:$0xff]
  %v2509 = vld [vmem:[#allocation4 + $0x42] sm:$0xff]
  %v2510 = vpack.c.bf16 %v2507, %v2506
  %v2511 = vpack.c.bf16 %v2509, %v2508
  %2512 = vst.msk [vmem:[#allocation5 + $0x8] sm:$0xff] %vm2333, %v2510
  %2513 = vst.msk [vmem:[#allocation5 + $0x70] sm:$0xff] %vm2333, %v2511
  %v2514 = vld [vmem:[#allocation4 + $0x3] sm:$0xff]
  %v2515 = vld [vmem:[#allocation4 + $0xb] sm:$0xff]
  %v2516 = vld [vmem:[#allocation4 + $0x3b] sm:$0xff]
  %v2517 = vld [vmem:[#allocation4 + $0x43] sm:$0xff]
  %v2518 = vpack.c.bf16 %v2515, %v2514
  %v2519 = vpack.c.bf16 %v2517, %v2516
  %2522 = vrot.lane.b32.xlu0 %v2518, 64
  %v2523 = vpop.permute.xlu0 %2522
  %2524 = vrot.lane.b32.xlu0 %v2519, 64
  %v2525 = vpop.permute.xlu0 %2524
  %2528 = vst.msk [vmem:[#allocation5 + $0x8] sm:$0xff] %vm2503, %v2523
  %2529 = vst.msk [vmem:[#allocation5 + $0x70] sm:$0xff] %vm2503, %v2525
  %v2530 = vld [vmem:[#allocation4 + $0x4] sm:$0xff]
  %v2531 = vld [vmem:[#allocation4 + $0xc] sm:$0xff]
  %v2532 = vld [vmem:[#allocation4 + $0x3c] sm:$0xff]
  %v2533 = vld [vmem:[#allocation4 + $0x44] sm:$0xff]
  %v2534 = vpack.c.bf16 %v2531, %v2530
  %v2535 = vpack.c.bf16 %v2533, %v2532
  %2536 = vst.msk [vmem:[#allocation5 + $0x10] sm:$0xff] %vm2333, %v2534
  %2537 = vst.msk [vmem:[#allocation5 + $0x78] sm:$0xff] %vm2333, %v2535
  %v2538 = vld [vmem:[#allocation4 + $0x8] sm:$0xff]
  %v2539 = vld [vmem:[#allocation4 + $0x10] sm:$0xff]
  %v2540 = vld [vmem:[#allocation4 + $0x40] sm:$0xff]
  %v2541 = vld [vmem:[#allocation4 + $0x48] sm:$0xff]
  %v2542 = vpack.c.bf16 %v2539, %v2538
  %v2543 = vpack.c.bf16 %v2541, %v2540
  %2546 = vrot.lane.b32.xlu0 %v2542, 64
  %v2547 = vpop.permute.xlu0 %2546
  %2548 = vrot.lane.b32.xlu0 %v2543, 64
  %v2549 = vpop.permute.xlu0 %2548
  %2552 = vst.msk [vmem:[#allocation5 + $0x10] sm:$0xff] %vm2503, %v2547
  %2553 = vst.msk [vmem:[#allocation5 + $0x78] sm:$0xff] %vm2503, %v2549
  %v2554 = vld [vmem:[#allocation4 + $0x9] sm:$0xff]
  %v2555 = vld [vmem:[#allocation4 + $0x11] sm:$0xff]
  %v2556 = vld [vmem:[#allocation4 + $0x41] sm:$0xff]
  %v2557 = vld [vmem:[#allocation4 + $0x49] sm:$0xff]
  %v2558 = vpack.c.bf16 %v2555, %v2554
  %v2559 = vpack.c.bf16 %v2557, %v2556
  %2560 = vst.msk [vmem:[#allocation5 + $0x18] sm:$0xff] %vm2333, %v2558
  %2561 = vst.msk [vmem:[#allocation5 + $0x80] sm:$0xff] %vm2333, %v2559
  %v2562 = vld [vmem:[#allocation4 + $0xa] sm:$0xff]
  %v2563 = vld [vmem:[#allocation4 + $0x12] sm:$0xff]
  %v2564 = vld [vmem:[#allocation4 + $0x42] sm:$0xff]
  %v2565 = vld [vmem:[#allocation4 + $0x4a] sm:$0xff]
  %v2566 = vpack.c.bf16 %v2563, %v2562
  %v2567 = vpack.c.bf16 %v2565, %v2564
  %2570 = vrot.lane.b32.xlu0 %v2566, 64
  %v2571 = vpop.permute.xlu0 %2570
  %2572 = vrot.lane.b32.xlu0 %v2567, 64
  %v2573 = vpop.permute.xlu0 %2572
  %2576 = vst.msk [vmem:[#allocation5 + $0x18] sm:$0xff] %vm2503, %v2571
  %2577 = vst.msk [vmem:[#allocation5 + $0x80] sm:$0xff] %vm2503, %v2573
  %v2578 = vld [vmem:[#allocation4 + $0xb] sm:$0xff]
  %v2579 = vld [vmem:[#allocation4 + $0x13] sm:$0xff]
  %v2580 = vld [vmem:[#allocation4 + $0x43] sm:$0xff]
  %v2581 = vld [vmem:[#allocation4 + $0x4b] sm:$0xff]
  %v2582 = vpack.c.bf16 %v2579, %v2578
  %v2583 = vpack.c.bf16 %v2581, %v2580
  %2584 = vst.msk [vmem:[#allocation5 + $0x20] sm:$0xff] %vm2333, %v2582
  %2585 = vst.msk [vmem:[#allocation5 + $0x88] sm:$0xff] %vm2333, %v2583
  %v2586 = vld [vmem:[#allocation4 + $0xc] sm:$0xff]
  %v2587 = vld [vmem:[#allocation4 + $0x14] sm:$0xff]
  %v2588 = vld [vmem:[#allocation4 + $0x44] sm:$0xff]
  %v2589 = vld [vmem:[#allocation4 + $0x4c] sm:$0xff]
  %v2590 = vpack.c.bf16 %v2587, %v2586
  %v2591 = vpack.c.bf16 %v2589, %v2588
  %2594 = vrot.lane.b32.xlu0 %v2590, 64
  %v2595 = vpop.permute.xlu0 %2594
  %2596 = vrot.lane.b32.xlu0 %v2591, 64
  %v2597 = vpop.permute.xlu0 %2596
  %2600 = vst.msk [vmem:[#allocation5 + $0x20] sm:$0xff] %vm2503, %v2595
  %2601 = vst.msk [vmem:[#allocation5 + $0x88] sm:$0xff] %vm2503, %v2597
  %v2602 = vld [vmem:[#allocation4 + $0x10] sm:$0xff]
  %v2603 = vld [vmem:[#allocation4 + $0x18] sm:$0xff]
  %v2604 = vld [vmem:[#allocation4 + $0x48] sm:$0xff]
  %v2605 = vld [vmem:[#allocation4 + $0x50] sm:$0xff]
  %v2606 = vpack.c.bf16 %v2603, %v2602
  %v2607 = vpack.c.bf16 %v2605, %v2604
  %2608 = vst.msk [vmem:[#allocation5 + $0x28] sm:$0xff] %vm2333, %v2606
  %2609 = vst.msk [vmem:[#allocation5 + $0x90] sm:$0xff] %vm2333, %v2607
  %v2610 = vld [vmem:[#allocation4 + $0x11] sm:$0xff]
  %v2611 = vld [vmem:[#allocation4 + $0x19] sm:$0xff]
  %v2612 = vld [vmem:[#allocation4 + $0x49] sm:$0xff]
  %v2613 = vld [vmem:[#allocation4 + $0x51] sm:$0xff]
  %v2614 = vpack.c.bf16 %v2611, %v2610
  %v2615 = vpack.c.bf16 %v2613, %v2612
  %2618 = vrot.lane.b32.xlu0 %v2614, 64
  %v2619 = vpop.permute.xlu0 %2618
  %2620 = vrot.lane.b32.xlu0 %v2615, 64
  %v2621 = vpop.permute.xlu0 %2620
  %2624 = vst.msk [vmem:[#allocation5 + $0x28] sm:$0xff] %vm2503, %v2619
  %2625 = vst.msk [vmem:[#allocation5 + $0x90] sm:$0xff] %vm2503, %v2621
  %v2626 = vld [vmem:[#allocation4 + $0x12] sm:$0xff]
  %v2627 = vld [vmem:[#allocation4 + $0x1a] sm:$0xff]
  %v2628 = vld [vmem:[#allocation4 + $0x4a] sm:$0xff]
  %v2629 = vld [vmem:[#allocation4 + $0x52] sm:$0xff]
  %v2630 = vpack.c.bf16 %v2627, %v2626
  %v2631 = vpack.c.bf16 %v2629, %v2628
  %2632 = vst.msk [vmem:[#allocation5 + $0x30] sm:$0xff] %vm2333, %v2630
  %2633 = vst.msk [vmem:[#allocation5 + $0x98] sm:$0xff] %vm2333, %v2631
  %v2634 = vld [vmem:[#allocation4 + $0x13] sm:$0xff]
  %v2635 = vld [vmem:[#allocation4 + $0x1b] sm:$0xff]
  %v2636 = vld [vmem:[#allocation4 + $0x4b] sm:$0xff]
  %v2637 = vld [vmem:[#allocation4 + $0x53] sm:$0xff]
  %v2638 = vpack.c.bf16 %v2635, %v2634
  %v2639 = vpack.c.bf16 %v2637, %v2636
  %2642 = vrot.lane.b32.xlu0 %v2638, 64
  %v2643 = vpop.permute.xlu0 %2642
  %2644 = vrot.lane.b32.xlu0 %v2639, 64
  %v2645 = vpop.permute.xlu0 %2644
  %2648 = vst.msk [vmem:[#allocation5 + $0x30] sm:$0xff] %vm2503, %v2643
  %2649 = vst.msk [vmem:[#allocation5 + $0x98] sm:$0xff] %vm2503, %v2645
  %v2650 = vld [vmem:[#allocation4 + $0x14] sm:$0xff]
  %v2651 = vld [vmem:[#allocation4 + $0x1c] sm:$0xff]
  %v2652 = vld [vmem:[#allocation4 + $0x4c] sm:$0xff]
  %v2653 = vld [vmem:[#allocation4 + $0x54] sm:$0xff]
  %v2654 = vpack.c.bf16 %v2651, %v2650
  %v2655 = vpack.c.bf16 %v2653, %v2652
  %2656 = vst.msk [vmem:[#allocation5 + $0x38] sm:$0xff] %vm2333, %v2654
  %2657 = vst.msk [vmem:[#allocation5 + $0xa0] sm:$0xff] %vm2333, %v2655
  %v2658 = vld [vmem:[#allocation4 + $0x18] sm:$0xff]
  %v2659 = vld [vmem:[#allocation4 + $0x20] sm:$0xff]
  %v2660 = vld [vmem:[#allocation4 + $0x50] sm:$0xff]
  %v2661 = vld [vmem:[#allocation4 + $0x58] sm:$0xff]
  %v2662 = vpack.c.bf16 %v2659, %v2658
  %v2663 = vpack.c.bf16 %v2661, %v2660
  %2666 = vrot.lane.b32.xlu0 %v2662, 64
  %v2667 = vpop.permute.xlu0 %2666
  %2668 = vrot.lane.b32.xlu0 %v2663, 64
  %v2669 = vpop.permute.xlu0 %2668
  %2672 = vst.msk [vmem:[#allocation5 + $0x38] sm:$0xff] %vm2503, %v2667
  %2673 = vst.msk [vmem:[#allocation5 + $0xa0] sm:$0xff] %vm2503, %v2669
  %v2674 = vld [vmem:[#allocation4 + $0x19] sm:$0xff]
  %v2675 = vld [vmem:[#allocation4 + $0x21] sm:$0xff]
  %v2676 = vld [vmem:[#allocation4 + $0x51] sm:$0xff]
  %v2677 = vld [vmem:[#allocation4 + $0x59] sm:$0xff]
  %v2678 = vpack.c.bf16 %v2675, %v2674
  %v2679 = vpack.c.bf16 %v2677, %v2676
  %2680 = vst.msk [vmem:[#allocation5 + $0x40] sm:$0xff] %vm2333, %v2678
  %2681 = vst.msk [vmem:[#allocation5 + $0xa8] sm:$0xff] %vm2333, %v2679
  %v2682 = vld [vmem:[#allocation4 + $0x1a] sm:$0xff]
  %v2683 = vld [vmem:[#allocation4 + $0x22] sm:$0xff]
  %v2684 = vld [vmem:[#allocation4 + $0x52] sm:$0xff]
  %v2685 = vld [vmem:[#allocation4 + $0x5a] sm:$0xff]
  %v2686 = vpack.c.bf16 %v2683, %v2682
  %v2687 = vpack.c.bf16 %v2685, %v2684
  %2690 = vrot.lane.b32.xlu0 %v2686, 64
  %v2691 = vpop.permute.xlu0 %2690
  %2692 = vrot.lane.b32.xlu0 %v2687, 64
  %v2693 = vpop.permute.xlu0 %2692
  %2696 = vst.msk [vmem:[#allocation5 + $0x40] sm:$0xff] %vm2503, %v2691
  %2697 = vst.msk [vmem:[#allocation5 + $0xa8] sm:$0xff] %vm2503, %v2693
  %v2698 = vld [vmem:[#allocation4 + $0x1b] sm:$0xff]
  %v2699 = vld [vmem:[#allocation4 + $0x23] sm:$0xff]
  %v2700 = vld [vmem:[#allocation4 + $0x53] sm:$0xff]
  %v2701 = vld [vmem:[#allocation4 + $0x5b] sm:$0xff]
  %v2702 = vpack.c.bf16 %v2699, %v2698
  %v2703 = vpack.c.bf16 %v2701, %v2700
  %2704 = vst.msk [vmem:[#allocation5 + $0x48] sm:$0xff] %vm2333, %v2702
  %2705 = vst.msk [vmem:[#allocation5 + $0xb0] sm:$0xff] %vm2333, %v2703
  %v2706 = vld [vmem:[#allocation4 + $0x1c] sm:$0xff]
  %v2707 = vld [vmem:[#allocation4 + $0x24] sm:$0xff]
  %v2708 = vld [vmem:[#allocation4 + $0x54] sm:$0xff]
  %v2709 = vld [vmem:[#allocation4 + $0x5c] sm:$0xff]
  %v2710 = vpack.c.bf16 %v2707, %v2706
  %v2711 = vpack.c.bf16 %v2709, %v2708
  %2714 = vrot.lane.b32.xlu0 %v2710, 64
  %v2715 = vpop.permute.xlu0 %2714
  %2716 = vrot.lane.b32.xlu0 %v2711, 64
  %v2717 = vpop.permute.xlu0 %2716
  %2720 = vst.msk [vmem:[#allocation5 + $0x48] sm:$0xff] %vm2503, %v2715
  %2721 = vst.msk [vmem:[#allocation5 + $0xb0] sm:$0xff] %vm2503, %v2717
  %v2722 = vld [vmem:[#allocation4 + $0x20] sm:$0xff]
  %v2723 = vld [vmem:[#allocation4 + $0x28] sm:$0xff]
  %v2724 = vld [vmem:[#allocation4 + $0x58] sm:$0xff]
  %v2725 = vld [vmem:[#allocation4 + $0x60] sm:$0xff]
  %v2726 = vpack.c.bf16 %v2723, %v2722
  %v2727 = vpack.c.bf16 %v2725, %v2724
  %2728 = vst.msk [vmem:[#allocation5 + $0x50] sm:$0xff] %vm2333, %v2726
  %2729 = vst.msk [vmem:[#allocation5 + $0xb8] sm:$0xff] %vm2333, %v2727
  %v2730 = vld [vmem:[#allocation4 + $0x21] sm:$0xff]
  %v2731 = vld [vmem:[#allocation4 + $0x29] sm:$0xff]
  %v2732 = vld [vmem:[#allocation4 + $0x59] sm:$0xff]
  %v2733 = vld [vmem:[#allocation4 + $0x61] sm:$0xff]
  %v2734 = vpack.c.bf16 %v2731, %v2730
  %v2735 = vpack.c.bf16 %v2733, %v2732
  %2738 = vrot.lane.b32.xlu0 %v2734, 64
  %v2739 = vpop.permute.xlu0 %2738
  %2740 = vrot.lane.b32.xlu0 %v2735, 64
  %v2741 = vpop.permute.xlu0 %2740
  %2744 = vst.msk [vmem:[#allocation5 + $0x50] sm:$0xff] %vm2503, %v2739
  %2745 = vst.msk [vmem:[#allocation5 + $0xb8] sm:$0xff] %vm2503, %v2741
  %v2746 = vld [vmem:[#allocation4 + $0x22] sm:$0xff]
  %v2747 = vld [vmem:[#allocation4 + $0x2a] sm:$0xff]
  %v2748 = vld [vmem:[#allocation4 + $0x5a] sm:$0xff]
  %v2749 = vld [vmem:[#allocation4 + $0x62] sm:$0xff]
  %v2750 = vpack.c.bf16 %v2747, %v2746
  %v2751 = vpack.c.bf16 %v2749, %v2748
  %2752 = vst.msk [vmem:[#allocation5 + $0x58] sm:$0xff] %vm2333, %v2750
  %2753 = vst.msk [vmem:[#allocation5 + $0xc0] sm:$0xff] %vm2333, %v2751
  %v2754 = vld [vmem:[#allocation4 + $0x23] sm:$0xff]
  %v2755 = vld [vmem:[#allocation4 + $0x2b] sm:$0xff]
  %v2756 = vld [vmem:[#allocation4 + $0x5b] sm:$0xff]
  %v2757 = vld [vmem:[#allocation4 + $0x63] sm:$0xff]
  %v2758 = vpack.c.bf16 %v2755, %v2754
  %v2759 = vpack.c.bf16 %v2757, %v2756
  %2762 = vrot.lane.b32.xlu0 %v2758, 64
  %v2763 = vpop.permute.xlu0 %2762
  %2764 = vrot.lane.b32.xlu0 %v2759, 64
  %v2765 = vpop.permute.xlu0 %2764
  %2768 = vst.msk [vmem:[#allocation5 + $0x58] sm:$0xff] %vm2503, %v2763
  %2769 = vst.msk [vmem:[#allocation5 + $0xc0] sm:$0xff] %vm2503, %v2765
  %v2770 = vld [vmem:[#allocation4 + $0x24] sm:$0xff]
  %v2771 = vld [vmem:[#allocation4 + $0x2c] sm:$0xff]
  %v2772 = vld [vmem:[#allocation4 + $0x5c] sm:$0xff]
  %v2773 = vld [vmem:[#allocation4 + $0x64] sm:$0xff]
  %v2774 = vpack.c.bf16 %v2771, %v2770
  %v2775 = vpack.c.bf16 %v2773, %v2772
  %2776 = vst.msk [vmem:[#allocation5 + $0x60] sm:$0xff] %vm2333, %v2774
  %2777 = vst.msk [vmem:[#allocation5 + $0xc8] sm:$0xff] %vm2333, %v2775
  %v2778 = vld [vmem:[#allocation5] sm:$0xff]
  %v2779 = vld [vmem:[#allocation5 + $0x8] sm:$0xff]
  %v2780 = vld [vmem:[#allocation5 + $0x10] sm:$0xff]
  %v2781 = vld [vmem:[#allocation5 + $0x18] sm:$0xff]
  %v2782 = vld [vmem:[#allocation5 + $0x20] sm:$0xff]
  %v2783 = vld [vmem:[#allocation5 + $0x28] sm:$0xff]
  %v2784 = vld [vmem:[#allocation5 + $0x30] sm:$0xff]
  %v2785 = vld [vmem:[#allocation5 + $0x38] sm:$0xff]
  %v2786 = vld [vmem:[#allocation5 + $0x40] sm:$0xff]
  %v2787 = vld [vmem:[#allocation5 + $0x48] sm:$0xff]
  %v2788 = vld [vmem:[#allocation5 + $0x50] sm:$0xff]
  %v2789 = vld [vmem:[#allocation5 + $0x58] sm:$0xff]
  %v2790 = vld [vmem:[#allocation5 + $0x60] sm:$0xff]
  %v2791 = vld [vmem:[#allocation5 + $0x68] sm:$0xff]
  %v2792 = vld [vmem:[#allocation5 + $0x70] sm:$0xff]
  %v2793 = vld [vmem:[#allocation5 + $0x78] sm:$0xff]
  %v2794 = vld [vmem:[#allocation5 + $0x80] sm:$0xff]
  %v2795 = vld [vmem:[#allocation5 + $0x88] sm:$0xff]
  %v2796 = vld [vmem:[#allocation5 + $0x90] sm:$0xff]
  %v2797 = vld [vmem:[#allocation5 + $0x98] sm:$0xff]
  %v2798 = vld [vmem:[#allocation5 + $0xa0] sm:$0xff]
  %v2799 = vld [vmem:[#allocation5 + $0xa8] sm:$0xff]
  %v2800 = vld [vmem:[#allocation5 + $0xb0] sm:$0xff]
  %v2801 = vld [vmem:[#allocation5 + $0xb8] sm:$0xff]
  %v2802 = vld [vmem:[#allocation5 + $0xc0] sm:$0xff]
  %v2803 = vld [vmem:[#allocation5 + $0xc8] sm:$0xff]
  %v2804 = vld [vmem:[%s3] sm:$0xf]
  %v2805 = vld [vmem:[%s3 + $0x4] sm:$0xf]
  %v2806 = vld [vmem:[%s3 + $0x8] sm:$0xf]
  %v2807 = vld [vmem:[%s3 + $0xc] sm:$0xf]
  %v2808 = vld [vmem:[%s3 + $0x10] sm:$0xf]
  %v2809 = vld [vmem:[%s3 + $0x14] sm:$0xf]
  %v2810 = vld [vmem:[%s3 + $0x18] sm:$0xf]
  %v2811 = vld [vmem:[%s3 + $0x1c] sm:$0xf]
  %v2812 = vld [vmem:[%s3 + $0x20] sm:$0xf]
  %v2813 = vld [vmem:[%s3 + $0x24] sm:$0xf]
  %v2814 = vld [vmem:[%s3 + $0x28] sm:$0xf]
  %v2815 = vld [vmem:[%s3 + $0x2c] sm:$0xf]
  %v2816 = vld [vmem:[%s3 + $0x30] sm:$0xf]
  %v2817 = vld [vmem:[%s3 + $0x34] sm:$0xf]
  %v2818 = vld [vmem:[%s3 + $0x38] sm:$0xf]
  %v2819 = vld [vmem:[%s3 + $0x3c] sm:$0xf]
  %v2820 = vld [vmem:[%s3 + $0x40] sm:$0xf]
  %v2821 = vld [vmem:[%s3 + $0x44] sm:$0xf]
  %v2822 = vld [vmem:[%s3 + $0x48] sm:$0xf]
  %v2823 = vld [vmem:[%s3 + $0x4c] sm:$0xf]
  %v2824 = vld [vmem:[%s3 + $0x50] sm:$0xf]
  %v2825 = vld [vmem:[%s3 + $0x54] sm:$0xf]
  %v2826 = vld [vmem:[%s3 + $0x58] sm:$0xf]
  %v2827 = vld [vmem:[%s3 + $0x5c] sm:$0xf]
  %v2828 = vld [vmem:[%s3 + $0x60] sm:$0xf]
  %v2829 = vld [vmem:[%s3 + $0x64] sm:$0xf]
  %v2830 = vld [vmem:[%s3 + $0x68] sm:$0xf]
  %v2831 = vld [vmem:[%s3 + $0x6c] sm:$0xf]
  %v2832 = vld [vmem:[%s3 + $0x70] sm:$0xf]
  %v2833 = vld [vmem:[%s3 + $0x74] sm:$0xf]
  %v2834 = vld [vmem:[%s3 + $0x78] sm:$0xf]
  %v2835 = vld [vmem:[%s3 + $0x7c] sm:$0xf]
  %v2836 = vld [vmem:[%s3 + $0x80] sm:$0xf]
  %v2837 = vld [vmem:[%s3 + $0x84] sm:$0xf]
  %v2838 = vld [vmem:[%s3 + $0x88] sm:$0xf]
  %v2839 = vld [vmem:[%s3 + $0x8c] sm:$0xf]
  %v2840 = vld [vmem:[%s3 + $0x90] sm:$0xf]
  %v2841 = vld [vmem:[%s3 + $0x94] sm:$0xf]
  %v2842 = vld [vmem:[%s3 + $0x98] sm:$0xf]
  %v2843 = vld [vmem:[%s3 + $0x9c] sm:$0xf]
  %v2844 = vld [vmem:[%s3 + $0xa0] sm:$0xf]
  %v2845 = vld [vmem:[%s3 + $0xa4] sm:$0xf]
  %v2846 = vld [vmem:[%s3 + $0xa8] sm:$0xf]
  %v2847 = vld [vmem:[%s3 + $0xac] sm:$0xf]
  %v2848 = vld [vmem:[%s3 + $0xb0] sm:$0xf]
  %v2849 = vld [vmem:[%s3 + $0xb4] sm:$0xf]
  %v2850 = vld [vmem:[%s3 + $0xb8] sm:$0xf]
  %v2851 = vld [vmem:[%s3 + $0xbc] sm:$0xf]
  %v2852 = vld [vmem:[%s3 + $0xc0] sm:$0xf]
  %v2853 = vld [vmem:[%s3 + $0xc4] sm:$0xf]
  %v2854 = vld [vmem:[%s3 + $0xc8] sm:$0xf]
  %v2855 = vld [vmem:[%s3 + $0xcc] sm:$0xf]
  %v2856 = vld [vmem:[%s3 + $0xd0] sm:$0xf]
  %v2857 = vld [vmem:[%s3 + $0xd4] sm:$0xf]
  %v2858 = vld [vmem:[%s3 + $0xd8] sm:$0xf]
  %v2859 = vld [vmem:[%s3 + $0xdc] sm:$0xf]
  %v2860 = vld [vmem:[%s3 + $0xe0] sm:$0xf]
  %v2861 = vld [vmem:[%s3 + $0xe4] sm:$0xf]
  %v2862 = vld [vmem:[%s3 + $0xe8] sm:$0xf]
  %v2863 = vld [vmem:[%s3 + $0xec] sm:$0xf]
  %v2864 = vld [vmem:[%s3 + $0xf0] sm:$0xf]
  %v2865 = vld [vmem:[%s3 + $0xf4] sm:$0xf]
  %v2866 = vld [vmem:[%s3 + $0xf8] sm:$0xf]
  %v2867 = vld [vmem:[%s3 + $0xfc] sm:$0xf]
  %v2868 = vld [vmem:[%s3 + $0x100] sm:$0xf]
  %v2869 = vld [vmem:[%s3 + $0x104] sm:$0xf]
  %v2870 = vld [vmem:[%s3 + $0x108] sm:$0xf]
  %v2871 = vld [vmem:[%s3 + $0x10c] sm:$0xf]
  %v2872 = vld [vmem:[%s3 + $0x110] sm:$0xf]
  %v2873 = vld [vmem:[%s3 + $0x114] sm:$0xf]
  %v2874 = vld [vmem:[%s3 + $0x118] sm:$0xf]
  %v2875 = vld [vmem:[%s3 + $0x11c] sm:$0xf]
  %v2876 = vld [vmem:[%s3 + $0x120] sm:$0xf]
  %v2877 = vld [vmem:[%s3 + $0x124] sm:$0xf]
  %v2878 = vld [vmem:[%s3 + $0x128] sm:$0xf]
  %v2879 = vld [vmem:[%s3 + $0x12c] sm:$0xf]
  %v2880 = vld [vmem:[%s3 + $0x130] sm:$0xf]
  %v2881 = vld [vmem:[%s3 + $0x134] sm:$0xf]
  %v2882 = vld [vmem:[%s3 + $0x138] sm:$0xf]
  %v2883 = vld [vmem:[%s3 + $0x13c] sm:$0xf]
  %v2884 = vld [vmem:[%s3 + $0x140] sm:$0xf]
  %v2885 = vld [vmem:[%s3 + $0x144] sm:$0xf]
  %v2886 = vld [vmem:[%s3 + $0x148] sm:$0xf]
  %v2887 = vld [vmem:[%s3 + $0x14c] sm:$0xf]
  %v2888 = vld [vmem:[%s3 + $0x150] sm:$0xf]
  %v2889 = vld [vmem:[%s3 + $0x154] sm:$0xf]
  %v2890 = vld [vmem:[%s3 + $0x158] sm:$0xf]
  %v2891 = vld [vmem:[%s3 + $0x15c] sm:$0xf]
  %v2892 = vld [vmem:[%s3 + $0x160] sm:$0xf]
  %v2893 = vld [vmem:[%s3 + $0x164] sm:$0xf]
  %v2894 = vld [vmem:[%s3 + $0x168] sm:$0xf]
  %v2895 = vld [vmem:[%s3 + $0x16c] sm:$0xf]
  %v2896 = vld [vmem:[%s3 + $0x170] sm:$0xf]
  %v2897 = vld [vmem:[%s3 + $0x174] sm:$0xf]
  %v2898 = vld [vmem:[%s3 + $0x178] sm:$0xf]
  %v2899 = vld [vmem:[%s3 + $0x17c] sm:$0xf]
  %v2900 = vld [vmem:[%s3 + $0x180] sm:$0xf]
  %v2901 = vld [vmem:[%s3 + $0x184] sm:$0xf]
  %v2902 = vld [vmem:[%s3 + $0x188] sm:$0xf]
  %v2903 = vld [vmem:[%s3 + $0x18c] sm:$0xf]
  %v2904 = vld [vmem:[%s3 + $0x190] sm:$0xf]
  %v2905 = vld [vmem:[%s3 + $0x194] sm:$0xf]
  %v2906 = vld [vmem:[%s3 + $0x198] sm:$0xf]
  %v2907 = vld [vmem:[%s3 + $0x19c] sm:$0xf]
  %v2908 = vld [vmem:[%s3 + $0x1a0] sm:$0xf]
  %v2909 = vld [vmem:[%s3 + $0x1a4] sm:$0xf]
  %v2910 = vld [vmem:[%s3 + $0x1a8] sm:$0xf]
  %v2911 = vld [vmem:[%s3 + $0x1ac] sm:$0xf]
  %v2912 = vld [vmem:[%s3 + $0x1b0] sm:$0xf]
  %v2913 = vld [vmem:[%s3 + $0x1b4] sm:$0xf]
  %v2914 = vld [vmem:[%s3 + $0x1b8] sm:$0xf]
  %v2915 = vld [vmem:[%s3 + $0x1bc] sm:$0xf]
  %v2916 = vld [vmem:[%s3 + $0x1c0] sm:$0xf]
  %v2917 = vld [vmem:[%s3 + $0x1c4] sm:$0xf]
  %v2918 = vld [vmem:[%s3 + $0x1c8] sm:$0xf]
  %v2919 = vld [vmem:[%s3 + $0x1cc] sm:$0xf]
  %v2920 = vld [vmem:[%s3 + $0x1d0] sm:$0xf]
  %v2921 = vld [vmem:[%s3 + $0x1d4] sm:$0xf]
  %v2922 = vld [vmem:[%s3 + $0x1d8] sm:$0xf]
  %v2923 = vld [vmem:[%s3 + $0x1dc] sm:$0xf]
  %v2924 = vld [vmem:[%s3 + $0x1e0] sm:$0xf]
  %v2925 = vld [vmem:[%s3 + $0x1e4] sm:$0xf]
  %v2926 = vld [vmem:[%s3 + $0x1e8] sm:$0xf]
  %v2927 = vld [vmem:[%s3 + $0x1ec] sm:$0xf]
  %v2928 = vld [vmem:[%s3 + $0x1f0] sm:$0xf]
  %v2929 = vld [vmem:[%s3 + $0x1f4] sm:$0xf]
  %v2930 = vld [vmem:[%s3 + $0x1f8] sm:$0xf]
  %v2931 = vld [vmem:[%s3 + $0x1fc] sm:$0xf]
  %v2932 = vld [vmem:[%s3 + $0x200] sm:$0xf]
  %v2933 = vld [vmem:[%s3 + $0x204] sm:$0xf]
  %v2934 = vld [vmem:[%s3 + $0x208] sm:$0xf]
  %v2935 = vld [vmem:[%s3 + $0x20c] sm:$0xf]
  %v2936 = vld [vmem:[%s3 + $0x210] sm:$0xf]
  %v2937 = vld [vmem:[%s3 + $0x214] sm:$0xf]
  %v2938 = vld [vmem:[%s3 + $0x218] sm:$0xf]
  %v2939 = vld [vmem:[%s3 + $0x21c] sm:$0xf]
  %v2940 = vld [vmem:[%s3 + $0x220] sm:$0xf]
  %v2941 = vld [vmem:[%s3 + $0x224] sm:$0xf]
  %v2942 = vld [vmem:[%s3 + $0x228] sm:$0xf]
  %v2943 = vld [vmem:[%s3 + $0x22c] sm:$0xf]
  %v2944 = vld [vmem:[%s3 + $0x230] sm:$0xf]
  %v2945 = vld [vmem:[%s3 + $0x234] sm:$0xf]
  %v2946 = vld [vmem:[%s3 + $0x238] sm:$0xf]
  %v2947 = vld [vmem:[%s3 + $0x23c] sm:$0xf]
  %v2948 = vld [vmem:[%s3 + $0x240] sm:$0xf]
  %v2949 = vld [vmem:[%s3 + $0x244] sm:$0xf]
  %v2950 = vld [vmem:[%s3 + $0x248] sm:$0xf]
  %v2951 = vld [vmem:[%s3 + $0x24c] sm:$0xf]
  %v2952 = vld [vmem:[%s3 + $0x250] sm:$0xf]
  %v2953 = vld [vmem:[%s3 + $0x254] sm:$0xf]
  %v2954 = vld [vmem:[%s3 + $0x258] sm:$0xf]
  %v2955 = vld [vmem:[%s3 + $0x25c] sm:$0xf]
  %v2956 = vld [vmem:[%s3 + $0x260] sm:$0xf]
  %v2957 = vld [vmem:[%s3 + $0x264] sm:$0xf]
  %v2958 = vld [vmem:[%s3 + $0x268] sm:$0xf]
  %v2959 = vld [vmem:[%s3 + $0x26c] sm:$0xf]
  %v2960 = vld [vmem:[%s3 + $0x270] sm:$0xf]
  %v2961 = vld [vmem:[%s3 + $0x274] sm:$0xf]
  %v2962 = vld [vmem:[%s3 + $0x278] sm:$0xf]
  %v2963 = vld [vmem:[%s3 + $0x27c] sm:$0xf]
  %v2964 = vld [vmem:[%s3 + $0x280] sm:$0xf]
  %v2965 = vld [vmem:[%s3 + $0x284] sm:$0xf]
  %v2966 = vld [vmem:[%s3 + $0x288] sm:$0xf]
  %v2967 = vld [vmem:[%s3 + $0x28c] sm:$0xf]
  %v2968 = vld [vmem:[%s3 + $0x290] sm:$0xf]
  %v2969 = vld [vmem:[%s3 + $0x294] sm:$0xf]
  %v2970 = vld [vmem:[%s3 + $0x298] sm:$0xf]
  %v2971 = vld [vmem:[%s3 + $0x29c] sm:$0xf]
  %v2972 = vld [vmem:[%s3 + $0x2a0] sm:$0xf]
  %v2973 = vld [vmem:[%s3 + $0x2a4] sm:$0xf]
  %v2974 = vld [vmem:[%s3 + $0x2a8] sm:$0xf]
  %v2975 = vld [vmem:[%s3 + $0x2ac] sm:$0xf]
  %v2976 = vld [vmem:[%s3 + $0x2b0] sm:$0xf]
  %v2977 = vld [vmem:[%s3 + $0x2b4] sm:$0xf]
  %v2978 = vld [vmem:[%s3 + $0x2b8] sm:$0xf]
  %v2979 = vld [vmem:[%s3 + $0x2bc] sm:$0xf]
  %v2980 = vld [vmem:[%s3 + $0x2c0] sm:$0xf]
  %v2981 = vld [vmem:[%s3 + $0x2c4] sm:$0xf]
  %v2982 = vld [vmem:[%s3 + $0x2c8] sm:$0xf]
  %v2983 = vld [vmem:[%s3 + $0x2cc] sm:$0xf]
  %v2984 = vld [vmem:[%s3 + $0x2d0] sm:$0xf]
  %v2985 = vld [vmem:[%s3 + $0x2d4] sm:$0xf]
  %v2986 = vld [vmem:[%s3 + $0x2d8] sm:$0xf]
  %v2987 = vld [vmem:[%s3 + $0x2dc] sm:$0xf]
  %v2988 = vld [vmem:[%s3 + $0x2e0] sm:$0xf]
  %v2989 = vld [vmem:[%s3 + $0x2e4] sm:$0xf]
  %v2990 = vld [vmem:[%s3 + $0x2e8] sm:$0xf]
  %v2991 = vld [vmem:[%s3 + $0x2ec] sm:$0xf]
  %v2992 = vld [vmem:[%s3 + $0x2f0] sm:$0xf]
  %v2993 = vld [vmem:[%s3 + $0x2f4] sm:$0xf]
  %v2994 = vld [vmem:[%s3 + $0x2f8] sm:$0xf]
  %v2995 = vld [vmem:[%s3 + $0x2fc] sm:$0xf]
  %v2996 = vld [vmem:[%s3 + $0x300] sm:$0xf]
  %v2997 = vld [vmem:[%s3 + $0x304] sm:$0xf]
  %v2998 = vld [vmem:[%s3 + $0x308] sm:$0xf]
  %v2999 = vld [vmem:[%s3 + $0x30c] sm:$0xf]
  %v3000 = vld [vmem:[%s3 + $0x310] sm:$0xf]
  %v3001 = vld [vmem:[%s3 + $0x314] sm:$0xf]
  %v3002 = vld [vmem:[%s3 + $0x318] sm:$0xf]
  %v3003 = vld [vmem:[%s3 + $0x31c] sm:$0xf]
  %v3004 = vlaneseq
  %v3005 = vshrl.u32 %v3004, 7
  %v3006 = vsub.s32 0, %v3005
  %v3007 = vrot.slane %v33, %v3006
  %v3208 = vunpack.c.l.b16 %v2804
  %v3209 = vunpack.c.l.b16 %v2805
  %v3210 = vunpack.c.l.b16 %v2806
  %v3211 = vunpack.c.l.b16 %v2807
  %v3212 = vunpack.c.l.b16 %v2808
  %v3213 = vunpack.c.l.b16 %v2809
  %v3214 = vunpack.c.l.b16 %v2810
  %v3215 = vunpack.c.l.b16 %v2811
  %v3216 = vunpack.c.l.b16 %v2812
  %v3217 = vunpack.c.l.b16 %v2813
  %v3218 = vunpack.c.l.b16 %v2814
  %v3219 = vunpack.c.l.b16 %v2815
  %v3220 = vunpack.c.l.b16 %v2816
  %v3221 = vunpack.c.l.b16 %v2817
  %v3222 = vunpack.c.l.b16 %v2818
  %v3223 = vunpack.c.l.b16 %v2819
  %v3224 = vunpack.c.l.b16 %v2820
  %v3225 = vunpack.c.l.b16 %v2821
  %v3226 = vunpack.c.l.b16 %v2822
  %v3227 = vunpack.c.l.b16 %v2823
  %v3228 = vunpack.c.l.b16 %v2824
  %v3229 = vunpack.c.l.b16 %v2825
  %v3230 = vunpack.c.l.b16 %v2826
  %v3231 = vunpack.c.l.b16 %v2827
  %v3232 = vunpack.c.l.b16 %v2828
  %v3233 = vunpack.c.l.b16 %v2829
  %v3234 = vunpack.c.l.b16 %v2830
  %v3235 = vunpack.c.l.b16 %v2831
  %v3236 = vunpack.c.l.b16 %v2832
  %v3237 = vunpack.c.l.b16 %v2833
  %v3238 = vunpack.c.l.b16 %v2834
  %v3239 = vunpack.c.l.b16 %v2835
  %v3240 = vunpack.c.l.b16 %v2836
  %v3241 = vunpack.c.l.b16 %v2837
  %v3242 = vunpack.c.l.b16 %v2838
  %v3243 = vunpack.c.l.b16 %v2839
  %v3244 = vunpack.c.l.b16 %v2840
  %v3245 = vunpack.c.l.b16 %v2841
  %v3246 = vunpack.c.l.b16 %v2842
  %v3247 = vunpack.c.l.b16 %v2843
  %v3248 = vunpack.c.l.b16 %v2844
  %v3249 = vunpack.c.l.b16 %v2845
  %v3250 = vunpack.c.l.b16 %v2846
  %v3251 = vunpack.c.l.b16 %v2847
  %v3252 = vunpack.c.l.b16 %v2848
  %v3253 = vunpack.c.l.b16 %v2849
  %v3254 = vunpack.c.l.b16 %v2850
  %v3255 = vunpack.c.l.b16 %v2851
  %v3256 = vunpack.c.l.b16 %v2852
  %v3257 = vunpack.c.l.b16 %v2853
  %v3258 = vunpack.c.l.b16 %v2854
  %v3259 = vunpack.c.l.b16 %v2855
  %v3260 = vunpack.c.l.b16 %v2856
  %v3261 = vunpack.c.l.b16 %v2857
  %v3262 = vunpack.c.l.b16 %v2858
  %v3263 = vunpack.c.l.b16 %v2859
  %v3264 = vunpack.c.l.b16 %v2860
  %v3265 = vunpack.c.l.b16 %v2861
  %v3266 = vunpack.c.l.b16 %v2862
  %v3267 = vunpack.c.l.b16 %v2863
  %v3268 = vunpack.c.l.b16 %v2864
  %v3269 = vunpack.c.l.b16 %v2865
  %v3270 = vunpack.c.l.b16 %v2866
  %v3271 = vunpack.c.l.b16 %v2867
  %v3272 = vunpack.c.l.b16 %v2868
  %v3273 = vunpack.c.l.b16 %v2869
  %v3274 = vunpack.c.l.b16 %v2870
  %v3275 = vunpack.c.l.b16 %v2871
  %v3276 = vunpack.c.l.b16 %v2872
  %v3277 = vunpack.c.l.b16 %v2873
  %v3278 = vunpack.c.l.b16 %v2874
  %v3279 = vunpack.c.l.b16 %v2875
  %v3280 = vunpack.c.l.b16 %v2876
  %v3281 = vunpack.c.l.b16 %v2877
  %v3282 = vunpack.c.l.b16 %v2878
  %v3283 = vunpack.c.l.b16 %v2879
  %v3284 = vunpack.c.l.b16 %v2880
  %v3285 = vunpack.c.l.b16 %v2881
  %v3286 = vunpack.c.l.b16 %v2882
  %v3287 = vunpack.c.l.b16 %v2883
  %v3288 = vunpack.c.l.b16 %v2884
  %v3289 = vunpack.c.l.b16 %v2885
  %v3290 = vunpack.c.l.b16 %v2886
  %v3291 = vunpack.c.l.b16 %v2887
  %v3292 = vunpack.c.l.b16 %v2888
  %v3293 = vunpack.c.l.b16 %v2889
  %v3294 = vunpack.c.l.b16 %v2890
  %v3295 = vunpack.c.l.b16 %v2891
  %v3296 = vunpack.c.l.b16 %v2892
  %v3297 = vunpack.c.l.b16 %v2893
  %v3298 = vunpack.c.l.b16 %v2894
  %v3299 = vunpack.c.l.b16 %v2895
  %v3300 = vunpack.c.l.b16 %v2896
  %v3301 = vunpack.c.l.b16 %v2897
  %v3302 = vunpack.c.l.b16 %v2898
  %v3303 = vunpack.c.l.b16 %v2899
  %v3304 = vunpack.c.l.b16 %v2900
  %v3305 = vunpack.c.l.b16 %v2901
  %v3306 = vunpack.c.l.b16 %v2902
  %v3307 = vunpack.c.l.b16 %v2903
  %v3308 = vunpack.c.l.b16 %v2904
  %v3309 = vunpack.c.l.b16 %v2905
  %v3310 = vunpack.c.l.b16 %v2906
  %v3311 = vunpack.c.l.b16 %v2907
  %v3312 = vunpack.c.l.b16 %v2908
  %v3313 = vunpack.c.l.b16 %v2909
  %v3314 = vunpack.c.l.b16 %v2910
  %v3315 = vunpack.c.l.b16 %v2911
  %v3316 = vunpack.c.l.b16 %v2912
  %v3317 = vunpack.c.l.b16 %v2913
  %v3318 = vunpack.c.l.b16 %v2914
  %v3319 = vunpack.c.l.b16 %v2915
  %v3320 = vunpack.c.l.b16 %v2916
  %v3321 = vunpack.c.l.b16 %v2917
  %v3322 = vunpack.c.l.b16 %v2918
  %v3323 = vunpack.c.l.b16 %v2919
  %v3324 = vunpack.c.l.b16 %v2920
  %v3325 = vunpack.c.l.b16 %v2921
  %v3326 = vunpack.c.l.b16 %v2922
  %v3327 = vunpack.c.l.b16 %v2923
  %v3328 = vunpack.c.l.b16 %v2924
  %v3329 = vunpack.c.l.b16 %v2925
  %v3330 = vunpack.c.l.b16 %v2926
  %v3331 = vunpack.c.l.b16 %v2927
  %v3332 = vunpack.c.l.b16 %v2928
  %v3333 = vunpack.c.l.b16 %v2929
  %v3334 = vunpack.c.l.b16 %v2930
  %v3335 = vunpack.c.l.b16 %v2931
  %v3336 = vunpack.c.l.b16 %v2932
  %v3337 = vunpack.c.l.b16 %v2933
  %v3338 = vunpack.c.l.b16 %v2934
  %v3339 = vunpack.c.l.b16 %v2935
  %v3340 = vunpack.c.l.b16 %v2936
  %v3341 = vunpack.c.l.b16 %v2937
  %v3342 = vunpack.c.l.b16 %v2938
  %v3343 = vunpack.c.l.b16 %v2939
  %v3344 = vunpack.c.l.b16 %v2940
  %v3345 = vunpack.c.l.b16 %v2941
  %v3346 = vunpack.c.l.b16 %v2942
  %v3347 = vunpack.c.l.b16 %v2943
  %v3348 = vunpack.c.l.b16 %v2944
  %v3349 = vunpack.c.l.b16 %v2945
  %v3350 = vunpack.c.l.b16 %v2946
  %v3351 = vunpack.c.l.b16 %v2947
  %v3352 = vunpack.c.l.b16 %v2948
  %v3353 = vunpack.c.l.b16 %v2949
  %v3354 = vunpack.c.l.b16 %v2950
  %v3355 = vunpack.c.l.b16 %v2951
  %v3356 = vunpack.c.l.b16 %v2952
  %v3357 = vunpack.c.l.b16 %v2953
  %v3358 = vunpack.c.l.b16 %v2954
  %v3359 = vunpack.c.l.b16 %v2955
  %v3360 = vunpack.c.l.b16 %v2956
  %v3361 = vunpack.c.l.b16 %v2957
  %v3362 = vunpack.c.l.b16 %v2958
  %v3363 = vunpack.c.l.b16 %v2959
  %v3364 = vunpack.c.l.b16 %v2960
  %v3365 = vunpack.c.l.b16 %v2961
  %v3366 = vunpack.c.l.b16 %v2962
  %v3367 = vunpack.c.l.b16 %v2963
  %v3368 = vunpack.c.l.b16 %v2964
  %v3369 = vunpack.c.l.b16 %v2965
  %v3370 = vunpack.c.l.b16 %v2966
  %v3371 = vunpack.c.l.b16 %v2967
  %v3372 = vunpack.c.l.b16 %v2968
  %v3373 = vunpack.c.l.b16 %v2969
  %v3374 = vunpack.c.l.b16 %v2970
  %v3375 = vunpack.c.l.b16 %v2971
  %v3376 = vunpack.c.l.b16 %v2972
  %v3377 = vunpack.c.l.b16 %v2973
  %v3378 = vunpack.c.l.b16 %v2974
  %v3379 = vunpack.c.l.b16 %v2975
  %v3380 = vunpack.c.l.b16 %v2976
  %v3381 = vunpack.c.l.b16 %v2977
  %v3382 = vunpack.c.l.b16 %v2978
  %v3383 = vunpack.c.l.b16 %v2979
  %v3384 = vunpack.c.l.b16 %v2980
  %v3385 = vunpack.c.l.b16 %v2981
  %v3386 = vunpack.c.l.b16 %v2982
  %v3387 = vunpack.c.l.b16 %v2983
  %v3388 = vunpack.c.l.b16 %v2984
  %v3389 = vunpack.c.l.b16 %v2985
  %v3390 = vunpack.c.l.b16 %v2986
  %v3391 = vunpack.c.l.b16 %v2987
  %v3392 = vunpack.c.l.b16 %v2988
  %v3393 = vunpack.c.l.b16 %v2989
  %v3394 = vunpack.c.l.b16 %v2990
  %v3395 = vunpack.c.l.b16 %v2991
  %v3396 = vunpack.c.l.b16 %v2992
  %v3397 = vunpack.c.l.b16 %v2993
  %v3398 = vunpack.c.l.b16 %v2994
  %v3399 = vunpack.c.l.b16 %v2995
  %v3400 = vunpack.c.l.b16 %v2996
  %v3401 = vunpack.c.l.b16 %v2997
  %v3402 = vunpack.c.l.b16 %v2998
  %v3403 = vunpack.c.l.b16 %v2999
  %v3404 = vunpack.c.l.b16 %v3000
  %v3405 = vunpack.c.l.b16 %v3001
  %v3406 = vunpack.c.l.b16 %v3002
  %v3407 = vunpack.c.l.b16 %v3003
  %v3408 = vpack.c.b16 %v3209, %v3208
  %v3409 = vpack.c.b16 %v3211, %v3210
  %v3410 = vpack.c.b16 %v3213, %v3212
  %v3411 = vpack.c.b16 %v3215, %v3214
  %v3412 = vpack.c.b16 %v3217, %v3216
  %v3413 = vpack.c.b16 %v3219, %v3218
  %v3414 = vpack.c.b16 %v3221, %v3220
  %v3415 = vpack.c.b16 %v3223, %v3222
  %v3416 = vpack.c.b16 %v3225, %v3224
  %v3417 = vpack.c.b16 %v3227, %v3226
  %v3418 = vpack.c.b16 %v3229, %v3228
  %v3419 = vpack.c.b16 %v3231, %v3230
  %v3420 = vpack.c.b16 %v3233, %v3232
  %v3421 = vpack.c.b16 %v3235, %v3234
  %v3422 = vpack.c.b16 %v3237, %v3236
  %v3423 = vpack.c.b16 %v3239, %v3238
  %v3424 = vpack.c.b16 %v3241, %v3240
  %v3425 = vpack.c.b16 %v3243, %v3242
  %v3426 = vpack.c.b16 %v3245, %v3244
  %v3427 = vpack.c.b16 %v3247, %v3246
  %v3428 = vpack.c.b16 %v3249, %v3248
  %v3429 = vpack.c.b16 %v3251, %v3250
  %v3430 = vpack.c.b16 %v3253, %v3252
  %v3431 = vpack.c.b16 %v3255, %v3254
  %v3432 = vpack.c.b16 %v3257, %v3256
  %v3433 = vpack.c.b16 %v3259, %v3258
  %v3434 = vpack.c.b16 %v3261, %v3260
  %v3435 = vpack.c.b16 %v3263, %v3262
  %v3436 = vpack.c.b16 %v3265, %v3264
  %v3437 = vpack.c.b16 %v3267, %v3266
  %v3438 = vpack.c.b16 %v3269, %v3268
  %v3439 = vpack.c.b16 %v3271, %v3270
  %v3440 = vpack.c.b16 %v3273, %v3272
  %v3441 = vpack.c.b16 %v3275, %v3274
  %v3442 = vpack.c.b16 %v3277, %v3276
  %v3443 = vpack.c.b16 %v3279, %v3278
  %v3444 = vpack.c.b16 %v3281, %v3280
  %v3445 = vpack.c.b16 %v3283, %v3282
  %v3446 = vpack.c.b16 %v3285, %v3284
  %v3447 = vpack.c.b16 %v3287, %v3286
  %v3448 = vpack.c.b16 %v3289, %v3288
  %v3449 = vpack.c.b16 %v3291, %v3290
  %v3450 = vpack.c.b16 %v3293, %v3292
  %v3451 = vpack.c.b16 %v3295, %v3294
  %v3452 = vpack.c.b16 %v3297, %v3296
  %v3453 = vpack.c.b16 %v3299, %v3298
  %v3454 = vpack.c.b16 %v3301, %v3300
  %v3455 = vpack.c.b16 %v3303, %v3302
  %v3456 = vpack.c.b16 %v3305, %v3304
  %v3457 = vpack.c.b16 %v3307, %v3306
  %v3458 = vpack.c.b16 %v3309, %v3308
  %v3459 = vpack.c.b16 %v3311, %v3310
  %v3460 = vpack.c.b16 %v3313, %v3312
  %v3461 = vpack.c.b16 %v3315, %v3314
  %v3462 = vpack.c.b16 %v3317, %v3316
  %v3463 = vpack.c.b16 %v3319, %v3318
  %v3464 = vpack.c.b16 %v3321, %v3320
  %v3465 = vpack.c.b16 %v3323, %v3322
  %v3466 = vpack.c.b16 %v3325, %v3324
  %v3467 = vpack.c.b16 %v3327, %v3326
  %v3468 = vpack.c.b16 %v3329, %v3328
  %v3469 = vpack.c.b16 %v3331, %v3330
  %v3470 = vpack.c.b16 %v3333, %v3332
  %v3471 = vpack.c.b16 %v3335, %v3334
  %v3472 = vpack.c.b16 %v3337, %v3336
  %v3473 = vpack.c.b16 %v3339, %v3338
  %v3474 = vpack.c.b16 %v3341, %v3340
  %v3475 = vpack.c.b16 %v3343, %v3342
  %v3476 = vpack.c.b16 %v3345, %v3344
  %v3477 = vpack.c.b16 %v3347, %v3346
  %v3478 = vpack.c.b16 %v3349, %v3348
  %v3479 = vpack.c.b16 %v3351, %v3350
  %v3480 = vpack.c.b16 %v3353, %v3352
  %v3481 = vpack.c.b16 %v3355, %v3354
  %v3482 = vpack.c.b16 %v3357, %v3356
  %v3483 = vpack.c.b16 %v3359, %v3358
  %v3484 = vpack.c.b16 %v3361, %v3360
  %v3485 = vpack.c.b16 %v3363, %v3362
  %v3486 = vpack.c.b16 %v3365, %v3364
  %v3487 = vpack.c.b16 %v3367, %v3366
  %v3488 = vpack.c.b16 %v3369, %v3368
  %v3489 = vpack.c.b16 %v3371, %v3370
  %v3490 = vpack.c.b16 %v3373, %v3372
  %v3491 = vpack.c.b16 %v3375, %v3374
  %v3492 = vpack.c.b16 %v3377, %v3376
  %v3493 = vpack.c.b16 %v3379, %v3378
  %v3494 = vpack.c.b16 %v3381, %v3380
  %v3495 = vpack.c.b16 %v3383, %v3382
  %v3496 = vpack.c.b16 %v3385, %v3384
  %v3497 = vpack.c.b16 %v3387, %v3386
  %v3498 = vpack.c.b16 %v3389, %v3388
  %v3499 = vpack.c.b16 %v3391, %v3390
  %v3500 = vpack.c.b16 %v3393, %v3392
  %v3501 = vpack.c.b16 %v3395, %v3394
  %v3502 = vpack.c.b16 %v3397, %v3396
  %v3503 = vpack.c.b16 %v3399, %v3398
  %v3504 = vpack.c.b16 %v3401, %v3400
  %v3505 = vpack.c.b16 %v3403, %v3402
  %v3506 = vpack.c.b16 %v3405, %v3404
  %v3507 = vpack.c.b16 %v3407, %v3406
  %v3609 = vsel %vm2333, %v2790, 0
  %v3612 = vsel %vm2333, %v2803, 0
  %3614 = vmatprep.subr.bf16.mxu0 0
  %3615 = vmatpush1.bf16.msra.mxu0 %v3408
  %3616 = vmatprep.subr.bf16.mxu0 0
  %3617 = vmatpush1.bf16.msra.mxu0 %v3409
  %3618 = vmatprep.subr.bf16.mxu0 0
  %3619 = vmatpush1.bf16.msra.mxu0 %v3410
  %3620 = vmatprep.subr.bf16.mxu0 0
  %3621 = vmatpush1.bf16.msra.mxu0 %v3411
  %3622 = vmatprep.subr.bf16.mxu0 0
  %3623 = vmatpush1.bf16.msra.mxu0 %v3412
  %3624 = vmatprep.subr.bf16.mxu0 0
  %3625 = vmatpush1.bf16.msra.mxu0 %v3413
  %3626 = vmatprep.subr.bf16.mxu0 0
  %3627 = vmatpush1.bf16.msra.mxu0 %v3414
  %3628 = vmatprep.subr.bf16.mxu0 0
  %3629 = vmatpush1.bf16.msra.mxu0 %v3415
  %3630 = vmatprep.subr.bf16.mxu0 0
  %3631 = vmatpush1.bf16.msra.mxu0 %v3416
  %3632 = vmatprep.subr.bf16.mxu0 0
  %3633 = vmatpush1.bf16.msra.mxu0 %v3417
  %3634 = vmatprep.subr.bf16.mxu0 0
  %3635 = vmatpush1.bf16.msra.mxu0 %v3418
  %3636 = vmatprep.subr.bf16.mxu0 0
  %3637 = vmatpush1.bf16.msra.mxu0 %v3419
  %3638 = vmatprep.subr.bf16.mxu0 0
  %3639 = vmatpush1.bf16.msra.mxu0 %v3420
  %3640 = vmatprep.subr.bf16.mxu0 0
  %3641 = vmatpush1.bf16.msra.mxu0 %v3421
  %3642 = vmatprep.subr.bf16.mxu0 0
  %3643 = vmatpush1.bf16.msra.mxu0 %v3422
  %3644 = vmatprep.subr.bf16.mxu0 0
  %3645 = vmatpush1.bf16.msra.mxu0 %v3423
  %3646 = vmatprep.mubr.bf16.mxu0 %v2779
  %3647 = vmatmul.mubr.bf16.gmra.mrb[0].mxu0 %v2778
  %v3648 = vpop.f32.mrb[0].mxu0
  %v3649 = vadd.f32 %v3007, %v3648
  %v3650 = vpop.f32.mrb[0].mxu0
  %v3651 = vpop.f32.mrb[0].mxu0
  %v3652 = vadd.f32 %v3007, %v3651
  %v3653 = vpop.f32.mrb[0].mxu0
  %3654 = vmatprep.mubr.bf16.mxu0 %v2792
  %3655 = vmatmul.mubr.bf16.gmra.mrb[0].mxu0 %v2791
  %v3656 = vpop.f32.mrb[0].mxu0
  %v3657 = vadd.f32 %v3007, %v3656
  %v3658 = vpop.f32.mrb[0].mxu0
  %v3659 = vpop.f32.mrb[0].mxu0
  %v3660 = vadd.f32 %v3007, %v3659
  %v3661 = vpop.f32.mrb[0].mxu0
  %3662 = vdwg.mxu0
  %3663 = vmatprep.subr.bf16.mxu0 0
  %3664 = vmatpush1.bf16.msra.mxu0 %v3424
  %3665 = vmatprep.subr.bf16.mxu0 0
  %3666 = vmatpush1.bf16.msra.mxu0 %v3425
  %3667 = vmatprep.subr.bf16.mxu0 0
  %3668 = vmatpush1.bf16.msra.mxu0 %v3426
  %3669 = vmatprep.subr.bf16.mxu0 0
  %3670 = vmatpush1.bf16.msra.mxu0 %v3427
  %3671 = vmatprep.subr.bf16.mxu0 0
  %3672 = vmatpush1.bf16.msra.mxu0 %v3428
  %3673 = vmatprep.subr.bf16.mxu0 0
  %3674 = vmatpush1.bf16.msra.mxu0 %v3429
  %3675 = vmatprep.subr.bf16.mxu0 0
  %3676 = vmatpush1.bf16.msra.mxu0 %v3430
  %3677 = vmatprep.subr.bf16.mxu0 0
  %3678 = vmatpush1.bf16.msra.mxu0 %v3431
  %3679 = vmatprep.subr.bf16.mxu0 0
  %3680 = vmatpush1.bf16.msra.mxu0 %v3432
  %3681 = vmatprep.subr.bf16.mxu0 0
  %3682 = vmatpush1.bf16.msra.mxu0 %v3433
  %3683 = vmatprep.subr.bf16.mxu0 0
  %3684 = vmatpush1.bf16.msra.mxu0 %v3434
  %3685 = vmatprep.subr.bf16.mxu0 0
  %3686 = vmatpush1.bf16.msra.mxu0 %v3435
  %3687 = vmatprep.subr.bf16.mxu0 0
  %3688 = vmatpush1.bf16.msra.mxu0 %v3436
  %3689 = vmatprep.subr.bf16.mxu0 0
  %3690 = vmatpush1.bf16.msra.mxu0 %v3437
  %3691 = vmatprep.subr.bf16.mxu0 0
  %3692 = vmatpush1.bf16.msra.mxu0 %v3438
  %3693 = vmatprep.subr.bf16.mxu0 0
  %3694 = vmatpush1.bf16.msra.mxu0 %v3439
  %3695 = vmatprep.mubr.bf16.mxu0 %v2781
  %3696 = vmatmul.mubr.bf16.gmra.mrb[0].mxu0 %v2780
  %v3697 = vpop.f32.mrb[0].mxu0
  %v3698 = vadd.f32 %v3649, %v3697
  %v3699 = vpop.f32.mrb[0].mxu0
  %v3700 = vpop.f32.mrb[0].mxu0
  %v3701 = vadd.f32 %v3652, %v3700
  %v3702 = vpop.f32.mrb[0].mxu0
  %3703 = vmatprep.mubr.bf16.mxu0 %v2794
  %3704 = vmatmul.mubr.bf16.gmra.mrb[0].mxu0 %v2793
  %v3705 = vpop.f32.mrb[0].mxu0
  %v3706 = vadd.f32 %v3657, %v3705
  %v3707 = vpop.f32.mrb[0].mxu0
  %v3708 = vpop.f32.mrb[0].mxu0
  %v3709 = vadd.f32 %v3660, %v3708
  %v3710 = vpop.f32.mrb[0].mxu0
  %3711 = vdwg.mxu0
  %3712 = vmatprep.subr.bf16.mxu0 0
  %3713 = vmatpush1.bf16.msra.mxu0 %v3440
  %3714 = vmatprep.subr.bf16.mxu0 0
  %3715 = vmatpush1.bf16.msra.mxu0 %v3441
  %3716 = vmatprep.subr.bf16.mxu0 0
  %3717 = vmatpush1.bf16.msra.mxu0 %v3442
  %3718 = vmatprep.subr.bf16.mxu0 0
  %3719 = vmatpush1.bf16.msra.mxu0 %v3443
  %3720 = vmatprep.subr.bf16.mxu0 0
  %3721 = vmatpush1.bf16.msra.mxu0 %v3444
  %3722 = vmatprep.subr.bf16.mxu0 0
  %3723 = vmatpush1.bf16.msra.mxu0 %v3445
  %3724 = vmatprep.subr.bf16.mxu0 0
  %3725 = vmatpush1.bf16.msra.mxu0 %v3446
  %3726 = vmatprep.subr.bf16.mxu0 0
  %3727 = vmatpush1.bf16.msra.mxu0 %v3447
  %3728 = vmatprep.subr.bf16.mxu0 0
  %3729 = vmatpush1.bf16.msra.mxu0 %v3448
  %3730 = vmatprep.subr.bf16.mxu0 0
  %3731 = vmatpush1.bf16.msra.mxu0 %v3449
  %3732 = vmatprep.subr.bf16.mxu0 0
  %3733 = vmatpush1.bf16.msra.mxu0 %v3450
  %3734 = vmatprep.subr.bf16.mxu0 0
  %3735 = vmatpush1.bf16.msra.mxu0 %v3451
  %3736 = vmatprep.subr.bf16.mxu0 0
  %3737 = vmatpush1.bf16.msra.mxu0 %v3452
  %3738 = vmatprep.subr.bf16.mxu0 0
  %3739 = vmatpush1.bf16.msra.mxu0 %v3453
  %3740 = vmatprep.subr.bf16.mxu0 0
  %3741 = vmatpush1.bf16.msra.mxu0 %v3454
  %3742 = vmatprep.subr.bf16.mxu0 0
  %3743 = vmatpush1.bf16.msra.mxu0 %v3455
  %3744 = vmatprep.mubr.bf16.mxu0 %v2783
  %3745 = vmatmul.mubr.bf16.gmra.mrb[0].mxu0 %v2782
  %v3746 = vpop.f32.mrb[0].mxu0
  %v3747 = vadd.f32 %v3698, %v3746
  %v3748 = vpop.f32.mrb[0].mxu0
  %v3749 = vpop.f32.mrb[0].mxu0
  %v3750 = vadd.f32 %v3701, %v3749
  %v3751 = vpop.f32.mrb[0].mxu0
  %3752 = vmatprep.mubr.bf16.mxu0 %v2796
  %3753 = vmatmul.mubr.bf16.gmra.mrb[0].mxu0 %v2795
  %v3754 = vpop.f32.mrb[0].mxu0
  %v3755 = vadd.f32 %v3706, %v3754
  %v3756 = vpop.f32.mrb[0].mxu0
  %v3757 = vpop.f32.mrb[0].mxu0
  %v3758 = vadd.f32 %v3709, %v3757
  %v3759 = vpop.f32.mrb[0].mxu0
  %3760 = vdwg.mxu0
  %3761 = vmatprep.subr.bf16.mxu0 0
  %3762 = vmatpush1.bf16.msra.mxu0 %v3456
  %3763 = vmatprep.subr.bf16.mxu0 0
  %3764 = vmatpush1.bf16.msra.mxu0 %v3457
  %3765 = vmatprep.subr.bf16.mxu0 0
  %3766 = vmatpush1.bf16.msra.mxu0 %v3458
  %3767 = vmatprep.subr.bf16.mxu0 0
  %3768 = vmatpush1.bf16.msra.mxu0 %v3459
  %3769 = vmatprep.subr.bf16.mxu0 0
  %3770 = vmatpush1.bf16.msra.mxu0 %v3460
  %3771 = vmatprep.subr.bf16.mxu0 0
  %3772 = vmatpush1.bf16.msra.mxu0 %v3461
  %3773 = vmatprep.subr.bf16.mxu0 0
  %3774 = vmatpush1.bf16.msra.mxu0 %v3462
  %3775 = vmatprep.subr.bf16.mxu0 0
  %3776 = vmatpush1.bf16.msra.mxu0 %v3463
  %3777 = vmatprep.subr.bf16.mxu0 0
  %3778 = vmatpush1.bf16.msra.mxu0 %v3464
  %3779 = vmatprep.subr.bf16.mxu0 0
  %3780 = vmatpush1.bf16.msra.mxu0 %v3465
  %3781 = vmatprep.subr.bf16.mxu0 0
  %3782 = vmatpush1.bf16.msra.mxu0 %v3466
  %3783 = vmatprep.subr.bf16.mxu0 0
  %3784 = vmatpush1.bf16.msra.mxu0 %v3467
  %3785 = vmatprep.subr.bf16.mxu0 0
  %3786 = vmatpush1.bf16.msra.mxu0 %v3468
  %3787 = vmatprep.subr.bf16.mxu0 0
  %3788 = vmatpush1.bf16.msra.mxu0 %v3469
  %3789 = vmatprep.subr.bf16.mxu0 0
  %3790 = vmatpush1.bf16.msra.mxu0 %v3470
  %3791 = vmatprep.subr.bf16.mxu0 0
  %3792 = vmatpush1.bf16.msra.mxu0 %v3471
  %3793 = vmatprep.mubr.bf16.mxu0 %v2785
  %3794 = vmatmul.mubr.bf16.gmra.mrb[0].mxu0 %v2784
  %v3795 = vpop.f32.mrb[0].mxu0
  %v3796 = vadd.f32 %v3747, %v3795
  %v3797 = vpop.f32.mrb[0].mxu0
  %v3798 = vpop.f32.mrb[0].mxu0
  %v3799 = vadd.f32 %v3750, %v3798
  %v3800 = vpop.f32.mrb[0].mxu0
  %3801 = vmatprep.mubr.bf16.mxu0 %v2798
  %3802 = vmatmul.mubr.bf16.gmra.mrb[0].mxu0 %v2797
  %v3803 = vpop.f32.mrb[0].mxu0
  %v3804 = vadd.f32 %v3755, %v3803
  %v3805 = vpop.f32.mrb[0].mxu0
  %v3806 = vpop.f32.mrb[0].mxu0
  %v3807 = vadd.f32 %v3758, %v3806
  %v3808 = vpop.f32.mrb[0].mxu0
  %3809 = vdwg.mxu0
  %3810 = vmatprep.subr.bf16.mxu0 0
  %3811 = vmatpush1.bf16.msra.mxu0 %v3472
  %3812 = vmatprep.subr.bf16.mxu0 0
  %3813 = vmatpush1.bf16.msra.mxu0 %v3473
  %3814 = vmatprep.subr.bf16.mxu0 0
  %3815 = vmatpush1.bf16.msra.mxu0 %v3474
  %3816 = vmatprep.subr.bf16.mxu0 0
  %3817 = vmatpush1.bf16.msra.mxu0 %v3475
  %3818 = vmatprep.subr.bf16.mxu0 0
  %3819 = vmatpush1.bf16.msra.mxu0 %v3476
  %3820 = vmatprep.subr.bf16.mxu0 0
  %3821 = vmatpush1.bf16.msra.mxu0 %v3477
  %3822 = vmatprep.subr.bf16.mxu0 0
  %3823 = vmatpush1.bf16.msra.mxu0 %v3478
  %3824 = vmatprep.subr.bf16.mxu0 0
  %3825 = vmatpush1.bf16.msra.mxu0 %v3479
  %3826 = vmatprep.subr.bf16.mxu0 0
  %3827 = vmatpush1.bf16.msra.mxu0 %v3480
  %3828 = vmatprep.subr.bf16.mxu0 0
  %3829 = vmatpush1.bf16.msra.mxu0 %v3481
  %3830 = vmatprep.subr.bf16.mxu0 0
  %3831 = vmatpush1.bf16.msra.mxu0 %v3482
  %3832 = vmatprep.subr.bf16.mxu0 0
  %3833 = vmatpush1.bf16.msra.mxu0 %v3483
  %3834 = vmatprep.subr.bf16.mxu0 0
  %3835 = vmatpush1.bf16.msra.mxu0 %v3484
  %3836 = vmatprep.subr.bf16.mxu0 0
  %3837 = vmatpush1.bf16.msra.mxu0 %v3485
  %3838 = vmatprep.subr.bf16.mxu0 0
  %3839 = vmatpush1.bf16.msra.mxu0 %v3486
  %3840 = vmatprep.subr.bf16.mxu0 0
  %3841 = vmatpush1.bf16.msra.mxu0 %v3487
  %3842 = vmatprep.mubr.bf16.mxu0 %v2787
  %3843 = vmatmul.mubr.bf16.gmra.mrb[0].mxu0 %v2786
  %v3844 = vpop.f32.mrb[0].mxu0
  %v3845 = vadd.f32 %v3796, %v3844
  %v3846 = vpop.f32.mrb[0].mxu0
  %v3847 = vpop.f32.mrb[0].mxu0
  %v3848 = vadd.f32 %v3799, %v3847
  %v3849 = vpop.f32.mrb[0].mxu0
  %3850 = vmatprep.mubr.bf16.mxu0 %v2800
  %3851 = vmatmul.mubr.bf16.gmra.mrb[0].mxu0 %v2799
  %v3852 = vpop.f32.mrb[0].mxu0
  %v3853 = vadd.f32 %v3804, %v3852
  %v3854 = vpop.f32.mrb[0].mxu0
  %v3855 = vpop.f32.mrb[0].mxu0
  %v3856 = vadd.f32 %v3807, %v3855
  %v3857 = vpop.f32.mrb[0].mxu0
  %3858 = vdwg.mxu0
  %3859 = vmatprep.subr.bf16.mxu0 0
  %3860 = vmatpush1.bf16.msra.mxu0 %v3488
  %3861 = vmatprep.subr.bf16.mxu0 0
  %3862 = vmatpush1.bf16.msra.mxu0 %v3489
  %3863 = vmatprep.subr.bf16.mxu0 0
  %3864 = vmatpush1.bf16.msra.mxu0 %v3490
  %3865 = vmatprep.subr.bf16.mxu0 0
  %3866 = vmatpush1.bf16.msra.mxu0 %v3491
  %3867 = vmatprep.subr.bf16.mxu0 0
  %3868 = vmatpush1.bf16.msra.mxu0 %v3492
  %3869 = vmatprep.subr.bf16.mxu0 0
  %3870 = vmatpush1.bf16.msra.mxu0 %v3493
  %3871 = vmatprep.subr.bf16.mxu0 0
  %3872 = vmatpush1.bf16.msra.mxu0 %v3494
  %3873 = vmatprep.subr.bf16.mxu0 0
  %3874 = vmatpush1.bf16.msra.mxu0 %v3495
  %3875 = vmatprep.subr.bf16.mxu0 0
  %3876 = vmatpush1.bf16.msra.mxu0 %v3496
  %3877 = vmatprep.subr.bf16.mxu0 0
  %3878 = vmatpush1.bf16.msra.mxu0 %v3497
  %3879 = vmatprep.subr.bf16.mxu0 0
  %3880 = vmatpush1.bf16.msra.mxu0 %v3498
  %3881 = vmatprep.subr.bf16.mxu0 0
  %3882 = vmatpush1.bf16.msra.mxu0 %v3499
  %3883 = vmatprep.subr.bf16.mxu0 0
  %3884 = vmatpush1.bf16.msra.mxu0 %v3500
  %3885 = vmatprep.subr.bf16.mxu0 0
  %3886 = vmatpush1.bf16.msra.mxu0 %v3501
  %3887 = vmatprep.subr.bf16.mxu0 0
  %3888 = vmatpush1.bf16.msra.mxu0 %v3502
  %3889 = vmatprep.subr.bf16.mxu0 0
  %3890 = vmatpush1.bf16.msra.mxu0 %v3503
  %3891 = vmatprep.mubr.bf16.mxu0 %v2789
  %3892 = vmatmul.mubr.bf16.gmra.mrb[0].mxu0 %v2788
  %v3893 = vpop.f32.mrb[0].mxu0
  %v3894 = vadd.f32 %v3845, %v3893
  %v3895 = vpop.f32.mrb[0].mxu0
  %v3896 = vpop.f32.mrb[0].mxu0
  %v3897 = vadd.f32 %v3848, %v3896
  %v3898 = vpop.f32.mrb[0].mxu0
  %3899 = vmatprep.mubr.bf16.mxu0 %v2802
  %3900 = vmatmul.mubr.bf16.gmra.mrb[0].mxu0 %v2801
  %v3901 = vpop.f32.mrb[0].mxu0
  %v3902 = vadd.f32 %v3853, %v3901
  %v3903 = vpop.f32.mrb[0].mxu0
  %v3904 = vpop.f32.mrb[0].mxu0
  %v3905 = vadd.f32 %v3856, %v3904
  %v3906 = vpop.f32.mrb[0].mxu0
  %3907 = vdwg.mxu0
  %3908 = vmatprep.subr.bf16.mxu0 0
  %3909 = vmatpush1.bf16.msra.mxu0 %v3504
  %3910 = vmatprep.subr.bf16.mxu0 0
  %3911 = vmatpush1.bf16.msra.mxu0 %v3505
  %3912 = vmatprep.subr.bf16.mxu0 0
  %3913 = vmatpush1.bf16.msra.mxu0 %v3506
  %3914 = vmatprep.subr.bf16.mxu0 0
  %3915 = vmatpush1.bf16.msra.mxu0 %v3507
  %3916 = vmatprep.subr.bf16.mxu0 0
  %3917 = vmatpush1.bf16.msra.mxu0 0
  %3918 = vmatprep.subr.bf16.mxu0 0
  %3919 = vmatpush1.bf16.msra.mxu0 0
  %3920 = vmatprep.subr.bf16.mxu0 0
  %3921 = vmatpush1.bf16.msra.mxu0 0
  %3922 = vmatprep.subr.bf16.mxu0 0
  %3923 = vmatpush1.bf16.msra.mxu0 0
  %3924 = vmatprep.subr.bf16.mxu0 0
  %3925 = vmatpush1.bf16.msra.mxu0 0
  %3926 = vmatprep.subr.bf16.mxu0 0
  %3927 = vmatpush1.bf16.msra.mxu0 0
  %3928 = vmatprep.subr.bf16.mxu0 0
  %3929 = vmatpush1.bf16.msra.mxu0 0
  %3930 = vmatprep.subr.bf16.mxu0 0
  %3931 = vmatpush1.bf16.msra.mxu0 0
  %3932 = vmatprep.subr.bf16.mxu0 0
  %3933 = vmatpush1.bf16.msra.mxu0 0
  %3934 = vmatprep.subr.bf16.mxu0 0
  %3935 = vmatpush1.bf16.msra.mxu0 0
  %3936 = vmatprep.subr.bf16.mxu0 0
  %3937 = vmatpush1.bf16.msra.mxu0 0
  %3938 = vmatprep.subr.bf16.mxu0 0
  %3939 = vmatpush1.bf16.msra.mxu0 0
  %3940 = vmatprep.mubr.bf16.mxu0 0
  %3941 = vmatmul.mubr.bf16.gmra.mrb[0].mxu0 %v3609
  %v3942 = vpop.f32.mrb[0].mxu0
  %v3943 = vadd.f32 %v3894, %v3942
  %v3944 = vpop.f32.mrb[0].mxu0
  %v3945 = vpop.f32.mrb[0].mxu0
  %v3946 = vadd.f32 %v3897, %v3945
  %v3947 = vpop.f32.mrb[0].mxu0
  %3948 = vmatprep.mubr.bf16.mxu0 0
  %3949 = vmatmul.mubr.bf16.gmra.mrb[0].mxu0 %v3612
  %v3950 = vpop.f32.mrb[0].mxu0
  %v3951 = vadd.f32 %v3902, %v3950
  %v3952 = vpop.f32.mrb[0].mxu0
  %v3953 = vpop.f32.mrb[0].mxu0
  %v3954 = vadd.f32 %v3905, %v3953
  %v3955 = vpop.f32.mrb[0].mxu0
  %3956 = vdwg.mxu0
  %v3957 = vmax.f32 %v3943, 0.0
  %v3958 = vmax.f32 %v3946, 0.0
  %v3959 = vmax.f32 %v3951, 0.0
  %v3960 = vmax.f32 %v3954, 0.0
  %3961 = vst.msk [vmem:[#allocation6] sm:$0xff] %vm2333, %v3957
  %3962 = vst.msk [vmem:[#allocation6 + $0x8] sm:$0xff] %vm2333, %v3958
  %3963 = vst.msk [vmem:[#allocation6 + $0x10] sm:$0xff] %vm2333, %v3959
  %3964 = vst.msk [vmem:[#allocation6 + $0x18] sm:$0xff] %vm2333, %v3960
  %3965 = vst [vmem:[#allocation7] sm:$0xff] 0
  %v3966 = vld [vmem:[#allocation6] sm:$0x1]
  %v3967 = vld [vmem:[#allocation6 + $0x10] sm:$0x1]
  %v3968 = vpack.c.bf16 %v3966, %v3966
  %v3969 = vpack.c.bf16 %v3967, %v3967
  %v3972 = vunpack.c.l.b16 %v3968
  %v3973 = vunpack.c.l.b16 %v3969
  %v3974 = vpack.c.b16 %v3972, %v3972
  %v3975 = vpack.c.b16 %v3973, %v3973
  %v3976 = vunpack.c.l.b16 %v3974
  %v3977 = vunpack.c.l.b16 %v3975
  %v3978 = vrot.slane %v3977, 7
  %vm3979 = vcmask 1041409
  %v3980 = vsel %vm3979, %v3978, %v3976
  %v3981 = vpack.c.b16 %v3980, %v3980
  %vm3983 = vcmask 516096
  %3984 = vst.msk [vmem:[#allocation7] sm:$0x1] %vm3983, %v3981
  %v3985 = vld [vmem:[#allocation6 + $0x1] sm:$0x1]
  %v3986 = vld [vmem:[#allocation6 + $0x11] sm:$0x1]
  %v3987 = vpack.c.bf16 %v3985, %v3985
  %v3988 = vpack.c.bf16 %v3986, %v3986
  %v3991 = vunpack.c.l.b16 %v3987
  %v3992 = vunpack.c.l.b16 %v3988
  %v3993 = vpack.c.b16 %v3991, %v3991
  %v3994 = vpack.c.b16 %v3992, %v3992
  %v3995 = vunpack.c.l.b16 %v3993
  %v3996 = vunpack.c.l.b16 %v3994
  %v3997 = vrot.slane %v3996, 7
  %v3998 = vsel %vm3979, %v3997, %v3995
  %v3999 = vpack.c.b16 %v3998, %v3998
  %4000 = vrot.lane.b32.xlu0 %v3999, 64
  %v4001 = vpop.permute.xlu0 %4000
  %vm4003 = vcmask 1040896
  %4004 = vst.msk [vmem:[#allocation7] sm:$0x1] %vm4003, %v4001
  %v4005 = vld [vmem:[#allocation6 + $0x8] sm:$0x1]
  %v4006 = vld [vmem:[#allocation6 + $0x18] sm:$0x1]
  %v4007 = vpack.c.bf16 %v4005, %v4005
  %v4008 = vpack.c.bf16 %v4006, %v4006
  %v4011 = vunpack.c.l.b16 %v4007
  %v4012 = vunpack.c.l.b16 %v4008
  %v4013 = vpack.c.b16 %v4011, %v4011
  %v4014 = vpack.c.b16 %v4012, %v4012
  %v4015 = vunpack.c.l.b16 %v4013
  %v4016 = vunpack.c.l.b16 %v4014
  %v4017 = vrot.slane %v4016, 7
  %v4018 = vsel %vm3979, %v4017, %v4015
  %v4019 = vpack.c.b16 %v4018, %v4018
  %4021 = vst.msk [vmem:[#allocation7 + $0x4] sm:$0x1] %vm3983, %v4019
  %v4022 = vld [vmem:[#allocation6 + $0x9] sm:$0x1]
  %v4023 = vld [vmem:[#allocation6 + $0x19] sm:$0x1]
  %v4024 = vpack.c.bf16 %v4022, %v4022
  %v4025 = vpack.c.bf16 %v4023, %v4023
  %v4028 = vunpack.c.l.b16 %v4024
  %v4029 = vunpack.c.l.b16 %v4025
  %v4030 = vpack.c.b16 %v4028, %v4028
  %v4031 = vpack.c.b16 %v4029, %v4029
  %v4032 = vunpack.c.l.b16 %v4030
  %v4033 = vunpack.c.l.b16 %v4031
  %v4034 = vrot.slane %v4033, 7
  %v4035 = vsel %vm3979, %v4034, %v4032
  %v4036 = vpack.c.b16 %v4035, %v4035
  %4037 = vrot.lane.b32.xlu0 %v4036, 64
  %v4038 = vpop.permute.xlu0 %4037
  %4040 = vst.msk [vmem:[#allocation7 + $0x4] sm:$0x1] %vm4003, %v4038
  %v4041 = vld [vmem:[#allocation7] sm:$0xff]
  %v4042 = vld [vmem:[%s4] sm:$0xf]
  %v4043 = vld [vmem:[%s4 + $0x4] sm:$0xf]
  %v4044 = vld [vmem:[%s4 + $0x8] sm:$0xf]
  %v4045 = vld [vmem:[%s4 + $0xc] sm:$0xf]
  %v4046 = vld [vmem:[%s4 + $0x10] sm:$0xf]
  %v4047 = vld [vmem:[%s4 + $0x14] sm:$0xf]
  %v4048 = vld [vmem:[%s4 + $0x18] sm:$0xf]
  %v4049 = vld [vmem:[%s4 + $0x1c] sm:$0xf]
  %v4050 = vld [vmem:[%s4 + $0x20] sm:$0xf]
  %v4051 = vld [vmem:[%s4 + $0x24] sm:$0xf]
  %v4052 = vld [vmem:[%s4 + $0x28] sm:$0xf]
  %v4053 = vld [vmem:[%s4 + $0x2c] sm:$0xf]
  %v4054 = vld [vmem:[%s4 + $0x30] sm:$0xf]
  %v4055 = vld [vmem:[%s4 + $0x34] sm:$0xf]
  %v4056 = vld [vmem:[%s4 + $0x38] sm:$0xf]
  %v4057 = vld [vmem:[%s4 + $0x3c] sm:$0xf]
  %v4058 = vld [vmem:[%s4 + $0x40] sm:$0xf]
  %v4059 = vld [vmem:[%s4 + $0x44] sm:$0xf]
  %v4060 = vld [vmem:[%s4 + $0x48] sm:$0xf]
  %v4061 = vld [vmem:[%s4 + $0x4c] sm:$0xf]
  %v4062 = vld [vmem:[%s4 + $0x50] sm:$0xf]
  %v4063 = vld [vmem:[%s4 + $0x54] sm:$0xf]
  %v4064 = vld [vmem:[%s4 + $0x58] sm:$0xf]
  %v4065 = vld [vmem:[%s4 + $0x5c] sm:$0xf]
  %v4066 = vld [vmem:[%s4 + $0x60] sm:$0xf]
  %v4067 = vld [vmem:[%s4 + $0x64] sm:$0xf]
  %v4068 = vld [vmem:[%s4 + $0x68] sm:$0xf]
  %v4069 = vld [vmem:[%s4 + $0x6c] sm:$0xf]
  %v4070 = vld [vmem:[%s4 + $0x70] sm:$0xf]
  %v4071 = vld [vmem:[%s4 + $0x74] sm:$0xf]
  %v4072 = vld [vmem:[%s4 + $0x78] sm:$0xf]
  %v4073 = vld [vmem:[%s4 + $0x7c] sm:$0xf]
  %v4074 = vlaneseq
  %v4075 = vshrl.u32 %v4074, 7
  %v4076 = vsub.s32 0, %v4075
  %v4077 = vrot.slane %v34, %v4076
  %v4079 = vunpack.c.l.b16 %v4041
  %v4080 = vunpack.c.h.b16 %v4041
  %v4081 = vpack.c.b16 %v4079, %v4079
  %v4082 = vpack.c.b16 %v4080, %v4080
  %v4117 = vunpack.c.l.b16 %v4042
  %v4118 = vunpack.c.l.b16 %v4043
  %v4119 = vunpack.c.l.b16 %v4044
  %v4120 = vunpack.c.l.b16 %v4045
  %v4121 = vunpack.c.l.b16 %v4046
  %v4122 = vunpack.c.l.b16 %v4047
  %v4123 = vunpack.c.l.b16 %v4048
  %v4124 = vunpack.c.l.b16 %v4049
  %v4125 = vunpack.c.l.b16 %v4050
  %v4126 = vunpack.c.l.b16 %v4051
  %v4127 = vunpack.c.l.b16 %v4052
  %v4128 = vunpack.c.l.b16 %v4053
  %v4129 = vunpack.c.l.b16 %v4054
  %v4130 = vunpack.c.l.b16 %v4055
  %v4131 = vunpack.c.l.b16 %v4056
  %v4132 = vunpack.c.l.b16 %v4057
  %v4133 = vunpack.c.l.b16 %v4058
  %v4134 = vunpack.c.l.b16 %v4059
  %v4135 = vunpack.c.l.b16 %v4060
  %v4136 = vunpack.c.l.b16 %v4061
  %v4137 = vunpack.c.l.b16 %v4062
  %v4138 = vunpack.c.l.b16 %v4063
  %v4139 = vunpack.c.l.b16 %v4064
  %v4140 = vunpack.c.l.b16 %v4065
  %v4141 = vunpack.c.l.b16 %v4066
  %v4142 = vunpack.c.l.b16 %v4067
  %v4143 = vunpack.c.l.b16 %v4068
  %v4144 = vunpack.c.l.b16 %v4069
  %v4145 = vunpack.c.l.b16 %v4070
  %v4146 = vunpack.c.l.b16 %v4071
  %v4147 = vunpack.c.l.b16 %v4072
  %v4148 = vunpack.c.l.b16 %v4073
  %v4149 = vpack.c.b16 %v4118, %v4117
  %v4150 = vpack.c.b16 %v4120, %v4119
  %v4151 = vpack.c.b16 %v4122, %v4121
  %v4152 = vpack.c.b16 %v4124, %v4123
  %v4153 = vpack.c.b16 %v4126, %v4125
  %v4154 = vpack.c.b16 %v4128, %v4127
  %v4155 = vpack.c.b16 %v4130, %v4129
  %v4156 = vpack.c.b16 %v4132, %v4131
  %v4157 = vpack.c.b16 %v4134, %v4133
  %v4158 = vpack.c.b16 %v4136, %v4135
  %v4159 = vpack.c.b16 %v4138, %v4137
  %v4160 = vpack.c.b16 %v4140, %v4139
  %v4161 = vpack.c.b16 %v4142, %v4141
  %v4162 = vpack.c.b16 %v4144, %v4143
  %v4163 = vpack.c.b16 %v4146, %v4145
  %v4164 = vpack.c.b16 %v4148, %v4147
  %4181 = vmatprep.subr.bf16.mxu0 0
  %4182 = vmatpush1.bf16.msra.mxu0 %v4149
  %4183 = vmatprep.subr.bf16.mxu0 0
  %4184 = vmatpush1.bf16.msra.mxu0 %v4150
  %4185 = vmatprep.subr.bf16.mxu0 0
  %4186 = vmatpush1.bf16.msra.mxu0 %v4151
  %4187 = vmatprep.subr.bf16.mxu0 0
  %4188 = vmatpush1.bf16.msra.mxu0 %v4152
  %4189 = vmatprep.subr.bf16.mxu0 0
  %4190 = vmatpush1.bf16.msra.mxu0 %v4153
  %4191 = vmatprep.subr.bf16.mxu0 0
  %4192 = vmatpush1.bf16.msra.mxu0 %v4154
  %4193 = vmatprep.subr.bf16.mxu0 0
  %4194 = vmatpush1.bf16.msra.mxu0 %v4155
  %4195 = vmatprep.subr.bf16.mxu0 0
  %4196 = vmatpush1.bf16.msra.mxu0 %v4156
  %4197 = vmatprep.subr.bf16.mxu0 0
  %4198 = vmatpush1.bf16.msra.mxu0 %v4157
  %4199 = vmatprep.subr.bf16.mxu0 0
  %4200 = vmatpush1.bf16.msra.mxu0 %v4158
  %4201 = vmatprep.subr.bf16.mxu0 0
  %4202 = vmatpush1.bf16.msra.mxu0 %v4159
  %4203 = vmatprep.subr.bf16.mxu0 0
  %4204 = vmatpush1.bf16.msra.mxu0 %v4160
  %4205 = vmatprep.subr.bf16.mxu0 0
  %4206 = vmatpush1.bf16.msra.mxu0 %v4161
  %4207 = vmatprep.subr.bf16.mxu0 0
  %4208 = vmatpush1.bf16.msra.mxu0 %v4162
  %4209 = vmatprep.subr.bf16.mxu0 0
  %4210 = vmatpush1.bf16.msra.mxu0 %v4163
  %4211 = vmatprep.subr.bf16.mxu0 0
  %4212 = vmatpush1.bf16.msra.mxu0 %v4164
  %4213 = vmatprep.mubr.bf16.mxu0 %v4082
  %4214 = vmatmul.mubr.bf16.gmra.mrb[0].mxu0 %v4081
  %v4215 = vpop.f32.mrb[0].mxu0
  %v4216 = vadd.f32 %v4077, %v4215
  %v4217 = vpop.f32.mrb[0].mxu0
  %v4218 = vpop.f32.mrb[0].mxu0
  %v4219 = vpop.f32.mrb[0].mxu0
  %4220 = vdwg.mxu0
  %4221 = vst [vmem:[%s7] sm:$0xff] %v4216
  // Predicated region
  $region30: #{cnn_forward.1} parent=0 // pred_check
    _
  $region31: #{cnn_forward.1} parent=0 // pred_check_branch
    %4223 = sbr.rel (0) target = $region33
  $region32: #{cnn_forward.1} parent=0 // pred_region
    _
  $region33: #{cnn_forward.1} parent=0 // pred_fallthru
    _
  // Predicated region
  $region34: #{cnn_forward.1} parent=0 // pred_check
    _
  $region35: #{cnn_forward.1} parent=0 // pred_check_branch
    %4225 = sbr.rel (0) target = $region37
  $region36: #{cnn_forward.1} parent=0 // pred_region
    _
  $region37: #{cnn_forward.1} parent=0 // pred_fallthru
    _

</llo_original>
